<compile_context>
chip_gen: v5e
topology: v5e:2x2
jax: 0.10.0
libtpu: 0.0.40
codegen_flags: <defaults>
</compile_context>

<pallas_src>
import functools

import jax
import jax.numpy as jnp
import numpy as np
from jax.experimental import pallas as pl
from jax.experimental.pallas import tpu as pltpu

# ---------------- model dims (small, consistent with the module) ----------------
D_MODEL = 32
N_HEADS = 4
D_K = D_MODEL // N_HEADS
D_FF = 64
LN_EPS = 1e-5
NEG_BIAS = -1e30  # large finite "masked" bias (avoids -inf -> NaN on fully-masked rows)

# Matmul-operand dtype (review: bf16 inputs + f32 accumulate on v6e/v7x).
# Set to jnp.float32 to compare bit-tightly (2e-4) against the pure-f32 reference.
DOT_DTYPE = jnp.bfloat16

# ---------------- packed weight-slab layout (single VMEM operand) ----------------
SLAB_W = max(2 * D_MODEL, D_FF)          # 64 lanes
STG_ROWS = 2 * D_MODEL + 16              # per-MHA-stage block; 16-row aligned (bf16 tile)
FFN_R0 = 3 * STG_ROWS                    # FFN block start (240)
FFN_VEC_R0 = FFN_R0 + D_MODEL + D_FF     # FFN bias / LN rows (336)
SLAB_ROWS = FFN_VEC_R0 + 16              # 352


def _layernorm(x, gamma, beta):
    mean = jnp.mean(x, axis=-1, keepdims=True)
    var = jnp.mean(jnp.square(x - mean), axis=-1, keepdims=True)
    return (x - mean) * jax.lax.rsqrt(var + LN_EPS) * gamma + beta


# ================================ fused Pallas kernel ================================

def fused_layer_kernel(x_ref, y1_ref, y2_ref, pmask_ref, mask_ref, w_ref, o_ref,
                       *, bb, nq, nk):
    """Whole SequentialAttentionLayer forward for `bb` batch items, resident in VMEM.

    x_ref:     (bb*nq, D)        residual stream / queries (batch folded into rows)
    y1/y2_ref: (bb*nk, D)        visual keys/values (keys padded to nk, padded keys masked)
    pmask_ref: (bb*nq, 1)        multiplicative query keep-mask
    mask_ref:  (bb, nq+2, nkmax) {0,1} mask pack (rows 0..nq-1 self mask, row nq y1, nq+1 y2)
    w_ref:     (SLAB_ROWS, SLAB_W) packed weights (DOT_DTYPE)
    """
    f32 = jnp.float32
    x = x_ref[...]
    y1 = y1_ref[...]
    y2 = y2_ref[...]
    pmask = pmask_ref[...]
    nbias = mask_ref[...] * NEG_BIAS            # additive bias, built in-kernel (f32)
    scale = jnp.float32(1.0 / np.sqrt(D_K))

    def cast(a):                                # matmul-operand cast only
        return a.astype(DOT_DTYPE)

    def stage_params(stage):
        r = stage * STG_ROWS
        wq = w_ref[r:r + D_MODEL, 0:D_MODEL]
        wo = w_ref[r:r + D_MODEL, D_MODEL:2 * D_MODEL]
        wkv = w_ref[r + D_MODEL:r + 2 * D_MODEL, 0:2 * D_MODEL]
        vec = w_ref[r + 2 * D_MODEL:r + 2 * D_MODEL + 3, :].astype(f32)
        bq = vec[0:1, 0:D_MODEL]
        bo = vec[0:1, D_MODEL:2 * D_MODEL]
        bkv = vec[1:2, 0:2 * D_MODEL]
        ln_g = vec[2:3, 0:D_MODEL]
        ln_b = vec[2:3, D_MODEL:2 * D_MODEL]
        return wq, wkv, wo, bq, bkv, bo, ln_g, ln_b

    def mha(q_in, kv_in, rows_k, bias_of_batch, stage):
        wq, wkv, wo, bq, bkv, bo, ln_g, ln_b = stage_params(stage)
        # Full-width projections: one matmul for Q, one fused matmul for K|V.
        q = jnp.dot(cast(q_in), wq, preferred_element_type=f32) + bq       # (bb*nq, D)
        kv = jnp.dot(cast(kv_in), wkv, preferred_element_type=f32) + bkv   # (bb*rows_k, 2D)

        # Attention: per-(batch, head) blocks are intrinsically tiny; use static slices
        # and fully unrolled Python loops (bb and N_HEADS are small compile-time ints).
        ctx_rows = []
        for b_i in range(bb):
            qb = q[b_i * nq:(b_i + 1) * nq, :]
            kb = kv[b_i * rows_k:(b_i + 1) * rows_k, 0:D_MODEL]
            vb = kv[b_i * rows_k:(b_i + 1) * rows_k, D_MODEL:2 * D_MODEL]
            bias_b = bias_of_batch(b_i)                     # (nq|1, rows_k) additive bias
            heads = []
            for h in range(N_HEADS):
                lo, hi = h * D_K, (h + 1) * D_K
                s = jnp.einsum("qd,kd->qk", cast(qb[:, lo:hi]), cast(kb[:, lo:hi]),
                               preferred_element_type=f32)
                s = s * scale + bias_b
                s = s - jnp.max(s, axis=-1, keepdims=True)
                p = jnp.exp(s)
                p = p / jnp.sum(p, axis=-1, keepdims=True)  # exact divide (review concern)
                heads.append(jnp.dot(cast(p), cast(vb[:, lo:hi]),
                                     preferred_element_type=f32))
            ctx_rows.append(jnp.concatenate(heads, axis=-1))               # (nq, D)
        ctx = ctx_rows[0] if bb == 1 else jnp.concatenate(ctx_rows, axis=0)

        # Single full-width output projection over all rows.
        o = jnp.dot(cast(ctx), wo, preferred_element_type=f32) + bo
        # TODO(synk): dropout omitted (eval mode / identity).
        return _layernorm(q_in + o, ln_g, ln_b) * pmask

    out = mha(x, x, nq, lambda b_i: nbias[b_i, 0:nq, 0:nq], 0)              # self attention
    out = mha(out, y1, nk, lambda b_i: nbias[b_i, nq:nq + 1, 0:nk], 1)      # visual attn 1
    out = mha(out, y2, nk, lambda b_i: nbias[b_i, nq + 1:nq + 2, 0:nk], 2)  # visual attn 2

    # Position-wise FFN + residual LayerNorm + pad mask.
    w1 = w_ref[FFN_R0:FFN_R0 + D_MODEL, 0:D_FF]
    w2 = w_ref[FFN_R0 + D_MODEL:FFN_R0 + D_MODEL + D_FF, 0:D_MODEL]
    fvec = w_ref[FFN_VEC_R0:FFN_VEC_R0 + 3, :].astype(f32)
    b1 = fvec[0:1, 0:D_FF]
    b2 = fvec[1:2, 0:D_MODEL]
    fg = fvec[1:2, D_MODEL:2 * D_MODEL]
    fb = fvec[2:3, 0:D_MODEL]
    h = jnp.maximum(jnp.dot(cast(out), w1, preferred_element_type=f32) + b1, 0.0)
    f = jnp.dot(cast(h), w2, preferred_element_type=f32) + b2
    o_ref[...] = (_layernorm(out + f, fg, fb) * pmask).astype(o_ref.dtype)


# ================================ wrappers ================================

def prepare_params(params, dot_dtype=DOT_DTYPE):
    """One-time repack of all weights into a single (SLAB_ROWS, SLAB_W) VMEM operand."""
    D, DFF = D_MODEL, D_FF
    slab = jnp.zeros((SLAB_ROWS, SLAB_W), jnp.float32)
    for s, name in enumerate(("self_att", "vis_att1", "vis_att2")):
        p = params[name]
        r = s * STG_ROWS
        slab = slab.at[r:r + D, 0:D].set(p["wq"])
        slab = slab.at[r:r + D, D:2 * D].set(p["wo"])
        slab = slab.at[r + D:r + 2 * D, 0:D].set(p["wk"])
        slab = slab.at[r + D:r + 2 * D, D:2 * D].set(p["wv"])
        slab = slab.at[r + 2 * D, 0:D].set(p["bq"])
        slab = slab.at[r + 2 * D, D:2 * D].set(p["bo"])
        slab = slab.at[r + 2 * D + 1, 0:D].set(p["bk"])
        slab = slab.at[r + 2 * D + 1, D:2 * D].set(p["bv"])
        slab = slab.at[r + 2 * D + 2, 0:D].set(p["ln_g"])
        slab = slab.at[r + 2 * D + 2, D:2 * D].set(p["ln_b"])
    pf = params["pwff"]
    slab = slab.at[FFN_R0:FFN_R0 + D, 0:DFF].set(pf["w1"])
    slab = slab.at[FFN_R0 + D:FFN_R0 + D + DFF, 0:D].set(pf["w2"])
    slab = slab.at[FFN_VEC_R0, 0:DFF].set(pf["b1"])
    slab = slab.at[FFN_VEC_R0 + 1, 0:D].set(pf["b2"])
    slab = slab.at[FFN_VEC_R0 + 1, D:2 * D].set(pf["ln_g"])
    slab = slab.at[FFN_VEC_R0 + 2, 0:D].set(pf["ln_b"])
    return slab.astype(dot_dtype)


def sequential_attention_layer(x, y1, y2, mask_pad, mask_x, mask_y1, mask_y2, wslab,
                               *, batch_blocks=1):
    """Pallas-backed forward of SequentialAttentionLayer (single fused kernel).

    x: (B, nq, D); y1/y2: (B, nk, D); mask_pad: (B, nq, 1) float keep-mask;
    mask_x: (B, 1, nq, nq) bool; mask_y1/mask_y2: (B, 1, 1, nk) bool (True == masked).
    batch_blocks: 1 folds the whole batch into one step (best on single-TC v5e/v6e);
                  use 2 on dual-TC v7x once B is large enough for chunky per-core blocks.
    """
    B, NQ, D = x.shape
    NK = y1.shape[1]
    assert D == D_MODEL
    assert NQ % 8 == 0  # TODO(synk): pad query rows for NQ not a multiple of 8.
    assert B % batch_blocks == 0
    bb = B // batch_blocks
    NK_PAD = ((NK + 7) // 8) * 8
    NKMAX = max(NQ, NK_PAD)

    def pad_keys(y):
        return jnp.pad(y, ((0, 0), (0, NK_PAD - NK), (0, 0)))

    x_flat = x.reshape(B * NQ, D).astype(jnp.float32)
    y1_flat = pad_keys(y1).reshape(B * NK_PAD, D).astype(jnp.float32)
    y2_flat = pad_keys(y2).reshape(B * NK_PAD, D).astype(jnp.float32)
    pmask = mask_pad.reshape(B * NQ, 1).astype(jnp.float32)

    # Compact mask pack (1.0 == masked); the -1e30 additive bias is built in-kernel.
    maskpack = jnp.zeros((B, NQ + 2, NKMAX), jnp.float32)
    maskpack = maskpack.at[:, :NQ, :NQ].set(mask_x[:, 0].astype(jnp.float32))
    maskpack = maskpack.at[:, NQ, :].set(1.0)        # padded key columns stay masked
    maskpack = maskpack.at[:, NQ + 1, :].set(1.0)
    maskpack = maskpack.at[:, NQ, :NK].set(mask_y1[:, 0, 0].astype(jnp.float32))
    maskpack = maskpack.at[:, NQ + 1, :NK].set(mask_y2[:, 0, 0].astype(jnp.float32))

    in_specs = [
        pl.BlockSpec((bb * NQ, D), lambda i: (i, 0)),          # x (rows folded)
        pl.BlockSpec((bb * NK_PAD, D), lambda i: (i, 0)),      # y1
        pl.BlockSpec((bb * NK_PAD, D), lambda i: (i, 0)),      # y2
        pl.BlockSpec((bb * NQ, 1), lambda i: (i, 0)),          # pad mask
        pl.BlockSpec((bb, NQ + 2, NKMAX), lambda i: (i, 0, 0)),  # mask pack
        pl.BlockSpec(wslab.shape, lambda i: (0, 0)),           # weight slab (not re-fetched)
    ]
    out_specs = pl.BlockSpec((bb * NQ, D), lambda i: (i, 0))

    flops = 2 * B * (
        3 * (NQ * D * D                       # Q projection
             + NK_PAD * D * 2 * D             # fused K|V projection
             + 2 * N_HEADS * NQ * NK_PAD * D_K  # scores + PV
             + NQ * D * D)                    # output projection
        + 2 * NQ * D * D_FF)                  # FFN
    transcendentals = 3 * B * N_HEADS * NQ * NK_PAD
    bytes_accessed = int(sum(int(np.prod(a.shape)) * a.dtype.itemsize
                             for a in (x_flat, y1_flat, y2_flat, pmask, maskpack, wslab))
                         + B * NQ * D * 4)

    kernel = functools.partial(fused_layer_kernel, bb=bb, nq=NQ, nk=NK_PAD)
    out_flat = pl.pallas_call(
        kernel,
        out_shape=jax.ShapeDtypeStruct((B * NQ, D), jnp.float32),
        grid=(batch_blocks,),
        in_specs=in_specs,
        out_specs=out_specs,
        compiler_params=pltpu.CompilerParams(dimension_semantics=("parallel",)),
        cost_estimate=pl.CostEstimate(flops=flops, transcendentals=transcendentals,
                                      bytes_accessed=bytes_accessed),
    )(x_flat, y1_flat, y2_flat, pmask, maskpack, wslab)
    return out_flat.reshape(B, NQ, D)


# ================================ reference (pure JAX) ================================
# dot_dtype controls the matmul-operand precision so the check can mirror the kernel's
# bf16-at-the-dot / f32-accumulate behavior; dot_dtype=float32 == the exact f32 module.

def _mha_ref(q_in, y, bool_mask, pmask, p, dd):
    f32 = jnp.float32
    B, NQ, D = q_in.shape
    NK = y.shape[1]
    q = jnp.einsum("bnd,de->bne", q_in.astype(dd), p["wq"].astype(dd),
                   preferred_element_type=f32) + p["bq"]
    k = jnp.einsum("bnd,de->bne", y.astype(dd), p["wk"].astype(dd),
                   preferred_element_type=f32) + p["bk"]
    v = jnp.einsum("bnd,de->bne", y.astype(dd), p["wv"].astype(dd),
                   preferred_element_type=f32) + p["bv"]
    qh = q.reshape(B, NQ, N_HEADS, D_K).transpose(0, 2, 1, 3)
    kh = k.reshape(B, NK, N_HEADS, D_K).transpose(0, 2, 1, 3)
    vh = v.reshape(B, NK, N_HEADS, D_K).transpose(0, 2, 1, 3)
    att = jnp.einsum("bhqd,bhkd->bhqk", qh.astype(dd), kh.astype(dd),
                     preferred_element_type=f32) * jnp.float32(1.0 / np.sqrt(D_K))
    att = jnp.where(bool_mask, -jnp.inf, att)
    att = jax.nn.softmax(att, axis=-1)
    ctx = jnp.einsum("bhqk,bhkd->bhqd", att.astype(dd), vh.astype(dd),
                     preferred_element_type=f32)
    ctx = ctx.transpose(0, 2, 1, 3).reshape(B, NQ, D)
    o = jnp.einsum("bnd,de->bne", ctx.astype(dd), p["wo"].astype(dd),
                   preferred_element_type=f32) + p["bo"]
    return _layernorm(q_in + o, p["ln_g"], p["ln_b"]) * pmask


def _ffn_ref(x, pmask, p, dd):
    f32 = jnp.float32
    h = jnp.maximum(jnp.einsum("bnd,df->bnf", x.astype(dd), p["w1"].astype(dd),
                               preferred_element_type=f32) + p["b1"], 0.0)
    o = jnp.einsum("bnf,fd->bnd", h.astype(dd), p["w2"].astype(dd),
                   preferred_element_type=f32) + p["b2"]
    return _layernorm(x + o, p["ln_g"], p["ln_b"]) * pmask


def reference_forward(x, y1, y2, mask_pad, mask_x, mask_y1, mask_y2, params,
                      dot_dtype=jnp.float32):
    pmask = mask_pad.astype(jnp.float32)
    out = _mha_ref(x, x, mask_x, pmask, params["self_att"], dot_dtype)
    out = _mha_ref(out, y1, mask_y1, pmask, params["vis_att1"], dot_dtype)
    out = _mha_ref(out, y2, mask_y2, pmask, params["vis_att2"], dot_dtype)
    return _ffn_ref(out, pmask, params["pwff"], dot_dtype)


# ================================ params & main ================================

def _init_mha_params(key):
    ks = jax.random.split(key, 8)
    s = 1.0 / np.sqrt(D_MODEL)
    # Linear weights stored as (in, out); equivalent to PyTorch nn.Linear W.T.
    return {
        "wq": jax.random.normal(ks[0], (D_MODEL, D_MODEL), jnp.float32) * s,
        "bq": jax.random.normal(ks[1], (D_MODEL,), jnp.float32) * 0.01,
        "wk": jax.random.normal(ks[2], (D_MODEL, D_MODEL), jnp.float32) * s,
        "bk": jax.random.normal(ks[3], (D_MODEL,), jnp.float32) * 0.01,
        "wv": jax.random.normal(ks[4], (D_MODEL, D_MODEL), jnp.float32) * s,
        "bv": jax.random.normal(ks[5], (D_MODEL,), jnp.float32) * 0.01,
        "wo": jax.random.normal(ks[6], (D_MODEL, D_MODEL), jnp.float32) * s,
        "bo": jax.random.normal(ks[7], (D_MODEL,), jnp.float32) * 0.01,
        "ln_g": jnp.ones((D_MODEL,), jnp.float32),
        "ln_b": jnp.zeros((D_MODEL,), jnp.float32),
    }


def _init_ffn_params(key):
    k1, k2, k3, k4 = jax.random.split(key, 4)
    return {
        "w1": jax.random.normal(k1, (D_MODEL, D_FF), jnp.float32) / np.sqrt(D_MODEL),
        "b1": jax.random.normal(k2, (D_FF,), jnp.float32) * 0.01,
        "w2": jax.random.normal(k3, (D_FF, D_MODEL), jnp.float32) / np.sqrt(D_FF),
        "b2": jax.random.normal(k4, (D_MODEL,), jnp.float32) * 0.01,
        "ln_g": jnp.ones((D_MODEL,), jnp.float32),
        "ln_b": jnp.zeros((D_MODEL,), jnp.float32),
    }


if __name__ == "__main__":
    B, NQ, NK = 2, 8, 10

    root = jax.random.PRNGKey(0)
    kx, ky1, ky2, kp0, kp1, kp2, kp3 = jax.random.split(root, 7)

    params = {
        "self_att": _init_mha_params(kp0),
        "vis_att1": _init_mha_params(kp1),
        "vis_att2": _init_mha_params(kp2),
        "pwff": _init_ffn_params(kp3),
    }
    wslab = prepare_params(params)   # one-time repack into the single weight slab

    x = jax.random.normal(kx, (B, NQ, D_MODEL), jnp.float32)
    y1 = jax.random.normal(ky1, (B, NK, D_MODEL), jnp.float32)
    y2 = jax.random.normal(ky2, (B, NK, D_MODEL), jnp.float32)

    # mask_pad: (B, nq, 1) -- last two query positions of batch 1 are padding.
    mask_pad = jnp.ones((B, NQ, 1), jnp.float32).at[1, NQ - 2:, :].set(0.0)
    # mask_x: causal self-attention mask (B, 1, nq, nq), True == masked.
    causal = jnp.triu(jnp.ones((NQ, NQ), bool), k=1)
    mask_x = jnp.broadcast_to(causal, (B, 1, NQ, NQ))
    # mask_y1 / mask_y2: key padding masks (B, 1, 1, nk), True == masked.
    mask_y1 = jnp.zeros((B, 1, 1, NK), bool).at[1, :, :, NK - 2:].set(True)
    mask_y2 = jnp.zeros((B, 1, 1, NK), bool).at[1, :, :, NK - 3:].set(True)

    out = sequential_attention_layer(x, y1, y2, mask_pad, mask_x, mask_y1, mask_y2, wslab)
    out = jax.block_until_ready(out)

    # Reference with the same dot-operand dtype as the kernel (f32 elementwise, f32 acc).
    ref = reference_forward(x, y1, y2, mask_pad, mask_x, mask_y1, mask_y2, params,
                            dot_dtype=DOT_DTYPE)
    tol = 2e-4 if DOT_DTYPE == jnp.float32 else 2e-2
    np.testing.assert_allclose(np.asarray(out), np.asarray(ref), rtol=tol, atol=tol)

    print("KERNEL_OK")
</pallas_src>

<mosaic_0001>
module attributes {stable_mosaic.version = 11 : i64} {
  func.func @fused_layer_kernel(%arg0: i32, %arg1: memref<16x32xf32, #tpu.memory_space<vmem>>, %arg2: memref<32x32xf32, #tpu.memory_space<vmem>>, %arg3: memref<32x32xf32, #tpu.memory_space<vmem>>, %arg4: memref<16x1xf32, #tpu.memory_space<vmem>>, %arg5: memref<2x10x16xf32, #tpu.memory_space<vmem>>, %arg6: memref<352x64xbf16, #tpu.memory_space<vmem>>, %arg7: memref<16x32xf32, #tpu.memory_space<vmem>>) attributes {dimension_semantics = [#tpu.dimension_semantics<parallel>], iteration_bounds = array<i64: 1>, scalar_prefetch = 0 : i64, scratch_operands = 0 : i64, tpu.core_type = #tpu.core_type<tc>, window_params = [{transform_indices = @transform_0, window_bounds = array<i64: 16, 32>}, {transform_indices = @transform_1, window_bounds = array<i64: 32, 32>}, {transform_indices = @transform_2, window_bounds = array<i64: 32, 32>}, {transform_indices = @transform_3, window_bounds = array<i64: 16, 1>}, {transform_indices = @transform_4, window_bounds = array<i64: 2, 10, 16>}, {pipeline_mode = #tpu.pipeline_mode<synchronous>, transform_indices = @transform_5, window_bounds = array<i64: 352, 64>}, {transform_indices = @transform_6, window_bounds = array<i64: 16, 32>}]} {
    %c0 = arith.constant 0 : index
    %c0_0 = arith.constant 0 : index
    %0 = vector.load %arg1[%c0, %c0_0] : memref<16x32xf32, #tpu.memory_space<vmem>>, vector<16x32xf32>
    %c0_1 = arith.constant 0 : index
    %c0_2 = arith.constant 0 : index
    %1 = vector.load %arg2[%c0_1, %c0_2] : memref<32x32xf32, #tpu.memory_space<vmem>>, vector<32x32xf32>
    %c0_3 = arith.constant 0 : index
    %c0_4 = arith.constant 0 : index
    %2 = vector.load %arg3[%c0_3, %c0_4] : memref<32x32xf32, #tpu.memory_space<vmem>>, vector<32x32xf32>
    %c0_5 = arith.constant 0 : index
    %c0_6 = arith.constant 0 : index
    %3 = vector.load %arg4[%c0_5, %c0_6] : memref<16x1xf32, #tpu.memory_space<vmem>>, vector<16x1xf32>
    %c0_7 = arith.constant 0 : index
    %c0_8 = arith.constant 0 : index
    %c0_9 = arith.constant 0 : index
    %4 = vector.load %arg5[%c0_7, %c0_8, %c0_9] : memref<2x10x16xf32, #tpu.memory_space<vmem>>, vector<2x10x16xf32>
    %cst = arith.constant -1.000000e+30 : f32
    %5 = vector.broadcast %cst : f32 to vector<2x10x16xf32>
    %6 = arith.mulf %4, %5 : vector<2x10x16xf32>
    %c0_10 = arith.constant 0 : index
    %c0_11 = arith.constant 0 : index
    %7 = vector.load %arg6[%c0_10, %c0_11] : memref<352x64xbf16, #tpu.memory_space<vmem>>, vector<32x32xbf16>
    %c0_12 = arith.constant 0 : index
    %c32 = arith.constant 32 : index
    %8 = vector.load %arg6[%c0_12, %c32] : memref<352x64xbf16, #tpu.memory_space<vmem>>, vector<32x32xbf16>
    %c32_13 = arith.constant 32 : index
    %c0_14 = arith.constant 0 : index
    %9 = vector.load %arg6[%c32_13, %c0_14] : memref<352x64xbf16, #tpu.memory_space<vmem>>, vector<32x64xbf16>
    %c64 = arith.constant 64 : index
    %c0_15 = arith.constant 0 : index
    %10 = vector.load %arg6[%c64, %c0_15] : memref<352x64xbf16, #tpu.memory_space<vmem>>, vector<3x64xbf16>
    %11 = arith.extf %10 : vector<3x64xbf16> to vector<3x64xf32>
    %12 = vector.extract_strided_slice %11 {offsets = [0, 0], sizes = [1, 32], strides = [1, 1]} : vector<3x64xf32> to vector<1x32xf32>
    %13 = vector.extract_strided_slice %11 {offsets = [0, 32], sizes = [1, 32], strides = [1, 1]} : vector<3x64xf32> to vector<1x32xf32>
    %14 = vector.extract_strided_slice %11 {offsets = [1, 0], sizes = [1, 64], strides = [1, 1]} : vector<3x64xf32> to vector<1x64xf32>
    %15 = vector.extract_strided_slice %11 {offsets = [2, 0], sizes = [1, 32], strides = [1, 1]} : vector<3x64xf32> to vector<1x32xf32>
    %16 = vector.extract_strided_slice %11 {offsets = [2, 32], sizes = [1, 32], strides = [1, 1]} : vector<3x64xf32> to vector<1x32xf32>
    %17 = arith.truncf %0 : vector<16x32xf32> to vector<16x32xbf16>
    %cst_16 = arith.constant dense<0.000000e+00> : vector<16x32xf32>
    %18 = tpu.matmul %17, %7, %cst_16 {dimension_numbers = #tpu.dot_dimension_numbers<[1], [0], [0], [1], [0, 0, 1, 1], [], []>} : vector<16x32xbf16>, vector<32x32xbf16>, vector<16x32xf32> -> vector<16x32xf32>
    %19 = vector.broadcast %12 : vector<1x32xf32> to vector<16x32xf32>
    %20 = arith.addf %18, %19 : vector<16x32xf32>
    %21 = arith.truncf %0 : vector<16x32xf32> to vector<16x32xbf16>
    %cst_17 = arith.constant dense<0.000000e+00> : vector<16x64xf32>
    %22 = tpu.matmul %21, %9, %cst_17 {dimension_numbers = #tpu.dot_dimension_numbers<[1], [0], [0], [1], [0, 0, 1, 1], [], []>} : vector<16x32xbf16>, vector<32x64xbf16>, vector<16x64xf32> -> vector<16x64xf32>
    %23 = vector.broadcast %14 : vector<1x64xf32> to vector<16x64xf32>
    %24 = arith.addf %22, %23 : vector<16x64xf32>
    %25 = vector.extract_strided_slice %20 {offsets = [0, 0], sizes = [8, 32], strides = [1, 1]} : vector<16x32xf32> to vector<8x32xf32>
    %26 = vector.extract_strided_slice %24 {offsets = [0, 0], sizes = [8, 32], strides = [1, 1]} : vector<16x64xf32> to vector<8x32xf32>
    %27 = vector.extract_strided_slice %24 {offsets = [0, 32], sizes = [8, 32], strides = [1, 1]} : vector<16x64xf32> to vector<8x32xf32>
    %28 = vector.extract_strided_slice %6 {offsets = [0, 0, 0], sizes = [1, 8, 8], strides = [1, 1, 1]} : vector<2x10x16xf32> to vector<1x8x8xf32>
    %29 = vector.shape_cast %28 : vector<1x8x8xf32> to vector<8x8xf32>
    %30 = vector.extract_strided_slice %25 {offsets = [0, 0], sizes = [8, 8], strides = [1, 1]} : vector<8x32xf32> to vector<8x8xf32>
    %31 = arith.truncf %30 : vector<8x8xf32> to vector<8x8xbf16>
    %32 = vector.extract_strided_slice %26 {offsets = [0, 0], sizes = [8, 8], strides = [1, 1]} : vector<8x32xf32> to vector<8x8xf32>
    %33 = arith.truncf %32 : vector<8x8xf32> to vector<8x8xbf16>
    "tpu.trace_start"() <{level = 10 : i32, message = "qd,kd->qk"}> : () -> ()
    %cst_18 = arith.constant dense<0.000000e+00> : vector<8x8xf32>
    %34 = tpu.matmul %31, %33, %cst_18 {dimension_numbers = #tpu.dot_dimension_numbers<[1], [1], [0], [0], [0, 0, 1, 0], [], []>} : vector<8x8xbf16>, vector<8x8xbf16>, vector<8x8xf32> -> vector<8x8xf32>
    "tpu.trace_stop"() : () -> ()
    %cst_19 = arith.constant 0.353553385 : f32
    %35 = vector.broadcast %cst_19 : f32 to vector<8x8xf32>
    %36 = arith.mulf %34, %35 : vector<8x8xf32>
    %37 = arith.addf %36, %29 : vector<8x8xf32>
    %cst_20 = arith.constant dense<0xFF800000> : vector<8xf32>
    %38 = vector.multi_reduction <maximumf>, %37, %cst_20 [1] : vector<8x8xf32> to vector<8xf32>
    %39 = vector.shape_cast %38 : vector<8xf32> to vector<8x1xf32>
    %40 = vector.broadcast %39 : vector<8x1xf32> to vector<8x8xf32>
    %41 = arith.subf %37, %40 : vector<8x8xf32>
    %42 = math.exp %41 : vector<8x8xf32>
    %cst_21 = arith.constant dense<0.000000e+00> : vector<8xf32>
    %43 = vector.multi_reduction <add>, %42, %cst_21 [1] : vector<8x8xf32> to vector<8xf32>
    %44 = vector.shape_cast %43 : vector<8xf32> to vector<8x1xf32>
    %45 = vector.broadcast %44 : vector<8x1xf32> to vector<8x8xf32>
    %46 = arith.divf %42, %45 : vector<8x8xf32>
    %47 = arith.truncf %46 : vector<8x8xf32> to vector<8x8xbf16>
    %48 = vector.extract_strided_slice %27 {offsets = [0, 0], sizes = [8, 8], strides = [1, 1]} : vector<8x32xf32> to vector<8x8xf32>
    %49 = arith.truncf %48 : vector<8x8xf32> to vector<8x8xbf16>
    %cst_22 = arith.constant dense<0.000000e+00> : vector<8x8xf32>
    %50 = tpu.matmul %47, %49, %cst_22 {dimension_numbers = #tpu.dot_dimension_numbers<[1], [0], [0], [1], [0, 0, 1, 1], [], []>} : vector<8x8xbf16>, vector<8x8xbf16>, vector<8x8xf32> -> vector<8x8xf32>
    %51 = vector.extract_strided_slice %25 {offsets = [0, 8], sizes = [8, 8], strides = [1, 1]} : vector<8x32xf32> to vector<8x8xf32>
    %52 = arith.truncf %51 : vector<8x8xf32> to vector<8x8xbf16>
    %53 = vector.extract_strided_slice %26 {offsets = [0, 8], sizes = [8, 8], strides = [1, 1]} : vector<8x32xf32> to vector<8x8xf32>
    %54 = arith.truncf %53 : vector<8x8xf32> to vector<8x8xbf16>
    "tpu.trace_start"() <{level = 10 : i32, message = "qd,kd->qk"}> : () -> ()
    %cst_23 = arith.constant dense<0.000000e+00> : vector<8x8xf32>
    %55 = tpu.matmul %52, %54, %cst_23 {dimension_numbers = #tpu.dot_dimension_numbers<[1], [1], [0], [0], [0, 0, 1, 0], [], []>} : vector<8x8xbf16>, vector<8x8xbf16>, vector<8x8xf32> -> vector<8x8xf32>
    "tpu.trace_stop"() : () -> ()
    %cst_24 = arith.constant 0.353553385 : f32
    %56 = vector.broadcast %cst_24 : f32 to vector<8x8xf32>
    %57 = arith.mulf %55, %56 : vector<8x8xf32>
    %58 = arith.addf %57, %29 : vector<8x8xf32>
    %cst_25 = arith.constant dense<0xFF800000> : vector<8xf32>
    %59 = vector.multi_reduction <maximumf>, %58, %cst_25 [1] : vector<8x8xf32> to vector<8xf32>
    %60 = vector.shape_cast %59 : vector<8xf32> to vector<8x1xf32>
    %61 = vector.broadcast %60 : vector<8x1xf32> to vector<8x8xf32>
    %62 = arith.subf %58, %61 : vector<8x8xf32>
    %63 = math.exp %62 : vector<8x8xf32>
    %cst_26 = arith.constant dense<0.000000e+00> : vector<8xf32>
    %64 = vector.multi_reduction <add>, %63, %cst_26 [1] : vector<8x8xf32> to vector<8xf32>
    %65 = vector.shape_cast %64 : vector<8xf32> to vector<8x1xf32>
    %66 = vector.broadcast %65 : vector<8x1xf32> to vector<8x8xf32>
    %67 = arith.divf %63, %66 : vector<8x8xf32>
    %68 = arith.truncf %67 : vector<8x8xf32> to vector<8x8xbf16>
    %69 = vector.extract_strided_slice %27 {offsets = [0, 8], sizes = [8, 8], strides = [1, 1]} : vector<8x32xf32> to vector<8x8xf32>
    %70 = arith.truncf %69 : vector<8x8xf32> to vector<8x8xbf16>
    %cst_27 = arith.constant dense<0.000000e+00> : vector<8x8xf32>
    %71 = tpu.matmul %68, %70, %cst_27 {dimension_numbers = #tpu.dot_dimension_numbers<[1], [0], [0], [1], [0, 0, 1, 1], [], []>} : vector<8x8xbf16>, vector<8x8xbf16>, vector<8x8xf32> -> vector<8x8xf32>
    %72 = vector.extract_strided_slice %25 {offsets = [0, 16], sizes = [8, 8], strides = [1, 1]} : vector<8x32xf32> to vector<8x8xf32>
    %73 = arith.truncf %72 : vector<8x8xf32> to vector<8x8xbf16>
    %74 = vector.extract_strided_slice %26 {offsets = [0, 16], sizes = [8, 8], strides = [1, 1]} : vector<8x32xf32> to vector<8x8xf32>
    %75 = arith.truncf %74 : vector<8x8xf32> to vector<8x8xbf16>
    "tpu.trace_start"() <{level = 10 : i32, message = "qd,kd->qk"}> : () -> ()
    %cst_28 = arith.constant dense<0.000000e+00> : vector<8x8xf32>
    %76 = tpu.matmul %73, %75, %cst_28 {dimension_numbers = #tpu.dot_dimension_numbers<[1], [1], [0], [0], [0, 0, 1, 0], [], []>} : vector<8x8xbf16>, vector<8x8xbf16>, vector<8x8xf32> -> vector<8x8xf32>
    "tpu.trace_stop"() : () -> ()
    %cst_29 = arith.constant 0.353553385 : f32
    %77 = vector.broadcast %cst_29 : f32 to vector<8x8xf32>
    %78 = arith.mulf %76, %77 : vector<8x8xf32>
    %79 = arith.addf %78, %29 : vector<8x8xf32>
    %cst_30 = arith.constant dense<0xFF800000> : vector<8xf32>
    %80 = vector.multi_reduction <maximumf>, %79, %cst_30 [1] : vector<8x8xf32> to vector<8xf32>
    %81 = vector.shape_cast %80 : vector<8xf32> to vector<8x1xf32>
    %82 = vector.broadcast %81 : vector<8x1xf32> to vector<8x8xf32>
    %83 = arith.subf %79, %82 : vector<8x8xf32>
    %84 = math.exp %83 : vector<8x8xf32>
    %cst_31 = arith.constant dense<0.000000e+00> : vector<8xf32>
    %85 = vector.multi_reduction <add>, %84, %cst_31 [1] : vector<8x8xf32> to vector<8xf32>
    %86 = vector.shape_cast %85 : vector<8xf32> to vector<8x1xf32>
    %87 = vector.broadcast %86 : vector<8x1xf32> to vector<8x8xf32>
    %88 = arith.divf %84, %87 : vector<8x8xf32>
    %89 = arith.truncf %88 : vector<8x8xf32> to vector<8x8xbf16>
    %90 = vector.extract_strided_slice %27 {offsets = [0, 16], sizes = [8, 8], strides = [1, 1]} : vector<8x32xf32> to vector<8x8xf32>
    %91 = arith.truncf %90 : vector<8x8xf32> to vector<8x8xbf16>
    %cst_32 = arith.constant dense<0.000000e+00> : vector<8x8xf32>
    %92 = tpu.matmul %89, %91, %cst_32 {dimension_numbers = #tpu.dot_dimension_numbers<[1], [0], [0], [1], [0, 0, 1, 1], [], []>} : vector<8x8xbf16>, vector<8x8xbf16>, vector<8x8xf32> -> vector<8x8xf32>
    %93 = vector.extract_strided_slice %25 {offsets = [0, 24], sizes = [8, 8], strides = [1, 1]} : vector<8x32xf32> to vector<8x8xf32>
    %94 = arith.truncf %93 : vector<8x8xf32> to vector<8x8xbf16>
    %95 = vector.extract_strided_slice %26 {offsets = [0, 24], sizes = [8, 8], strides = [1, 1]} : vector<8x32xf32> to vector<8x8xf32>
    %96 = arith.truncf %95 : vector<8x8xf32> to vector<8x8xbf16>
    "tpu.trace_start"() <{level = 10 : i32, message = "qd,kd->qk"}> : () -> ()
    %cst_33 = arith.constant dense<0.000000e+00> : vector<8x8xf32>
    %97 = tpu.matmul %94, %96, %cst_33 {dimension_numbers = #tpu.dot_dimension_numbers<[1], [1], [0], [0], [0, 0, 1, 0], [], []>} : vector<8x8xbf16>, vector<8x8xbf16>, vector<8x8xf32> -> vector<8x8xf32>
    "tpu.trace_stop"() : () -> ()
    %cst_34 = arith.constant 0.353553385 : f32
    %98 = vector.broadcast %cst_34 : f32 to vector<8x8xf32>
    %99 = arith.mulf %97, %98 : vector<8x8xf32>
    %100 = arith.addf %99, %29 : vector<8x8xf32>
    %cst_35 = arith.constant dense<0xFF800000> : vector<8xf32>
    %101 = vector.multi_reduction <maximumf>, %100, %cst_35 [1] : vector<8x8xf32> to vector<8xf32>
    %102 = vector.shape_cast %101 : vector<8xf32> to vector<8x1xf32>
    %103 = vector.broadcast %102 : vector<8x1xf32> to vector<8x8xf32>
    %104 = arith.subf %100, %103 : vector<8x8xf32>
    %105 = math.exp %104 : vector<8x8xf32>
    %cst_36 = arith.constant dense<0.000000e+00> : vector<8xf32>
    %106 = vector.multi_reduction <add>, %105, %cst_36 [1] : vector<8x8xf32> to vector<8xf32>
    %107 = vector.shape_cast %106 : vector<8xf32> to vector<8x1xf32>
    %108 = vector.broadcast %107 : vector<8x1xf32> to vector<8x8xf32>
    %109 = arith.divf %105, %108 : vector<8x8xf32>
    %110 = arith.truncf %109 : vector<8x8xf32> to vector<8x8xbf16>
    %111 = vector.extract_strided_slice %27 {offsets = [0, 24], sizes = [8, 8], strides = [1, 1]} : vector<8x32xf32> to vector<8x8xf32>
    %112 = arith.truncf %111 : vector<8x8xf32> to vector<8x8xbf16>
    %cst_37 = arith.constant dense<0.000000e+00> : vector<8x8xf32>
    %113 = tpu.matmul %110, %112, %cst_37 {dimension_numbers = #tpu.dot_dimension_numbers<[1], [0], [0], [1], [0, 0, 1, 1], [], []>} : vector<8x8xbf16>, vector<8x8xbf16>, vector<8x8xf32> -> vector<8x8xf32>
    %114 = tpu.concatenate %50, %71, %92, %113 in 1 : vector<8x8xf32>, vector<8x8xf32>, vector<8x8xf32>, vector<8x8xf32> -> vector<8x32xf32>
    %115 = vector.extract_strided_slice %20 {offsets = [8, 0], sizes = [8, 32], strides = [1, 1]} : vector<16x32xf32> to vector<8x32xf32>
    %116 = vector.extract_strided_slice %24 {offsets = [8, 0], sizes = [8, 32], strides = [1, 1]} : vector<16x64xf32> to vector<8x32xf32>
    %117 = vector.extract_strided_slice %24 {offsets = [8, 32], sizes = [8, 32], strides = [1, 1]} : vector<16x64xf32> to vector<8x32xf32>
    %118 = vector.extract_strided_slice %6 {offsets = [1, 0, 0], sizes = [1, 8, 8], strides = [1, 1, 1]} : vector<2x10x16xf32> to vector<1x8x8xf32>
    %119 = vector.shape_cast %118 : vector<1x8x8xf32> to vector<8x8xf32>
    %120 = vector.extract_strided_slice %115 {offsets = [0, 0], sizes = [8, 8], strides = [1, 1]} : vector<8x32xf32> to vector<8x8xf32>
    %121 = arith.truncf %120 : vector<8x8xf32> to vector<8x8xbf16>
    %122 = vector.extract_strided_slice %116 {offsets = [0, 0], sizes = [8, 8], strides = [1, 1]} : vector<8x32xf32> to vector<8x8xf32>
    %123 = arith.truncf %122 : vector<8x8xf32> to vector<8x8xbf16>
    "tpu.trace_start"() <{level = 10 : i32, message = "qd,kd->qk"}> : () -> ()
    %cst_38 = arith.constant dense<0.000000e+00> : vector<8x8xf32>
    %124 = tpu.matmul %121, %123, %cst_38 {dimension_numbers = #tpu.dot_dimension_numbers<[1], [1], [0], [0], [0, 0, 1, 0], [], []>} : vector<8x8xbf16>, vector<8x8xbf16>, vector<8x8xf32> -> vector<8x8xf32>
    "tpu.trace_stop"() : () -> ()
    %cst_39 = arith.constant 0.353553385 : f32
    %125 = vector.broadcast %cst_39 : f32 to vector<8x8xf32>
    %126 = arith.mulf %124, %125 : vector<8x8xf32>
    %127 = arith.addf %126, %119 : vector<8x8xf32>
    %cst_40 = arith.constant dense<0xFF800000> : vector<8xf32>
    %128 = vector.multi_reduction <maximumf>, %127, %cst_40 [1] : vector<8x8xf32> to vector<8xf32>
    %129 = vector.shape_cast %128 : vector<8xf32> to vector<8x1xf32>
    %130 = vector.broadcast %129 : vector<8x1xf32> to vector<8x8xf32>
    %131 = arith.subf %127, %130 : vector<8x8xf32>
    %132 = math.exp %131 : vector<8x8xf32>
    %cst_41 = arith.constant dense<0.000000e+00> : vector<8xf32>
    %133 = vector.multi_reduction <add>, %132, %cst_41 [1] : vector<8x8xf32> to vector<8xf32>
    %134 = vector.shape_cast %133 : vector<8xf32> to vector<8x1xf32>
    %135 = vector.broadcast %134 : vector<8x1xf32> to vector<8x8xf32>
    %136 = arith.divf %132, %135 : vector<8x8xf32>
    %137 = arith.truncf %136 : vector<8x8xf32> to vector<8x8xbf16>
    %138 = vector.extract_strided_slice %117 {offsets = [0, 0], sizes = [8, 8], strides = [1, 1]} : vector<8x32xf32> to vector<8x8xf32>
    %139 = arith.truncf %138 : vector<8x8xf32> to vector<8x8xbf16>
    %cst_42 = arith.constant dense<0.000000e+00> : vector<8x8xf32>
    %140 = tpu.matmul %137, %139, %cst_42 {dimension_numbers = #tpu.dot_dimension_numbers<[1], [0], [0], [1], [0, 0, 1, 1], [], []>} : vector<8x8xbf16>, vector<8x8xbf16>, vector<8x8xf32> -> vector<8x8xf32>
    %141 = vector.extract_strided_slice %115 {offsets = [0, 8], sizes = [8, 8], strides = [1, 1]} : vector<8x32xf32> to vector<8x8xf32>
    %142 = arith.truncf %141 : vector<8x8xf32> to vector<8x8xbf16>
    %143 = vector.extract_strided_slice %116 {offsets = [0, 8], sizes = [8, 8], strides = [1, 1]} : vector<8x32xf32> to vector<8x8xf32>
    %144 = arith.truncf %143 : vector<8x8xf32> to vector<8x8xbf16>
    "tpu.trace_start"() <{level = 10 : i32, message = "qd,kd->qk"}> : () -> ()
    %cst_43 = arith.constant dense<0.000000e+00> : vector<8x8xf32>
    %145 = tpu.matmul %142, %144, %cst_43 {dimension_numbers = #tpu.dot_dimension_numbers<[1], [1], [0], [0], [0, 0, 1, 0], [], []>} : vector<8x8xbf16>, vector<8x8xbf16>, vector<8x8xf32> -> vector<8x8xf32>
    "tpu.trace_stop"() : () -> ()
    %cst_44 = arith.constant 0.353553385 : f32
    %146 = vector.broadcast %cst_44 : f32 to vector<8x8xf32>
    %147 = arith.mulf %145, %146 : vector<8x8xf32>
    %148 = arith.addf %147, %119 : vector<8x8xf32>
    %cst_45 = arith.constant dense<0xFF800000> : vector<8xf32>
    %149 = vector.multi_reduction <maximumf>, %148, %cst_45 [1] : vector<8x8xf32> to vector<8xf32>
    %150 = vector.shape_cast %149 : vector<8xf32> to vector<8x1xf32>
    %151 = vector.broadcast %150 : vector<8x1xf32> to vector<8x8xf32>
    %152 = arith.subf %148, %151 : vector<8x8xf32>
    %153 = math.exp %152 : vector<8x8xf32>
    %cst_46 = arith.constant dense<0.000000e+00> : vector<8xf32>
    %154 = vector.multi_reduction <add>, %153, %cst_46 [1] : vector<8x8xf32> to vector<8xf32>
    %155 = vector.shape_cast %154 : vector<8xf32> to vector<8x1xf32>
    %156 = vector.broadcast %155 : vector<8x1xf32> to vector<8x8xf32>
    %157 = arith.divf %153, %156 : vector<8x8xf32>
    %158 = arith.truncf %157 : vector<8x8xf32> to vector<8x8xbf16>
    %159 = vector.extract_strided_slice %117 {offsets = [0, 8], sizes = [8, 8], strides = [1, 1]} : vector<8x32xf32> to vector<8x8xf32>
    %160 = arith.truncf %159 : vector<8x8xf32> to vector<8x8xbf16>
    %cst_47 = arith.constant dense<0.000000e+00> : vector<8x8xf32>
    %161 = tpu.matmul %158, %160, %cst_47 {dimension_numbers = #tpu.dot_dimension_numbers<[1], [0], [0], [1], [0, 0, 1, 1], [], []>} : vector<8x8xbf16>, vector<8x8xbf16>, vector<8x8xf32> -> vector<8x8xf32>
    %162 = vector.extract_strided_slice %115 {offsets = [0, 16], sizes = [8, 8], strides = [1, 1]} : vector<8x32xf32> to vector<8x8xf32>
    %163 = arith.truncf %162 : vector<8x8xf32> to vector<8x8xbf16>
    %164 = vector.extract_strided_slice %116 {offsets = [0, 16], sizes = [8, 8], strides = [1, 1]} : vector<8x32xf32> to vector<8x8xf32>
    %165 = arith.truncf %164 : vector<8x8xf32> to vector<8x8xbf16>
    "tpu.trace_start"() <{level = 10 : i32, message = "qd,kd->qk"}> : () -> ()
    %cst_48 = arith.constant dense<0.000000e+00> : vector<8x8xf32>
    %166 = tpu.matmul %163, %165, %cst_48 {dimension_numbers = #tpu.dot_dimension_numbers<[1], [1], [0], [0], [0, 0, 1, 0], [], []>} : vector<8x8xbf16>, vector<8x8xbf16>, vector<8x8xf32> -> vector<8x8xf32>
    "tpu.trace_stop"() : () -> ()
    %cst_49 = arith.constant 0.353553385 : f32
    %167 = vector.broadcast %cst_49 : f32 to vector<8x8xf32>
    %168 = arith.mulf %166, %167 : vector<8x8xf32>
    %169 = arith.addf %168, %119 : vector<8x8xf32>
    %cst_50 = arith.constant dense<0xFF800000> : vector<8xf32>
    %170 = vector.multi_reduction <maximumf>, %169, %cst_50 [1] : vector<8x8xf32> to vector<8xf32>
    %171 = vector.shape_cast %170 : vector<8xf32> to vector<8x1xf32>
    %172 = vector.broadcast %171 : vector<8x1xf32> to vector<8x8xf32>
    %173 = arith.subf %169, %172 : vector<8x8xf32>
    %174 = math.exp %173 : vector<8x8xf32>
    %cst_51 = arith.constant dense<0.000000e+00> : vector<8xf32>
    %175 = vector.multi_reduction <add>, %174, %cst_51 [1] : vector<8x8xf32> to vector<8xf32>
    %176 = vector.shape_cast %175 : vector<8xf32> to vector<8x1xf32>
    %177 = vector.broadcast %176 : vector<8x1xf32> to vector<8x8xf32>
    %178 = arith.divf %174, %177 : vector<8x8xf32>
    %179 = arith.truncf %178 : vector<8x8xf32> to vector<8x8xbf16>
    %180 = vector.extract_strided_slice %117 {offsets = [0, 16], sizes = [8, 8], strides = [1, 1]} : vector<8x32xf32> to vector<8x8xf32>
    %181 = arith.truncf %180 : vector<8x8xf32> to vector<8x8xbf16>
    %cst_52 = arith.constant dense<0.000000e+00> : vector<8x8xf32>
    %182 = tpu.matmul %179, %181, %cst_52 {dimension_numbers = #tpu.dot_dimension_numbers<[1], [0], [0], [1], [0, 0, 1, 1], [], []>} : vector<8x8xbf16>, vector<8x8xbf16>, vector<8x8xf32> -> vector<8x8xf32>
    %183 = vector.extract_strided_slice %115 {offsets = [0, 24], sizes = [8, 8], strides = [1, 1]} : vector<8x32xf32> to vector<8x8xf32>
    %184 = arith.truncf %183 : vector<8x8xf32> to vector<8x8xbf16>
    %185 = vector.extract_strided_slice %116 {offsets = [0, 24], sizes = [8, 8], strides = [1, 1]} : vector<8x32xf32> to vector<8x8xf32>
    %186 = arith.truncf %185 : vector<8x8xf32> to vector<8x8xbf16>
    "tpu.trace_start"() <{level = 10 : i32, message = "qd,kd->qk"}> : () -> ()
    %cst_53 = arith.constant dense<0.000000e+00> : vector<8x8xf32>
    %187 = tpu.matmul %184, %186, %cst_53 {dimension_numbers = #tpu.dot_dimension_numbers<[1], [1], [0], [0], [0, 0, 1, 0], [], []>} : vector<8x8xbf16>, vector<8x8xbf16>, vector<8x8xf32> -> vector<8x8xf32>
    "tpu.trace_stop"() : () -> ()
    %cst_54 = arith.constant 0.353553385 : f32
    %188 = vector.broadcast %cst_54 : f32 to vector<8x8xf32>
    %189 = arith.mulf %187, %188 : vector<8x8xf32>
    %190 = arith.addf %189, %119 : vector<8x8xf32>
    %cst_55 = arith.constant dense<0xFF800000> : vector<8xf32>
    %191 = vector.multi_reduction <maximumf>, %190, %cst_55 [1] : vector<8x8xf32> to vector<8xf32>
    %192 = vector.shape_cast %191 : vector<8xf32> to vector<8x1xf32>
    %193 = vector.broadcast %192 : vector<8x1xf32> to vector<8x8xf32>
    %194 = arith.subf %190, %193 : vector<8x8xf32>
    %195 = math.exp %194 : vector<8x8xf32>
    %cst_56 = arith.constant dense<0.000000e+00> : vector<8xf32>
    %196 = vector.multi_reduction <add>, %195, %cst_56 [1] : vector<8x8xf32> to vector<8xf32>
    %197 = vector.shape_cast %196 : vector<8xf32> to vector<8x1xf32>
    %198 = vector.broadcast %197 : vector<8x1xf32> to vector<8x8xf32>
    %199 = arith.divf %195, %198 : vector<8x8xf32>
    %200 = arith.truncf %199 : vector<8x8xf32> to vector<8x8xbf16>
    %201 = vector.extract_strided_slice %117 {offsets = [0, 24], sizes = [8, 8], strides = [1, 1]} : vector<8x32xf32> to vector<8x8xf32>
    %202 = arith.truncf %201 : vector<8x8xf32> to vector<8x8xbf16>
    %cst_57 = arith.constant dense<0.000000e+00> : vector<8x8xf32>
    %203 = tpu.matmul %200, %202, %cst_57 {dimension_numbers = #tpu.dot_dimension_numbers<[1], [0], [0], [1], [0, 0, 1, 1], [], []>} : vector<8x8xbf16>, vector<8x8xbf16>, vector<8x8xf32> -> vector<8x8xf32>
    %204 = tpu.concatenate %140, %161, %182, %203 in 1 : vector<8x8xf32>, vector<8x8xf32>, vector<8x8xf32>, vector<8x8xf32> -> vector<8x32xf32>
    %205 = tpu.concatenate %114, %204 in 0 : vector<8x32xf32>, vector<8x32xf32> -> vector<16x32xf32>
    %206 = arith.truncf %205 : vector<16x32xf32> to vector<16x32xbf16>
    %cst_58 = arith.constant dense<0.000000e+00> : vector<16x32xf32>
    %207 = tpu.matmul %206, %8, %cst_58 {dimension_numbers = #tpu.dot_dimension_numbers<[1], [0], [0], [1], [0, 0, 1, 1], [], []>} : vector<16x32xbf16>, vector<32x32xbf16>, vector<16x32xf32> -> vector<16x32xf32>
    %208 = vector.broadcast %13 : vector<1x32xf32> to vector<16x32xf32>
    %209 = arith.addf %207, %208 : vector<16x32xf32>
    %210 = arith.addf %0, %209 : vector<16x32xf32>
    %cst_59 = arith.constant dense<0.000000e+00> : vector<16xf32>
    %211 = vector.multi_reduction <add>, %210, %cst_59 [1] : vector<16x32xf32> to vector<16xf32>
    %212 = vector.shape_cast %211 : vector<16xf32> to vector<16x1xf32>
    %cst_60 = arith.constant 3.200000e+01 : f32
    %213 = vector.broadcast %cst_60 : f32 to vector<16x1xf32>
    %214 = arith.divf %212, %213 : vector<16x1xf32>
    %215 = vector.broadcast %214 : vector<16x1xf32> to vector<16x32xf32>
    %216 = arith.subf %210, %215 : vector<16x32xf32>
    %217 = arith.mulf %216, %216 : vector<16x32xf32>
    %cst_61 = arith.constant dense<0.000000e+00> : vector<16xf32>
    %218 = vector.multi_reduction <add>, %217, %cst_61 [1] : vector<16x32xf32> to vector<16xf32>
    %219 = vector.shape_cast %218 : vector<16xf32> to vector<16x1xf32>
    %cst_62 = arith.constant 3.200000e+01 : f32
    %220 = vector.broadcast %cst_62 : f32 to vector<16x1xf32>
    %221 = arith.divf %219, %220 : vector<16x1xf32>
    %222 = vector.broadcast %214 : vector<16x1xf32> to vector<16x32xf32>
    %223 = arith.subf %210, %222 : vector<16x32xf32>
    %cst_63 = arith.constant 9.99999974E-6 : f32
    %224 = vector.broadcast %cst_63 : f32 to vector<16x1xf32>
    %225 = arith.addf %221, %224 : vector<16x1xf32>
    %226 = math.rsqrt %225 : vector<16x1xf32>
    %227 = vector.broadcast %226 : vector<16x1xf32> to vector<16x32xf32>
    %228 = arith.mulf %223, %227 : vector<16x32xf32>
    %229 = vector.broadcast %15 : vector<1x32xf32> to vector<16x32xf32>
    %230 = arith.mulf %228, %229 : vector<16x32xf32>
    %231 = vector.broadcast %16 : vector<1x32xf32> to vector<16x32xf32>
    %232 = arith.addf %230, %231 : vector<16x32xf32>
    %233 = vector.broadcast %3 : vector<16x1xf32> to vector<16x32xf32>
    %234 = arith.mulf %232, %233 : vector<16x32xf32>
    %c80 = arith.constant 80 : index
    %c0_64 = arith.constant 0 : index
    %235 = vector.load %arg6[%c80, %c0_64] : memref<352x64xbf16, #tpu.memory_space<vmem>>, vector<32x32xbf16>
    %c80_65 = arith.constant 80 : index
    %c32_66 = arith.constant 32 : index
    %236 = vector.load %arg6[%c80_65, %c32_66] : memref<352x64xbf16, #tpu.memory_space<vmem>>, vector<32x32xbf16>
    %c112 = arith.constant 112 : index
    %c0_67 = arith.constant 0 : index
    %237 = vector.load %arg6[%c112, %c0_67] : memref<352x64xbf16, #tpu.memory_space<vmem>>, vector<32x64xbf16>
    %c144 = arith.constant 144 : index
    %c0_68 = arith.constant 0 : index
    %238 = vector.load %arg6[%c144, %c0_68] : memref<352x64xbf16, #tpu.memory_space<vmem>>, vector<3x64xbf16>
    %239 = arith.extf %238 : vector<3x64xbf16> to vector<3x64xf32>
    %240 = vector.extract_strided_slice %239 {offsets = [0, 0], sizes = [1, 32], strides = [1, 1]} : vector<3x64xf32> to vector<1x32xf32>
    %241 = vector.extract_strided_slice %239 {offsets = [0, 32], sizes = [1, 32], strides = [1, 1]} : vector<3x64xf32> to vector<1x32xf32>
    %242 = vector.extract_strided_slice %239 {offsets = [1, 0], sizes = [1, 64], strides = [1, 1]} : vector<3x64xf32> to vector<1x64xf32>
    %243 = vector.extract_strided_slice %239 {offsets = [2, 0], sizes = [1, 32], strides = [1, 1]} : vector<3x64xf32> to vector<1x32xf32>
    %244 = vector.extract_strided_slice %239 {offsets = [2, 32], sizes = [1, 32], strides = [1, 1]} : vector<3x64xf32> to vector<1x32xf32>
    %245 = arith.truncf %234 : vector<16x32xf32> to vector<16x32xbf16>
    %cst_69 = arith.constant dense<0.000000e+00> : vector<16x32xf32>
    %246 = tpu.matmul %245, %235, %cst_69 {dimension_numbers = #tpu.dot_dimension_numbers<[1], [0], [0], [1], [0, 0, 1, 1], [], []>} : vector<16x32xbf16>, vector<32x32xbf16>, vector<16x32xf32> -> vector<16x32xf32>
    %247 = vector.broadcast %240 : vector<1x32xf32> to vector<16x32xf32>
    %248 = arith.addf %246, %247 : vector<16x32xf32>
    %249 = arith.truncf %1 : vector<32x32xf32> to vector<32x32xbf16>
    %cst_70 = arith.constant dense<0.000000e+00> : vector<32x64xf32>
    %250 = tpu.matmul %249, %237, %cst_70 {dimension_numbers = #tpu.dot_dimension_numbers<[1], [0], [0], [1], [0, 0, 1, 1], [], []>} : vector<32x32xbf16>, vector<32x64xbf16>, vector<32x64xf32> -> vector<32x64xf32>
    %251 = vector.broadcast %242 : vector<1x64xf32> to vector<32x64xf32>
    %252 = arith.addf %250, %251 : vector<32x64xf32>
    %253 = vector.extract_strided_slice %248 {offsets = [0, 0], sizes = [8, 32], strides = [1, 1]} : vector<16x32xf32> to vector<8x32xf32>
    %254 = vector.extract_strided_slice %252 {offsets = [0, 0], sizes = [16, 32], strides = [1, 1]} : vector<32x64xf32> to vector<16x32xf32>
    %255 = vector.extract_strided_slice %252 {offsets = [0, 32], sizes = [16, 32], strides = [1, 1]} : vector<32x64xf32> to vector<16x32xf32>
    %256 = vector.extract_strided_slice %6 {offsets = [0, 8, 0], sizes = [1, 1, 16], strides = [1, 1, 1]} : vector<2x10x16xf32> to vector<1x1x16xf32>
    %257 = vector.shape_cast %256 : vector<1x1x16xf32> to vector<1x16xf32>
    %258 = vector.extract_strided_slice %253 {offsets = [0, 0], sizes = [8, 8], strides = [1, 1]} : vector<8x32xf32> to vector<8x8xf32>
    %259 = arith.truncf %258 : vector<8x8xf32> to vector<8x8xbf16>
    %260 = vector.extract_strided_slice %254 {offsets = [0, 0], sizes = [16, 8], strides = [1, 1]} : vector<16x32xf32> to vector<16x8xf32>
    %261 = arith.truncf %260 : vector<16x8xf32> to vector<16x8xbf16>
    "tpu.trace_start"() <{level = 10 : i32, message = "qd,kd->qk"}> : () -> ()
    %cst_71 = arith.constant dense<0.000000e+00> : vector<8x16xf32>
    %262 = tpu.matmul %259, %261, %cst_71 {dimension_numbers = #tpu.dot_dimension_numbers<[1], [1], [0], [0], [0, 0, 1, 0], [], []>} : vector<8x8xbf16>, vector<16x8xbf16>, vector<8x16xf32> -> vector<8x16xf32>
    "tpu.trace_stop"() : () -> ()
    %cst_72 = arith.constant 0.353553385 : f32
    %263 = vector.broadcast %cst_72 : f32 to vector<8x16xf32>
    %264 = arith.mulf %262, %263 : vector<8x16xf32>
    %265 = vector.broadcast %257 : vector<1x16xf32> to vector<8x16xf32>
    %266 = arith.addf %264, %265 : vector<8x16xf32>
    %cst_73 = arith.constant dense<0xFF800000> : vector<8xf32>
    %267 = vector.multi_reduction <maximumf>, %266, %cst_73 [1] : vector<8x16xf32> to vector<8xf32>
    %268 = vector.shape_cast %267 : vector<8xf32> to vector<8x1xf32>
    %269 = vector.broadcast %268 : vector<8x1xf32> to vector<8x16xf32>
    %270 = arith.subf %266, %269 : vector<8x16xf32>
    %271 = math.exp %270 : vector<8x16xf32>
    %cst_74 = arith.constant dense<0.000000e+00> : vector<8xf32>
    %272 = vector.multi_reduction <add>, %271, %cst_74 [1] : vector<8x16xf32> to vector<8xf32>
    %273 = vector.shape_cast %272 : vector<8xf32> to vector<8x1xf32>
    %274 = vector.broadcast %273 : vector<8x1xf32> to vector<8x16xf32>
    %275 = arith.divf %271, %274 : vector<8x16xf32>
    %276 = arith.truncf %275 : vector<8x16xf32> to vector<8x16xbf16>
    %277 = vector.extract_strided_slice %255 {offsets = [0, 0], sizes = [16, 8], strides = [1, 1]} : vector<16x32xf32> to vector<16x8xf32>
    %278 = arith.truncf %277 : vector<16x8xf32> to vector<16x8xbf16>
    %cst_75 = arith.constant dense<0.000000e+00> : vector<8x8xf32>
    %279 = tpu.matmul %276, %278, %cst_75 {dimension_numbers = #tpu.dot_dimension_numbers<[1], [0], [0], [1], [0, 0, 1, 1], [], []>} : vector<8x16xbf16>, vector<16x8xbf16>, vector<8x8xf32> -> vector<8x8xf32>
    %280 = vector.extract_strided_slice %253 {offsets = [0, 8], sizes = [8, 8], strides = [1, 1]} : vector<8x32xf32> to vector<8x8xf32>
    %281 = arith.truncf %280 : vector<8x8xf32> to vector<8x8xbf16>
    %282 = vector.extract_strided_slice %254 {offsets = [0, 8], sizes = [16, 8], strides = [1, 1]} : vector<16x32xf32> to vector<16x8xf32>
    %283 = arith.truncf %282 : vector<16x8xf32> to vector<16x8xbf16>
    "tpu.trace_start"() <{level = 10 : i32, message = "qd,kd->qk"}> : () -> ()
    %cst_76 = arith.constant dense<0.000000e+00> : vector<8x16xf32>
    %284 = tpu.matmul %281, %283, %cst_76 {dimension_numbers = #tpu.dot_dimension_numbers<[1], [1], [0], [0], [0, 0, 1, 0], [], []>} : vector<8x8xbf16>, vector<16x8xbf16>, vector<8x16xf32> -> vector<8x16xf32>
    "tpu.trace_stop"() : () -> ()
    %cst_77 = arith.constant 0.353553385 : f32
    %285 = vector.broadcast %cst_77 : f32 to vector<8x16xf32>
    %286 = arith.mulf %284, %285 : vector<8x16xf32>
    %287 = vector.broadcast %257 : vector<1x16xf32> to vector<8x16xf32>
    %288 = arith.addf %286, %287 : vector<8x16xf32>
    %cst_78 = arith.constant dense<0xFF800000> : vector<8xf32>
    %289 = vector.multi_reduction <maximumf>, %288, %cst_78 [1] : vector<8x16xf32> to vector<8xf32>
    %290 = vector.shape_cast %289 : vector<8xf32> to vector<8x1xf32>
    %291 = vector.broadcast %290 : vector<8x1xf32> to vector<8x16xf32>
    %292 = arith.subf %288, %291 : vector<8x16xf32>
    %293 = math.exp %292 : vector<8x16xf32>
    %cst_79 = arith.constant dense<0.000000e+00> : vector<8xf32>
    %294 = vector.multi_reduction <add>, %293, %cst_79 [1] : vector<8x16xf32> to vector<8xf32>
    %295 = vector.shape_cast %294 : vector<8xf32> to vector<8x1xf32>
    %296 = vector.broadcast %295 : vector<8x1xf32> to vector<8x16xf32>
    %297 = arith.divf %293, %296 : vector<8x16xf32>
    %298 = arith.truncf %297 : vector<8x16xf32> to vector<8x16xbf16>
    %299 = vector.extract_strided_slice %255 {offsets = [0, 8], sizes = [16, 8], strides = [1, 1]} : vector<16x32xf32> to vector<16x8xf32>
    %300 = arith.truncf %299 : vector<16x8xf32> to vector<16x8xbf16>
    %cst_80 = arith.constant dense<0.000000e+00> : vector<8x8xf32>
    %301 = tpu.matmul %298, %300, %cst_80 {dimension_numbers = #tpu.dot_dimension_numbers<[1], [0], [0], [1], [0, 0, 1, 1], [], []>} : vector<8x16xbf16>, vector<16x8xbf16>, vector<8x8xf32> -> vector<8x8xf32>
    %302 = vector.extract_strided_slice %253 {offsets = [0, 16], sizes = [8, 8], strides = [1, 1]} : vector<8x32xf32> to vector<8x8xf32>
    %303 = arith.truncf %302 : vector<8x8xf32> to vector<8x8xbf16>
    %304 = vector.extract_strided_slice %254 {offsets = [0, 16], sizes = [16, 8], strides = [1, 1]} : vector<16x32xf32> to vector<16x8xf32>
    %305 = arith.truncf %304 : vector<16x8xf32> to vector<16x8xbf16>
    "tpu.trace_start"() <{level = 10 : i32, message = "qd,kd->qk"}> : () -> ()
    %cst_81 = arith.constant dense<0.000000e+00> : vector<8x16xf32>
    %306 = tpu.matmul %303, %305, %cst_81 {dimension_numbers = #tpu.dot_dimension_numbers<[1], [1], [0], [0], [0, 0, 1, 0], [], []>} : vector<8x8xbf16>, vector<16x8xbf16>, vector<8x16xf32> -> vector<8x16xf32>
    "tpu.trace_stop"() : () -> ()
    %cst_82 = arith.constant 0.353553385 : f32
    %307 = vector.broadcast %cst_82 : f32 to vector<8x16xf32>
    %308 = arith.mulf %306, %307 : vector<8x16xf32>
    %309 = vector.broadcast %257 : vector<1x16xf32> to vector<8x16xf32>
    %310 = arith.addf %308, %309 : vector<8x16xf32>
    %cst_83 = arith.constant dense<0xFF800000> : vector<8xf32>
    %311 = vector.multi_reduction <maximumf>, %310, %cst_83 [1] : vector<8x16xf32> to vector<8xf32>
    %312 = vector.shape_cast %311 : vector<8xf32> to vector<8x1xf32>
    %313 = vector.broadcast %312 : vector<8x1xf32> to vector<8x16xf32>
    %314 = arith.subf %310, %313 : vector<8x16xf32>
    %315 = math.exp %314 : vector<8x16xf32>
    %cst_84 = arith.constant dense<0.000000e+00> : vector<8xf32>
    %316 = vector.multi_reduction <add>, %315, %cst_84 [1] : vector<8x16xf32> to vector<8xf32>
    %317 = vector.shape_cast %316 : vector<8xf32> to vector<8x1xf32>
    %318 = vector.broadcast %317 : vector<8x1xf32> to vector<8x16xf32>
    %319 = arith.divf %315, %318 : vector<8x16xf32>
    %320 = arith.truncf %319 : vector<8x16xf32> to vector<8x16xbf16>
    %321 = vector.extract_strided_slice %255 {offsets = [0, 16], sizes = [16, 8], strides = [1, 1]} : vector<16x32xf32> to vector<16x8xf32>
    %322 = arith.truncf %321 : vector<16x8xf32> to vector<16x8xbf16>
    %cst_85 = arith.constant dense<0.000000e+00> : vector<8x8xf32>
    %323 = tpu.matmul %320, %322, %cst_85 {dimension_numbers = #tpu.dot_dimension_numbers<[1], [0], [0], [1], [0, 0, 1, 1], [], []>} : vector<8x16xbf16>, vector<16x8xbf16>, vector<8x8xf32> -> vector<8x8xf32>
    %324 = vector.extract_strided_slice %253 {offsets = [0, 24], sizes = [8, 8], strides = [1, 1]} : vector<8x32xf32> to vector<8x8xf32>
    %325 = arith.truncf %324 : vector<8x8xf32> to vector<8x8xbf16>
    %326 = vector.extract_strided_slice %254 {offsets = [0, 24], sizes = [16, 8], strides = [1, 1]} : vector<16x32xf32> to vector<16x8xf32>
    %327 = arith.truncf %326 : vector<16x8xf32> to vector<16x8xbf16>
    "tpu.trace_start"() <{level = 10 : i32, message = "qd,kd->qk"}> : () -> ()
    %cst_86 = arith.constant dense<0.000000e+00> : vector<8x16xf32>
    %328 = tpu.matmul %325, %327, %cst_86 {dimension_numbers = #tpu.dot_dimension_numbers<[1], [1], [0], [0], [0, 0, 1, 0], [], []>} : vector<8x8xbf16>, vector<16x8xbf16>, vector<8x16xf32> -> vector<8x16xf32>
    "tpu.trace_stop"() : () -> ()
    %cst_87 = arith.constant 0.353553385 : f32
    %329 = vector.broadcast %cst_87 : f32 to vector<8x16xf32>
    %330 = arith.mulf %328, %329 : vector<8x16xf32>
    %331 = vector.broadcast %257 : vector<1x16xf32> to vector<8x16xf32>
    %332 = arith.addf %330, %331 : vector<8x16xf32>
    %cst_88 = arith.constant dense<0xFF800000> : vector<8xf32>
    %333 = vector.multi_reduction <maximumf>, %332, %cst_88 [1] : vector<8x16xf32> to vector<8xf32>
    %334 = vector.shape_cast %333 : vector<8xf32> to vector<8x1xf32>
    %335 = vector.broadcast %334 : vector<8x1xf32> to vector<8x16xf32>
    %336 = arith.subf %332, %335 : vector<8x16xf32>
    %337 = math.exp %336 : vector<8x16xf32>
    %cst_89 = arith.constant dense<0.000000e+00> : vector<8xf32>
    %338 = vector.multi_reduction <add>, %337, %cst_89 [1] : vector<8x16xf32> to vector<8xf32>
    %339 = vector.shape_cast %338 : vector<8xf32> to vector<8x1xf32>
    %340 = vector.broadcast %339 : vector<8x1xf32> to vector<8x16xf32>
    %341 = arith.divf %337, %340 : vector<8x16xf32>
    %342 = arith.truncf %341 : vector<8x16xf32> to vector<8x16xbf16>
    %343 = vector.extract_strided_slice %255 {offsets = [0, 24], sizes = [16, 8], strides = [1, 1]} : vector<16x32xf32> to vector<16x8xf32>
    %344 = arith.truncf %343 : vector<16x8xf32> to vector<16x8xbf16>
    %cst_90 = arith.constant dense<0.000000e+00> : vector<8x8xf32>
    %345 = tpu.matmul %342, %344, %cst_90 {dimension_numbers = #tpu.dot_dimension_numbers<[1], [0], [0], [1], [0, 0, 1, 1], [], []>} : vector<8x16xbf16>, vector<16x8xbf16>, vector<8x8xf32> -> vector<8x8xf32>
    %346 = tpu.concatenate %279, %301, %323, %345 in 1 : vector<8x8xf32>, vector<8x8xf32>, vector<8x8xf32>, vector<8x8xf32> -> vector<8x32xf32>
    %347 = vector.extract_strided_slice %248 {offsets = [8, 0], sizes = [8, 32], strides = [1, 1]} : vector<16x32xf32> to vector<8x32xf32>
    %348 = vector.extract_strided_slice %252 {offsets = [16, 0], sizes = [16, 32], strides = [1, 1]} : vector<32x64xf32> to vector<16x32xf32>
    %349 = vector.extract_strided_slice %252 {offsets = [16, 32], sizes = [16, 32], strides = [1, 1]} : vector<32x64xf32> to vector<16x32xf32>
    %350 = vector.extract_strided_slice %6 {offsets = [1, 8, 0], sizes = [1, 1, 16], strides = [1, 1, 1]} : vector<2x10x16xf32> to vector<1x1x16xf32>
    %351 = vector.shape_cast %350 : vector<1x1x16xf32> to vector<1x16xf32>
    %352 = vector.extract_strided_slice %347 {offsets = [0, 0], sizes = [8, 8], strides = [1, 1]} : vector<8x32xf32> to vector<8x8xf32>
    %353 = arith.truncf %352 : vector<8x8xf32> to vector<8x8xbf16>
    %354 = vector.extract_strided_slice %348 {offsets = [0, 0], sizes = [16, 8], strides = [1, 1]} : vector<16x32xf32> to vector<16x8xf32>
    %355 = arith.truncf %354 : vector<16x8xf32> to vector<16x8xbf16>
    "tpu.trace_start"() <{level = 10 : i32, message = "qd,kd->qk"}> : () -> ()
    %cst_91 = arith.constant dense<0.000000e+00> : vector<8x16xf32>
    %356 = tpu.matmul %353, %355, %cst_91 {dimension_numbers = #tpu.dot_dimension_numbers<[1], [1], [0], [0], [0, 0, 1, 0], [], []>} : vector<8x8xbf16>, vector<16x8xbf16>, vector<8x16xf32> -> vector<8x16xf32>
    "tpu.trace_stop"() : () -> ()
    %cst_92 = arith.constant 0.353553385 : f32
    %357 = vector.broadcast %cst_92 : f32 to vector<8x16xf32>
    %358 = arith.mulf %356, %357 : vector<8x16xf32>
    %359 = vector.broadcast %351 : vector<1x16xf32> to vector<8x16xf32>
    %360 = arith.addf %358, %359 : vector<8x16xf32>
    %cst_93 = arith.constant dense<0xFF800000> : vector<8xf32>
    %361 = vector.multi_reduction <maximumf>, %360, %cst_93 [1] : vector<8x16xf32> to vector<8xf32>
    %362 = vector.shape_cast %361 : vector<8xf32> to vector<8x1xf32>
    %363 = vector.broadcast %362 : vector<8x1xf32> to vector<8x16xf32>
    %364 = arith.subf %360, %363 : vector<8x16xf32>
    %365 = math.exp %364 : vector<8x16xf32>
    %cst_94 = arith.constant dense<0.000000e+00> : vector<8xf32>
    %366 = vector.multi_reduction <add>, %365, %cst_94 [1] : vector<8x16xf32> to vector<8xf32>
    %367 = vector.shape_cast %366 : vector<8xf32> to vector<8x1xf32>
    %368 = vector.broadcast %367 : vector<8x1xf32> to vector<8x16xf32>
    %369 = arith.divf %365, %368 : vector<8x16xf32>
    %370 = arith.truncf %369 : vector<8x16xf32> to vector<8x16xbf16>
    %371 = vector.extract_strided_slice %349 {offsets = [0, 0], sizes = [16, 8], strides = [1, 1]} : vector<16x32xf32> to vector<16x8xf32>
    %372 = arith.truncf %371 : vector<16x8xf32> to vector<16x8xbf16>
    %cst_95 = arith.constant dense<0.000000e+00> : vector<8x8xf32>
    %373 = tpu.matmul %370, %372, %cst_95 {dimension_numbers = #tpu.dot_dimension_numbers<[1], [0], [0], [1], [0, 0, 1, 1], [], []>} : vector<8x16xbf16>, vector<16x8xbf16>, vector<8x8xf32> -> vector<8x8xf32>
    %374 = vector.extract_strided_slice %347 {offsets = [0, 8], sizes = [8, 8], strides = [1, 1]} : vector<8x32xf32> to vector<8x8xf32>
    %375 = arith.truncf %374 : vector<8x8xf32> to vector<8x8xbf16>
    %376 = vector.extract_strided_slice %348 {offsets = [0, 8], sizes = [16, 8], strides = [1, 1]} : vector<16x32xf32> to vector<16x8xf32>
    %377 = arith.truncf %376 : vector<16x8xf32> to vector<16x8xbf16>
    "tpu.trace_start"() <{level = 10 : i32, message = "qd,kd->qk"}> : () -> ()
    %cst_96 = arith.constant dense<0.000000e+00> : vector<8x16xf32>
    %378 = tpu.matmul %375, %377, %cst_96 {dimension_numbers = #tpu.dot_dimension_numbers<[1], [1], [0], [0], [0, 0, 1, 0], [], []>} : vector<8x8xbf16>, vector<16x8xbf16>, vector<8x16xf32> -> vector<8x16xf32>
    "tpu.trace_stop"() : () -> ()
    %cst_97 = arith.constant 0.353553385 : f32
    %379 = vector.broadcast %cst_97 : f32 to vector<8x16xf32>
    %380 = arith.mulf %378, %379 : vector<8x16xf32>
    %381 = vector.broadcast %351 : vector<1x16xf32> to vector<8x16xf32>
    %382 = arith.addf %380, %381 : vector<8x16xf32>
    %cst_98 = arith.constant dense<0xFF800000> : vector<8xf32>
    %383 = vector.multi_reduction <maximumf>, %382, %cst_98 [1] : vector<8x16xf32> to vector<8xf32>
    %384 = vector.shape_cast %383 : vector<8xf32> to vector<8x1xf32>
    %385 = vector.broadcast %384 : vector<8x1xf32> to vector<8x16xf32>
    %386 = arith.subf %382, %385 : vector<8x16xf32>
    %387 = math.exp %386 : vector<8x16xf32>
    %cst_99 = arith.constant dense<0.000000e+00> : vector<8xf32>
    %388 = vector.multi_reduction <add>, %387, %cst_99 [1] : vector<8x16xf32> to vector<8xf32>
    %389 = vector.shape_cast %388 : vector<8xf32> to vector<8x1xf32>
    %390 = vector.broadcast %389 : vector<8x1xf32> to vector<8x16xf32>
    %391 = arith.divf %387, %390 : vector<8x16xf32>
    %392 = arith.truncf %391 : vector<8x16xf32> to vector<8x16xbf16>
    %393 = vector.extract_strided_slice %349 {offsets = [0, 8], sizes = [16, 8], strides = [1, 1]} : vector<16x32xf32> to vector<16x8xf32>
    %394 = arith.truncf %393 : vector<16x8xf32> to vector<16x8xbf16>
    %cst_100 = arith.constant dense<0.000000e+00> : vector<8x8xf32>
    %395 = tpu.matmul %392, %394, %cst_100 {dimension_numbers = #tpu.dot_dimension_numbers<[1], [0], [0], [1], [0, 0, 1, 1], [], []>} : vector<8x16xbf16>, vector<16x8xbf16>, vector<8x8xf32> -> vector<8x8xf32>
    %396 = vector.extract_strided_slice %347 {offsets = [0, 16], sizes = [8, 8], strides = [1, 1]} : vector<8x32xf32> to vector<8x8xf32>
    %397 = arith.truncf %396 : vector<8x8xf32> to vector<8x8xbf16>
    %398 = vector.extract_strided_slice %348 {offsets = [0, 16], sizes = [16, 8], strides = [1, 1]} : vector<16x32xf32> to vector<16x8xf32>
    %399 = arith.truncf %398 : vector<16x8xf32> to vector<16x8xbf16>
    "tpu.trace_start"() <{level = 10 : i32, message = "qd,kd->qk"}> : () -> ()
    %cst_101 = arith.constant dense<0.000000e+00> : vector<8x16xf32>
    %400 = tpu.matmul %397, %399, %cst_101 {dimension_numbers = #tpu.dot_dimension_numbers<[1], [1], [0], [0], [0, 0, 1, 0], [], []>} : vector<8x8xbf16>, vector<16x8xbf16>, vector<8x16xf32> -> vector<8x16xf32>
    "tpu.trace_stop"() : () -> ()
    %cst_102 = arith.constant 0.353553385 : f32
    %401 = vector.broadcast %cst_102 : f32 to vector<8x16xf32>
    %402 = arith.mulf %400, %401 : vector<8x16xf32>
    %403 = vector.broadcast %351 : vector<1x16xf32> to vector<8x16xf32>
    %404 = arith.addf %402, %403 : vector<8x16xf32>
    %cst_103 = arith.constant dense<0xFF800000> : vector<8xf32>
    %405 = vector.multi_reduction <maximumf>, %404, %cst_103 [1] : vector<8x16xf32> to vector<8xf32>
    %406 = vector.shape_cast %405 : vector<8xf32> to vector<8x1xf32>
    %407 = vector.broadcast %406 : vector<8x1xf32> to vector<8x16xf32>
    %408 = arith.subf %404, %407 : vector<8x16xf32>
    %409 = math.exp %408 : vector<8x16xf32>
    %cst_104 = arith.constant dense<0.000000e+00> : vector<8xf32>
    %410 = vector.multi_reduction <add>, %409, %cst_104 [1] : vector<8x16xf32> to vector<8xf32>
    %411 = vector.shape_cast %410 : vector<8xf32> to vector<8x1xf32>
    %412 = vector.broadcast %411 : vector<8x1xf32> to vector<8x16xf32>
    %413 = arith.divf %409, %412 : vector<8x16xf32>
    %414 = arith.truncf %413 : vector<8x16xf32> to vector<8x16xbf16>
    %415 = vector.extract_strided_slice %349 {offsets = [0, 16], sizes = [16, 8], strides = [1, 1]} : vector<16x32xf32> to vector<16x8xf32>
    %416 = arith.truncf %415 : vector<16x8xf32> to vector<16x8xbf16>
    %cst_105 = arith.constant dense<0.000000e+00> : vector<8x8xf32>
    %417 = tpu.matmul %414, %416, %cst_105 {dimension_numbers = #tpu.dot_dimension_numbers<[1], [0], [0], [1], [0, 0, 1, 1], [], []>} : vector<8x16xbf16>, vector<16x8xbf16>, vector<8x8xf32> -> vector<8x8xf32>
    %418 = vector.extract_strided_slice %347 {offsets = [0, 24], sizes = [8, 8], strides = [1, 1]} : vector<8x32xf32> to vector<8x8xf32>
    %419 = arith.truncf %418 : vector<8x8xf32> to vector<8x8xbf16>
    %420 = vector.extract_strided_slice %348 {offsets = [0, 24], sizes = [16, 8], strides = [1, 1]} : vector<16x32xf32> to vector<16x8xf32>
    %421 = arith.truncf %420 : vector<16x8xf32> to vector<16x8xbf16>
    "tpu.trace_start"() <{level = 10 : i32, message = "qd,kd->qk"}> : () -> ()
    %cst_106 = arith.constant dense<0.000000e+00> : vector<8x16xf32>
    %422 = tpu.matmul %419, %421, %cst_106 {dimension_numbers = #tpu.dot_dimension_numbers<[1], [1], [0], [0], [0, 0, 1, 0], [], []>} : vector<8x8xbf16>, vector<16x8xbf16>, vector<8x16xf32> -> vector<8x16xf32>
    "tpu.trace_stop"() : () -> ()
    %cst_107 = arith.constant 0.353553385 : f32
    %423 = vector.broadcast %cst_107 : f32 to vector<8x16xf32>
    %424 = arith.mulf %422, %423 : vector<8x16xf32>
    %425 = vector.broadcast %351 : vector<1x16xf32> to vector<8x16xf32>
    %426 = arith.addf %424, %425 : vector<8x16xf32>
    %cst_108 = arith.constant dense<0xFF800000> : vector<8xf32>
    %427 = vector.multi_reduction <maximumf>, %426, %cst_108 [1] : vector<8x16xf32> to vector<8xf32>
    %428 = vector.shape_cast %427 : vector<8xf32> to vector<8x1xf32>
    %429 = vector.broadcast %428 : vector<8x1xf32> to vector<8x16xf32>
    %430 = arith.subf %426, %429 : vector<8x16xf32>
    %431 = math.exp %430 : vector<8x16xf32>
    %cst_109 = arith.constant dense<0.000000e+00> : vector<8xf32>
    %432 = vector.multi_reduction <add>, %431, %cst_109 [1] : vector<8x16xf32> to vector<8xf32>
    %433 = vector.shape_cast %432 : vector<8xf32> to vector<8x1xf32>
    %434 = vector.broadcast %433 : vector<8x1xf32> to vector<8x16xf32>
    %435 = arith.divf %431, %434 : vector<8x16xf32>
    %436 = arith.truncf %435 : vector<8x16xf32> to vector<8x16xbf16>
    %437 = vector.extract_strided_slice %349 {offsets = [0, 24], sizes = [16, 8], strides = [1, 1]} : vector<16x32xf32> to vector<16x8xf32>
    %438 = arith.truncf %437 : vector<16x8xf32> to vector<16x8xbf16>
    %cst_110 = arith.constant dense<0.000000e+00> : vector<8x8xf32>
    %439 = tpu.matmul %436, %438, %cst_110 {dimension_numbers = #tpu.dot_dimension_numbers<[1], [0], [0], [1], [0, 0, 1, 1], [], []>} : vector<8x16xbf16>, vector<16x8xbf16>, vector<8x8xf32> -> vector<8x8xf32>
    %440 = tpu.concatenate %373, %395, %417, %439 in 1 : vector<8x8xf32>, vector<8x8xf32>, vector<8x8xf32>, vector<8x8xf32> -> vector<8x32xf32>
    %441 = tpu.concatenate %346, %440 in 0 : vector<8x32xf32>, vector<8x32xf32> -> vector<16x32xf32>
    %442 = arith.truncf %441 : vector<16x32xf32> to vector<16x32xbf16>
    %cst_111 = arith.constant dense<0.000000e+00> : vector<16x32xf32>
    %443 = tpu.matmul %442, %236, %cst_111 {dimension_numbers = #tpu.dot_dimension_numbers<[1], [0], [0], [1], [0, 0, 1, 1], [], []>} : vector<16x32xbf16>, vector<32x32xbf16>, vector<16x32xf32> -> vector<16x32xf32>
    %444 = vector.broadcast %241 : vector<1x32xf32> to vector<16x32xf32>
    %445 = arith.addf %443, %444 : vector<16x32xf32>
    %446 = arith.addf %234, %445 : vector<16x32xf32>
    %cst_112 = arith.constant dense<0.000000e+00> : vector<16xf32>
    %447 = vector.multi_reduction <add>, %446, %cst_112 [1] : vector<16x32xf32> to vector<16xf32>
    %448 = vector.shape_cast %447 : vector<16xf32> to vector<16x1xf32>
    %cst_113 = arith.constant 3.200000e+01 : f32
    %449 = vector.broadcast %cst_113 : f32 to vector<16x1xf32>
    %450 = arith.divf %448, %449 : vector<16x1xf32>
    %451 = vector.broadcast %450 : vector<16x1xf32> to vector<16x32xf32>
    %452 = arith.subf %446, %451 : vector<16x32xf32>
    %453 = arith.mulf %452, %452 : vector<16x32xf32>
    %cst_114 = arith.constant dense<0.000000e+00> : vector<16xf32>
    %454 = vector.multi_reduction <add>, %453, %cst_114 [1] : vector<16x32xf32> to vector<16xf32>
    %455 = vector.shape_cast %454 : vector<16xf32> to vector<16x1xf32>
    %cst_115 = arith.constant 3.200000e+01 : f32
    %456 = vector.broadcast %cst_115 : f32 to vector<16x1xf32>
    %457 = arith.divf %455, %456 : vector<16x1xf32>
    %458 = vector.broadcast %450 : vector<16x1xf32> to vector<16x32xf32>
    %459 = arith.subf %446, %458 : vector<16x32xf32>
    %cst_116 = arith.constant 9.99999974E-6 : f32
    %460 = vector.broadcast %cst_116 : f32 to vector<16x1xf32>
    %461 = arith.addf %457, %460 : vector<16x1xf32>
    %462 = math.rsqrt %461 : vector<16x1xf32>
    %463 = vector.broadcast %462 : vector<16x1xf32> to vector<16x32xf32>
    %464 = arith.mulf %459, %463 : vector<16x32xf32>
    %465 = vector.broadcast %243 : vector<1x32xf32> to vector<16x32xf32>
    %466 = arith.mulf %464, %465 : vector<16x32xf32>
    %467 = vector.broadcast %244 : vector<1x32xf32> to vector<16x32xf32>
    %468 = arith.addf %466, %467 : vector<16x32xf32>
    %469 = vector.broadcast %3 : vector<16x1xf32> to vector<16x32xf32>
    %470 = arith.mulf %468, %469 : vector<16x32xf32>
    %c160 = arith.constant 160 : index
    %c0_117 = arith.constant 0 : index
    %471 = vector.load %arg6[%c160, %c0_117] : memref<352x64xbf16, #tpu.memory_space<vmem>>, vector<32x32xbf16>
    %c160_118 = arith.constant 160 : index
    %c32_119 = arith.constant 32 : index
    %472 = vector.load %arg6[%c160_118, %c32_119] : memref<352x64xbf16, #tpu.memory_space<vmem>>, vector<32x32xbf16>
    %c192 = arith.constant 192 : index
    %c0_120 = arith.constant 0 : index
    %473 = vector.load %arg6[%c192, %c0_120] : memref<352x64xbf16, #tpu.memory_space<vmem>>, vector<32x64xbf16>
    %c224 = arith.constant 224 : index
    %c0_121 = arith.constant 0 : index
    %474 = vector.load %arg6[%c224, %c0_121] : memref<352x64xbf16, #tpu.memory_space<vmem>>, vector<3x64xbf16>
    %475 = arith.extf %474 : vector<3x64xbf16> to vector<3x64xf32>
    %476 = vector.extract_strided_slice %475 {offsets = [0, 0], sizes = [1, 32], strides = [1, 1]} : vector<3x64xf32> to vector<1x32xf32>
    %477 = vector.extract_strided_slice %475 {offsets = [0, 32], sizes = [1, 32], strides = [1, 1]} : vector<3x64xf32> to vector<1x32xf32>
    %478 = vector.extract_strided_slice %475 {offsets = [1, 0], sizes = [1, 64], strides = [1, 1]} : vector<3x64xf32> to vector<1x64xf32>
    %479 = vector.extract_strided_slice %475 {offsets = [2, 0], sizes = [1, 32], strides = [1, 1]} : vector<3x64xf32> to vector<1x32xf32>
    %480 = vector.extract_strided_slice %475 {offsets = [2, 32], sizes = [1, 32], strides = [1, 1]} : vector<3x64xf32> to vector<1x32xf32>
    %481 = arith.truncf %470 : vector<16x32xf32> to vector<16x32xbf16>
    %cst_122 = arith.constant dense<0.000000e+00> : vector<16x32xf32>
    %482 = tpu.matmul %481, %471, %cst_122 {dimension_numbers = #tpu.dot_dimension_numbers<[1], [0], [0], [1], [0, 0, 1, 1], [], []>} : vector<16x32xbf16>, vector<32x32xbf16>, vector<16x32xf32> -> vector<16x32xf32>
    %483 = vector.broadcast %476 : vector<1x32xf32> to vector<16x32xf32>
    %484 = arith.addf %482, %483 : vector<16x32xf32>
    %485 = arith.truncf %2 : vector<32x32xf32> to vector<32x32xbf16>
    %cst_123 = arith.constant dense<0.000000e+00> : vector<32x64xf32>
    %486 = tpu.matmul %485, %473, %cst_123 {dimension_numbers = #tpu.dot_dimension_numbers<[1], [0], [0], [1], [0, 0, 1, 1], [], []>} : vector<32x32xbf16>, vector<32x64xbf16>, vector<32x64xf32> -> vector<32x64xf32>
    %487 = vector.broadcast %478 : vector<1x64xf32> to vector<32x64xf32>
    %488 = arith.addf %486, %487 : vector<32x64xf32>
    %489 = vector.extract_strided_slice %484 {offsets = [0, 0], sizes = [8, 32], strides = [1, 1]} : vector<16x32xf32> to vector<8x32xf32>
    %490 = vector.extract_strided_slice %488 {offsets = [0, 0], sizes = [16, 32], strides = [1, 1]} : vector<32x64xf32> to vector<16x32xf32>
    %491 = vector.extract_strided_slice %488 {offsets = [0, 32], sizes = [16, 32], strides = [1, 1]} : vector<32x64xf32> to vector<16x32xf32>
    %492 = vector.extract_strided_slice %6 {offsets = [0, 9, 0], sizes = [1, 1, 16], strides = [1, 1, 1]} : vector<2x10x16xf32> to vector<1x1x16xf32>
    %493 = vector.shape_cast %492 : vector<1x1x16xf32> to vector<1x16xf32>
    %494 = vector.extract_strided_slice %489 {offsets = [0, 0], sizes = [8, 8], strides = [1, 1]} : vector<8x32xf32> to vector<8x8xf32>
    %495 = arith.truncf %494 : vector<8x8xf32> to vector<8x8xbf16>
    %496 = vector.extract_strided_slice %490 {offsets = [0, 0], sizes = [16, 8], strides = [1, 1]} : vector<16x32xf32> to vector<16x8xf32>
    %497 = arith.truncf %496 : vector<16x8xf32> to vector<16x8xbf16>
    "tpu.trace_start"() <{level = 10 : i32, message = "qd,kd->qk"}> : () -> ()
    %cst_124 = arith.constant dense<0.000000e+00> : vector<8x16xf32>
    %498 = tpu.matmul %495, %497, %cst_124 {dimension_numbers = #tpu.dot_dimension_numbers<[1], [1], [0], [0], [0, 0, 1, 0], [], []>} : vector<8x8xbf16>, vector<16x8xbf16>, vector<8x16xf32> -> vector<8x16xf32>
    "tpu.trace_stop"() : () -> ()
    %cst_125 = arith.constant 0.353553385 : f32
    %499 = vector.broadcast %cst_125 : f32 to vector<8x16xf32>
    %500 = arith.mulf %498, %499 : vector<8x16xf32>
    %501 = vector.broadcast %493 : vector<1x16xf32> to vector<8x16xf32>
    %502 = arith.addf %500, %501 : vector<8x16xf32>
    %cst_126 = arith.constant dense<0xFF800000> : vector<8xf32>
    %503 = vector.multi_reduction <maximumf>, %502, %cst_126 [1] : vector<8x16xf32> to vector<8xf32>
    %504 = vector.shape_cast %503 : vector<8xf32> to vector<8x1xf32>
    %505 = vector.broadcast %504 : vector<8x1xf32> to vector<8x16xf32>
    %506 = arith.subf %502, %505 : vector<8x16xf32>
    %507 = math.exp %506 : vector<8x16xf32>
    %cst_127 = arith.constant dense<0.000000e+00> : vector<8xf32>
    %508 = vector.multi_reduction <add>, %507, %cst_127 [1] : vector<8x16xf32> to vector<8xf32>
    %509 = vector.shape_cast %508 : vector<8xf32> to vector<8x1xf32>
    %510 = vector.broadcast %509 : vector<8x1xf32> to vector<8x16xf32>
    %511 = arith.divf %507, %510 : vector<8x16xf32>
    %512 = arith.truncf %511 : vector<8x16xf32> to vector<8x16xbf16>
    %513 = vector.extract_strided_slice %491 {offsets = [0, 0], sizes = [16, 8], strides = [1, 1]} : vector<16x32xf32> to vector<16x8xf32>
    %514 = arith.truncf %513 : vector<16x8xf32> to vector<16x8xbf16>
    %cst_128 = arith.constant dense<0.000000e+00> : vector<8x8xf32>
    %515 = tpu.matmul %512, %514, %cst_128 {dimension_numbers = #tpu.dot_dimension_numbers<[1], [0], [0], [1], [0, 0, 1, 1], [], []>} : vector<8x16xbf16>, vector<16x8xbf16>, vector<8x8xf32> -> vector<8x8xf32>
    %516 = vector.extract_strided_slice %489 {offsets = [0, 8], sizes = [8, 8], strides = [1, 1]} : vector<8x32xf32> to vector<8x8xf32>
    %517 = arith.truncf %516 : vector<8x8xf32> to vector<8x8xbf16>
    %518 = vector.extract_strided_slice %490 {offsets = [0, 8], sizes = [16, 8], strides = [1, 1]} : vector<16x32xf32> to vector<16x8xf32>
    %519 = arith.truncf %518 : vector<16x8xf32> to vector<16x8xbf16>
    "tpu.trace_start"() <{level = 10 : i32, message = "qd,kd->qk"}> : () -> ()
    %cst_129 = arith.constant dense<0.000000e+00> : vector<8x16xf32>
    %520 = tpu.matmul %517, %519, %cst_129 {dimension_numbers = #tpu.dot_dimension_numbers<[1], [1], [0], [0], [0, 0, 1, 0], [], []>} : vector<8x8xbf16>, vector<16x8xbf16>, vector<8x16xf32> -> vector<8x16xf32>
    "tpu.trace_stop"() : () -> ()
    %cst_130 = arith.constant 0.353553385 : f32
    %521 = vector.broadcast %cst_130 : f32 to vector<8x16xf32>
    %522 = arith.mulf %520, %521 : vector<8x16xf32>
    %523 = vector.broadcast %493 : vector<1x16xf32> to vector<8x16xf32>
    %524 = arith.addf %522, %523 : vector<8x16xf32>
    %cst_131 = arith.constant dense<0xFF800000> : vector<8xf32>
    %525 = vector.multi_reduction <maximumf>, %524, %cst_131 [1] : vector<8x16xf32> to vector<8xf32>
    %526 = vector.shape_cast %525 : vector<8xf32> to vector<8x1xf32>
    %527 = vector.broadcast %526 : vector<8x1xf32> to vector<8x16xf32>
    %528 = arith.subf %524, %527 : vector<8x16xf32>
    %529 = math.exp %528 : vector<8x16xf32>
    %cst_132 = arith.constant dense<0.000000e+00> : vector<8xf32>
    %530 = vector.multi_reduction <add>, %529, %cst_132 [1] : vector<8x16xf32> to vector<8xf32>
    %531 = vector.shape_cast %530 : vector<8xf32> to vector<8x1xf32>
    %532 = vector.broadcast %531 : vector<8x1xf32> to vector<8x16xf32>
    %533 = arith.divf %529, %532 : vector<8x16xf32>
    %534 = arith.truncf %533 : vector<8x16xf32> to vector<8x16xbf16>
    %535 = vector.extract_strided_slice %491 {offsets = [0, 8], sizes = [16, 8], strides = [1, 1]} : vector<16x32xf32> to vector<16x8xf32>
    %536 = arith.truncf %535 : vector<16x8xf32> to vector<16x8xbf16>
    %cst_133 = arith.constant dense<0.000000e+00> : vector<8x8xf32>
    %537 = tpu.matmul %534, %536, %cst_133 {dimension_numbers = #tpu.dot_dimension_numbers<[1], [0], [0], [1], [0, 0, 1, 1], [], []>} : vector<8x16xbf16>, vector<16x8xbf16>, vector<8x8xf32> -> vector<8x8xf32>
    %538 = vector.extract_strided_slice %489 {offsets = [0, 16], sizes = [8, 8], strides = [1, 1]} : vector<8x32xf32> to vector<8x8xf32>
    %539 = arith.truncf %538 : vector<8x8xf32> to vector<8x8xbf16>
    %540 = vector.extract_strided_slice %490 {offsets = [0, 16], sizes = [16, 8], strides = [1, 1]} : vector<16x32xf32> to vector<16x8xf32>
    %541 = arith.truncf %540 : vector<16x8xf32> to vector<16x8xbf16>
    "tpu.trace_start"() <{level = 10 : i32, message = "qd,kd->qk"}> : () -> ()
    %cst_134 = arith.constant dense<0.000000e+00> : vector<8x16xf32>
    %542 = tpu.matmul %539, %541, %cst_134 {dimension_numbers = #tpu.dot_dimension_numbers<[1], [1], [0], [0], [0, 0, 1, 0], [], []>} : vector<8x8xbf16>, vector<16x8xbf16>, vector<8x16xf32> -> vector<8x16xf32>
    "tpu.trace_stop"() : () -> ()
    %cst_135 = arith.constant 0.353553385 : f32
    %543 = vector.broadcast %cst_135 : f32 to vector<8x16xf32>
    %544 = arith.mulf %542, %543 : vector<8x16xf32>
    %545 = vector.broadcast %493 : vector<1x16xf32> to vector<8x16xf32>
    %546 = arith.addf %544, %545 : vector<8x16xf32>
    %cst_136 = arith.constant dense<0xFF800000> : vector<8xf32>
    %547 = vector.multi_reduction <maximumf>, %546, %cst_136 [1] : vector<8x16xf32> to vector<8xf32>
    %548 = vector.shape_cast %547 : vector<8xf32> to vector<8x1xf32>
    %549 = vector.broadcast %548 : vector<8x1xf32> to vector<8x16xf32>
    %550 = arith.subf %546, %549 : vector<8x16xf32>
    %551 = math.exp %550 : vector<8x16xf32>
    %cst_137 = arith.constant dense<0.000000e+00> : vector<8xf32>
    %552 = vector.multi_reduction <add>, %551, %cst_137 [1] : vector<8x16xf32> to vector<8xf32>
    %553 = vector.shape_cast %552 : vector<8xf32> to vector<8x1xf32>
    %554 = vector.broadcast %553 : vector<8x1xf32> to vector<8x16xf32>
    %555 = arith.divf %551, %554 : vector<8x16xf32>
    %556 = arith.truncf %555 : vector<8x16xf32> to vector<8x16xbf16>
    %557 = vector.extract_strided_slice %491 {offsets = [0, 16], sizes = [16, 8], strides = [1, 1]} : vector<16x32xf32> to vector<16x8xf32>
    %558 = arith.truncf %557 : vector<16x8xf32> to vector<16x8xbf16>
    %cst_138 = arith.constant dense<0.000000e+00> : vector<8x8xf32>
    %559 = tpu.matmul %556, %558, %cst_138 {dimension_numbers = #tpu.dot_dimension_numbers<[1], [0], [0], [1], [0, 0, 1, 1], [], []>} : vector<8x16xbf16>, vector<16x8xbf16>, vector<8x8xf32> -> vector<8x8xf32>
    %560 = vector.extract_strided_slice %489 {offsets = [0, 24], sizes = [8, 8], strides = [1, 1]} : vector<8x32xf32> to vector<8x8xf32>
    %561 = arith.truncf %560 : vector<8x8xf32> to vector<8x8xbf16>
    %562 = vector.extract_strided_slice %490 {offsets = [0, 24], sizes = [16, 8], strides = [1, 1]} : vector<16x32xf32> to vector<16x8xf32>
    %563 = arith.truncf %562 : vector<16x8xf32> to vector<16x8xbf16>
    "tpu.trace_start"() <{level = 10 : i32, message = "qd,kd->qk"}> : () -> ()
    %cst_139 = arith.constant dense<0.000000e+00> : vector<8x16xf32>
    %564 = tpu.matmul %561, %563, %cst_139 {dimension_numbers = #tpu.dot_dimension_numbers<[1], [1], [0], [0], [0, 0, 1, 0], [], []>} : vector<8x8xbf16>, vector<16x8xbf16>, vector<8x16xf32> -> vector<8x16xf32>
    "tpu.trace_stop"() : () -> ()
    %cst_140 = arith.constant 0.353553385 : f32
    %565 = vector.broadcast %cst_140 : f32 to vector<8x16xf32>
    %566 = arith.mulf %564, %565 : vector<8x16xf32>
    %567 = vector.broadcast %493 : vector<1x16xf32> to vector<8x16xf32>
    %568 = arith.addf %566, %567 : vector<8x16xf32>
    %cst_141 = arith.constant dense<0xFF800000> : vector<8xf32>
    %569 = vector.multi_reduction <maximumf>, %568, %cst_141 [1] : vector<8x16xf32> to vector<8xf32>
    %570 = vector.shape_cast %569 : vector<8xf32> to vector<8x1xf32>
    %571 = vector.broadcast %570 : vector<8x1xf32> to vector<8x16xf32>
    %572 = arith.subf %568, %571 : vector<8x16xf32>
    %573 = math.exp %572 : vector<8x16xf32>
    %cst_142 = arith.constant dense<0.000000e+00> : vector<8xf32>
    %574 = vector.multi_reduction <add>, %573, %cst_142 [1] : vector<8x16xf32> to vector<8xf32>
    %575 = vector.shape_cast %574 : vector<8xf32> to vector<8x1xf32>
    %576 = vector.broadcast %575 : vector<8x1xf32> to vector<8x16xf32>
    %577 = arith.divf %573, %576 : vector<8x16xf32>
    %578 = arith.truncf %577 : vector<8x16xf32> to vector<8x16xbf16>
    %579 = vector.extract_strided_slice %491 {offsets = [0, 24], sizes = [16, 8], strides = [1, 1]} : vector<16x32xf32> to vector<16x8xf32>
    %580 = arith.truncf %579 : vector<16x8xf32> to vector<16x8xbf16>
    %cst_143 = arith.constant dense<0.000000e+00> : vector<8x8xf32>
    %581 = tpu.matmul %578, %580, %cst_143 {dimension_numbers = #tpu.dot_dimension_numbers<[1], [0], [0], [1], [0, 0, 1, 1], [], []>} : vector<8x16xbf16>, vector<16x8xbf16>, vector<8x8xf32> -> vector<8x8xf32>
    %582 = tpu.concatenate %515, %537, %559, %581 in 1 : vector<8x8xf32>, vector<8x8xf32>, vector<8x8xf32>, vector<8x8xf32> -> vector<8x32xf32>
    %583 = vector.extract_strided_slice %484 {offsets = [8, 0], sizes = [8, 32], strides = [1, 1]} : vector<16x32xf32> to vector<8x32xf32>
    %584 = vector.extract_strided_slice %488 {offsets = [16, 0], sizes = [16, 32], strides = [1, 1]} : vector<32x64xf32> to vector<16x32xf32>
    %585 = vector.extract_strided_slice %488 {offsets = [16, 32], sizes = [16, 32], strides = [1, 1]} : vector<32x64xf32> to vector<16x32xf32>
    %586 = vector.extract_strided_slice %6 {offsets = [1, 9, 0], sizes = [1, 1, 16], strides = [1, 1, 1]} : vector<2x10x16xf32> to vector<1x1x16xf32>
    %587 = vector.shape_cast %586 : vector<1x1x16xf32> to vector<1x16xf32>
    %588 = vector.extract_strided_slice %583 {offsets = [0, 0], sizes = [8, 8], strides = [1, 1]} : vector<8x32xf32> to vector<8x8xf32>
    %589 = arith.truncf %588 : vector<8x8xf32> to vector<8x8xbf16>
    %590 = vector.extract_strided_slice %584 {offsets = [0, 0], sizes = [16, 8], strides = [1, 1]} : vector<16x32xf32> to vector<16x8xf32>
    %591 = arith.truncf %590 : vector<16x8xf32> to vector<16x8xbf16>
    "tpu.trace_start"() <{level = 10 : i32, message = "qd,kd->qk"}> : () -> ()
    %cst_144 = arith.constant dense<0.000000e+00> : vector<8x16xf32>
    %592 = tpu.matmul %589, %591, %cst_144 {dimension_numbers = #tpu.dot_dimension_numbers<[1], [1], [0], [0], [0, 0, 1, 0], [], []>} : vector<8x8xbf16>, vector<16x8xbf16>, vector<8x16xf32> -> vector<8x16xf32>
    "tpu.trace_stop"() : () -> ()
    %cst_145 = arith.constant 0.353553385 : f32
    %593 = vector.broadcast %cst_145 : f32 to vector<8x16xf32>
    %594 = arith.mulf %592, %593 : vector<8x16xf32>
    %595 = vector.broadcast %587 : vector<1x16xf32> to vector<8x16xf32>
    %596 = arith.addf %594, %595 : vector<8x16xf32>
    %cst_146 = arith.constant dense<0xFF800000> : vector<8xf32>
    %597 = vector.multi_reduction <maximumf>, %596, %cst_146 [1] : vector<8x16xf32> to vector<8xf32>
    %598 = vector.shape_cast %597 : vector<8xf32> to vector<8x1xf32>
    %599 = vector.broadcast %598 : vector<8x1xf32> to vector<8x16xf32>
    %600 = arith.subf %596, %599 : vector<8x16xf32>
    %601 = math.exp %600 : vector<8x16xf32>
    %cst_147 = arith.constant dense<0.000000e+00> : vector<8xf32>
    %602 = vector.multi_reduction <add>, %601, %cst_147 [1] : vector<8x16xf32> to vector<8xf32>
    %603 = vector.shape_cast %602 : vector<8xf32> to vector<8x1xf32>
    %604 = vector.broadcast %603 : vector<8x1xf32> to vector<8x16xf32>
    %605 = arith.divf %601, %604 : vector<8x16xf32>
    %606 = arith.truncf %605 : vector<8x16xf32> to vector<8x16xbf16>
    %607 = vector.extract_strided_slice %585 {offsets = [0, 0], sizes = [16, 8], strides = [1, 1]} : vector<16x32xf32> to vector<16x8xf32>
    %608 = arith.truncf %607 : vector<16x8xf32> to vector<16x8xbf16>
    %cst_148 = arith.constant dense<0.000000e+00> : vector<8x8xf32>
    %609 = tpu.matmul %606, %608, %cst_148 {dimension_numbers = #tpu.dot_dimension_numbers<[1], [0], [0], [1], [0, 0, 1, 1], [], []>} : vector<8x16xbf16>, vector<16x8xbf16>, vector<8x8xf32> -> vector<8x8xf32>
    %610 = vector.extract_strided_slice %583 {offsets = [0, 8], sizes = [8, 8], strides = [1, 1]} : vector<8x32xf32> to vector<8x8xf32>
    %611 = arith.truncf %610 : vector<8x8xf32> to vector<8x8xbf16>
    %612 = vector.extract_strided_slice %584 {offsets = [0, 8], sizes = [16, 8], strides = [1, 1]} : vector<16x32xf32> to vector<16x8xf32>
    %613 = arith.truncf %612 : vector<16x8xf32> to vector<16x8xbf16>
    "tpu.trace_start"() <{level = 10 : i32, message = "qd,kd->qk"}> : () -> ()
    %cst_149 = arith.constant dense<0.000000e+00> : vector<8x16xf32>
    %614 = tpu.matmul %611, %613, %cst_149 {dimension_numbers = #tpu.dot_dimension_numbers<[1], [1], [0], [0], [0, 0, 1, 0], [], []>} : vector<8x8xbf16>, vector<16x8xbf16>, vector<8x16xf32> -> vector<8x16xf32>
    "tpu.trace_stop"() : () -> ()
    %cst_150 = arith.constant 0.353553385 : f32
    %615 = vector.broadcast %cst_150 : f32 to vector<8x16xf32>
    %616 = arith.mulf %614, %615 : vector<8x16xf32>
    %617 = vector.broadcast %587 : vector<1x16xf32> to vector<8x16xf32>
    %618 = arith.addf %616, %617 : vector<8x16xf32>
    %cst_151 = arith.constant dense<0xFF800000> : vector<8xf32>
    %619 = vector.multi_reduction <maximumf>, %618, %cst_151 [1] : vector<8x16xf32> to vector<8xf32>
    %620 = vector.shape_cast %619 : vector<8xf32> to vector<8x1xf32>
    %621 = vector.broadcast %620 : vector<8x1xf32> to vector<8x16xf32>
    %622 = arith.subf %618, %621 : vector<8x16xf32>
    %623 = math.exp %622 : vector<8x16xf32>
    %cst_152 = arith.constant dense<0.000000e+00> : vector<8xf32>
    %624 = vector.multi_reduction <add>, %623, %cst_152 [1] : vector<8x16xf32> to vector<8xf32>
    %625 = vector.shape_cast %624 : vector<8xf32> to vector<8x1xf32>
    %626 = vector.broadcast %625 : vector<8x1xf32> to vector<8x16xf32>
    %627 = arith.divf %623, %626 : vector<8x16xf32>
    %628 = arith.truncf %627 : vector<8x16xf32> to vector<8x16xbf16>
    %629 = vector.extract_strided_slice %585 {offsets = [0, 8], sizes = [16, 8], strides = [1, 1]} : vector<16x32xf32> to vector<16x8xf32>
    %630 = arith.truncf %629 : vector<16x8xf32> to vector<16x8xbf16>
    %cst_153 = arith.constant dense<0.000000e+00> : vector<8x8xf32>
    %631 = tpu.matmul %628, %630, %cst_153 {dimension_numbers = #tpu.dot_dimension_numbers<[1], [0], [0], [1], [0, 0, 1, 1], [], []>} : vector<8x16xbf16>, vector<16x8xbf16>, vector<8x8xf32> -> vector<8x8xf32>
    %632 = vector.extract_strided_slice %583 {offsets = [0, 16], sizes = [8, 8], strides = [1, 1]} : vector<8x32xf32> to vector<8x8xf32>
    %633 = arith.truncf %632 : vector<8x8xf32> to vector<8x8xbf16>
    %634 = vector.extract_strided_slice %584 {offsets = [0, 16], sizes = [16, 8], strides = [1, 1]} : vector<16x32xf32> to vector<16x8xf32>
    %635 = arith.truncf %634 : vector<16x8xf32> to vector<16x8xbf16>
    "tpu.trace_start"() <{level = 10 : i32, message = "qd,kd->qk"}> : () -> ()
    %cst_154 = arith.constant dense<0.000000e+00> : vector<8x16xf32>
    %636 = tpu.matmul %633, %635, %cst_154 {dimension_numbers = #tpu.dot_dimension_numbers<[1], [1], [0], [0], [0, 0, 1, 0], [], []>} : vector<8x8xbf16>, vector<16x8xbf16>, vector<8x16xf32> -> vector<8x16xf32>
    "tpu.trace_stop"() : () -> ()
    %cst_155 = arith.constant 0.353553385 : f32
    %637 = vector.broadcast %cst_155 : f32 to vector<8x16xf32>
    %638 = arith.mulf %636, %637 : vector<8x16xf32>
    %639 = vector.broadcast %587 : vector<1x16xf32> to vector<8x16xf32>
    %640 = arith.addf %638, %639 : vector<8x16xf32>
    %cst_156 = arith.constant dense<0xFF800000> : vector<8xf32>
    %641 = vector.multi_reduction <maximumf>, %640, %cst_156 [1] : vector<8x16xf32> to vector<8xf32>
    %642 = vector.shape_cast %641 : vector<8xf32> to vector<8x1xf32>
    %643 = vector.broadcast %642 : vector<8x1xf32> to vector<8x16xf32>
    %644 = arith.subf %640, %643 : vector<8x16xf32>
    %645 = math.exp %644 : vector<8x16xf32>
    %cst_157 = arith.constant dense<0.000000e+00> : vector<8xf32>
    %646 = vector.multi_reduction <add>, %645, %cst_157 [1] : vector<8x16xf32> to vector<8xf32>
    %647 = vector.shape_cast %646 : vector<8xf32> to vector<8x1xf32>
    %648 = vector.broadcast %647 : vector<8x1xf32> to vector<8x16xf32>
    %649 = arith.divf %645, %648 : vector<8x16xf32>
    %650 = arith.truncf %649 : vector<8x16xf32> to vector<8x16xbf16>
    %651 = vector.extract_strided_slice %585 {offsets = [0, 16], sizes = [16, 8], strides = [1, 1]} : vector<16x32xf32> to vector<16x8xf32>
    %652 = arith.truncf %651 : vector<16x8xf32> to vector<16x8xbf16>
    %cst_158 = arith.constant dense<0.000000e+00> : vector<8x8xf32>
    %653 = tpu.matmul %650, %652, %cst_158 {dimension_numbers = #tpu.dot_dimension_numbers<[1], [0], [0], [1], [0, 0, 1, 1], [], []>} : vector<8x16xbf16>, vector<16x8xbf16>, vector<8x8xf32> -> vector<8x8xf32>
    %654 = vector.extract_strided_slice %583 {offsets = [0, 24], sizes = [8, 8], strides = [1, 1]} : vector<8x32xf32> to vector<8x8xf32>
    %655 = arith.truncf %654 : vector<8x8xf32> to vector<8x8xbf16>
    %656 = vector.extract_strided_slice %584 {offsets = [0, 24], sizes = [16, 8], strides = [1, 1]} : vector<16x32xf32> to vector<16x8xf32>
    %657 = arith.truncf %656 : vector<16x8xf32> to vector<16x8xbf16>
    "tpu.trace_start"() <{level = 10 : i32, message = "qd,kd->qk"}> : () -> ()
    %cst_159 = arith.constant dense<0.000000e+00> : vector<8x16xf32>
    %658 = tpu.matmul %655, %657, %cst_159 {dimension_numbers = #tpu.dot_dimension_numbers<[1], [1], [0], [0], [0, 0, 1, 0], [], []>} : vector<8x8xbf16>, vector<16x8xbf16>, vector<8x16xf32> -> vector<8x16xf32>
    "tpu.trace_stop"() : () -> ()
    %cst_160 = arith.constant 0.353553385 : f32
    %659 = vector.broadcast %cst_160 : f32 to vector<8x16xf32>
    %660 = arith.mulf %658, %659 : vector<8x16xf32>
    %661 = vector.broadcast %587 : vector<1x16xf32> to vector<8x16xf32>
    %662 = arith.addf %660, %661 : vector<8x16xf32>
    %cst_161 = arith.constant dense<0xFF800000> : vector<8xf32>
    %663 = vector.multi_reduction <maximumf>, %662, %cst_161 [1] : vector<8x16xf32> to vector<8xf32>
    %664 = vector.shape_cast %663 : vector<8xf32> to vector<8x1xf32>
    %665 = vector.broadcast %664 : vector<8x1xf32> to vector<8x16xf32>
    %666 = arith.subf %662, %665 : vector<8x16xf32>
    %667 = math.exp %666 : vector<8x16xf32>
    %cst_162 = arith.constant dense<0.000000e+00> : vector<8xf32>
    %668 = vector.multi_reduction <add>, %667, %cst_162 [1] : vector<8x16xf32> to vector<8xf32>
    %669 = vector.shape_cast %668 : vector<8xf32> to vector<8x1xf32>
    %670 = vector.broadcast %669 : vector<8x1xf32> to vector<8x16xf32>
    %671 = arith.divf %667, %670 : vector<8x16xf32>
    %672 = arith.truncf %671 : vector<8x16xf32> to vector<8x16xbf16>
    %673 = vector.extract_strided_slice %585 {offsets = [0, 24], sizes = [16, 8], strides = [1, 1]} : vector<16x32xf32> to vector<16x8xf32>
    %674 = arith.truncf %673 : vector<16x8xf32> to vector<16x8xbf16>
    %cst_163 = arith.constant dense<0.000000e+00> : vector<8x8xf32>
    %675 = tpu.matmul %672, %674, %cst_163 {dimension_numbers = #tpu.dot_dimension_numbers<[1], [0], [0], [1], [0, 0, 1, 1], [], []>} : vector<8x16xbf16>, vector<16x8xbf16>, vector<8x8xf32> -> vector<8x8xf32>
    %676 = tpu.concatenate %609, %631, %653, %675 in 1 : vector<8x8xf32>, vector<8x8xf32>, vector<8x8xf32>, vector<8x8xf32> -> vector<8x32xf32>
    %677 = tpu.concatenate %582, %676 in 0 : vector<8x32xf32>, vector<8x32xf32> -> vector<16x32xf32>
    %678 = arith.truncf %677 : vector<16x32xf32> to vector<16x32xbf16>
    %cst_164 = arith.constant dense<0.000000e+00> : vector<16x32xf32>
    %679 = tpu.matmul %678, %472, %cst_164 {dimension_numbers = #tpu.dot_dimension_numbers<[1], [0], [0], [1], [0, 0, 1, 1], [], []>} : vector<16x32xbf16>, vector<32x32xbf16>, vector<16x32xf32> -> vector<16x32xf32>
    %680 = vector.broadcast %477 : vector<1x32xf32> to vector<16x32xf32>
    %681 = arith.addf %679, %680 : vector<16x32xf32>
    %682 = arith.addf %470, %681 : vector<16x32xf32>
    %cst_165 = arith.constant dense<0.000000e+00> : vector<16xf32>
    %683 = vector.multi_reduction <add>, %682, %cst_165 [1] : vector<16x32xf32> to vector<16xf32>
    %684 = vector.shape_cast %683 : vector<16xf32> to vector<16x1xf32>
    %cst_166 = arith.constant 3.200000e+01 : f32
    %685 = vector.broadcast %cst_166 : f32 to vector<16x1xf32>
    %686 = arith.divf %684, %685 : vector<16x1xf32>
    %687 = vector.broadcast %686 : vector<16x1xf32> to vector<16x32xf32>
    %688 = arith.subf %682, %687 : vector<16x32xf32>
    %689 = arith.mulf %688, %688 : vector<16x32xf32>
    %cst_167 = arith.constant dense<0.000000e+00> : vector<16xf32>
    %690 = vector.multi_reduction <add>, %689, %cst_167 [1] : vector<16x32xf32> to vector<16xf32>
    %691 = vector.shape_cast %690 : vector<16xf32> to vector<16x1xf32>
    %cst_168 = arith.constant 3.200000e+01 : f32
    %692 = vector.broadcast %cst_168 : f32 to vector<16x1xf32>
    %693 = arith.divf %691, %692 : vector<16x1xf32>
    %694 = vector.broadcast %686 : vector<16x1xf32> to vector<16x32xf32>
    %695 = arith.subf %682, %694 : vector<16x32xf32>
    %cst_169 = arith.constant 9.99999974E-6 : f32
    %696 = vector.broadcast %cst_169 : f32 to vector<16x1xf32>
    %697 = arith.addf %693, %696 : vector<16x1xf32>
    %698 = math.rsqrt %697 : vector<16x1xf32>
    %699 = vector.broadcast %698 : vector<16x1xf32> to vector<16x32xf32>
    %700 = arith.mulf %695, %699 : vector<16x32xf32>
    %701 = vector.broadcast %479 : vector<1x32xf32> to vector<16x32xf32>
    %702 = arith.mulf %700, %701 : vector<16x32xf32>
    %703 = vector.broadcast %480 : vector<1x32xf32> to vector<16x32xf32>
    %704 = arith.addf %702, %703 : vector<16x32xf32>
    %705 = vector.broadcast %3 : vector<16x1xf32> to vector<16x32xf32>
    %706 = arith.mulf %704, %705 : vector<16x32xf32>
    %c240 = arith.constant 240 : index
    %c0_170 = arith.constant 0 : index
    %707 = vector.load %arg6[%c240, %c0_170] : memref<352x64xbf16, #tpu.memory_space<vmem>>, vector<32x64xbf16>
    %c272 = arith.constant 272 : index
    %c0_171 = arith.constant 0 : index
    %708 = vector.load %arg6[%c272, %c0_171] : memref<352x64xbf16, #tpu.memory_space<vmem>>, vector<64x32xbf16>
    %c336 = arith.constant 336 : index
    %c0_172 = arith.constant 0 : index
    %709 = vector.load %arg6[%c336, %c0_172] : memref<352x64xbf16, #tpu.memory_space<vmem>>, vector<3x64xbf16>
    %710 = arith.extf %709 : vector<3x64xbf16> to vector<3x64xf32>
    %711 = vector.extract_strided_slice %710 {offsets = [0, 0], sizes = [1, 64], strides = [1, 1]} : vector<3x64xf32> to vector<1x64xf32>
    %712 = vector.extract_strided_slice %710 {offsets = [1, 0], sizes = [1, 32], strides = [1, 1]} : vector<3x64xf32> to vector<1x32xf32>
    %713 = vector.extract_strided_slice %710 {offsets = [1, 32], sizes = [1, 32], strides = [1, 1]} : vector<3x64xf32> to vector<1x32xf32>
    %714 = vector.extract_strided_slice %710 {offsets = [2, 0], sizes = [1, 32], strides = [1, 1]} : vector<3x64xf32> to vector<1x32xf32>
    %715 = arith.truncf %706 : vector<16x32xf32> to vector<16x32xbf16>
    %cst_173 = arith.constant dense<0.000000e+00> : vector<16x64xf32>
    %716 = tpu.matmul %715, %707, %cst_173 {dimension_numbers = #tpu.dot_dimension_numbers<[1], [0], [0], [1], [0, 0, 1, 1], [], []>} : vector<16x32xbf16>, vector<32x64xbf16>, vector<16x64xf32> -> vector<16x64xf32>
    %717 = vector.broadcast %711 : vector<1x64xf32> to vector<16x64xf32>
    %718 = arith.addf %716, %717 : vector<16x64xf32>
    %cst_174 = arith.constant 0.000000e+00 : f32
    %719 = vector.broadcast %cst_174 : f32 to vector<16x64xf32>
    %720 = arith.maximumf %718, %719 : vector<16x64xf32>
    %721 = arith.truncf %720 : vector<16x64xf32> to vector<16x64xbf16>
    %cst_175 = arith.constant dense<0.000000e+00> : vector<16x32xf32>
    %722 = tpu.matmul %721, %708, %cst_175 {dimension_numbers = #tpu.dot_dimension_numbers<[1], [0], [0], [1], [0, 0, 1, 1], [], []>} : vector<16x64xbf16>, vector<64x32xbf16>, vector<16x32xf32> -> vector<16x32xf32>
    %723 = vector.broadcast %712 : vector<1x32xf32> to vector<16x32xf32>
    %724 = arith.addf %722, %723 : vector<16x32xf32>
    %725 = arith.addf %706, %724 : vector<16x32xf32>
    %cst_176 = arith.constant dense<0.000000e+00> : vector<16xf32>
    %726 = vector.multi_reduction <add>, %725, %cst_176 [1] : vector<16x32xf32> to vector<16xf32>
    %727 = vector.shape_cast %726 : vector<16xf32> to vector<16x1xf32>
    %cst_177 = arith.constant 3.200000e+01 : f32
    %728 = vector.broadcast %cst_177 : f32 to vector<16x1xf32>
    %729 = arith.divf %727, %728 : vector<16x1xf32>
    %730 = vector.broadcast %729 : vector<16x1xf32> to vector<16x32xf32>
    %731 = arith.subf %725, %730 : vector<16x32xf32>
    %732 = arith.mulf %731, %731 : vector<16x32xf32>
    %cst_178 = arith.constant dense<0.000000e+00> : vector<16xf32>
    %733 = vector.multi_reduction <add>, %732, %cst_178 [1] : vector<16x32xf32> to vector<16xf32>
    %734 = vector.shape_cast %733 : vector<16xf32> to vector<16x1xf32>
    %cst_179 = arith.constant 3.200000e+01 : f32
    %735 = vector.broadcast %cst_179 : f32 to vector<16x1xf32>
    %736 = arith.divf %734, %735 : vector<16x1xf32>
    %737 = vector.broadcast %729 : vector<16x1xf32> to vector<16x32xf32>
    %738 = arith.subf %725, %737 : vector<16x32xf32>
    %cst_180 = arith.constant 9.99999974E-6 : f32
    %739 = vector.broadcast %cst_180 : f32 to vector<16x1xf32>
    %740 = arith.addf %736, %739 : vector<16x1xf32>
    %741 = math.rsqrt %740 : vector<16x1xf32>
    %742 = vector.broadcast %741 : vector<16x1xf32> to vector<16x32xf32>
    %743 = arith.mulf %738, %742 : vector<16x32xf32>
    %744 = vector.broadcast %713 : vector<1x32xf32> to vector<16x32xf32>
    %745 = arith.mulf %743, %744 : vector<16x32xf32>
    %746 = vector.broadcast %714 : vector<1x32xf32> to vector<16x32xf32>
    %747 = arith.addf %745, %746 : vector<16x32xf32>
    %748 = vector.broadcast %3 : vector<16x1xf32> to vector<16x32xf32>
    %749 = arith.mulf %747, %748 : vector<16x32xf32>
    %c0_181 = arith.constant 0 : index
    %c0_182 = arith.constant 0 : index
    %750 = vector.load %arg7[%c0_181, %c0_182] : memref<16x32xf32, #tpu.memory_space<vmem>>, vector<16x32xf32>
    tpu.vector_store %arg7[%c0_181, %c0_182], %749 {strides = array<i32>} : memref<16x32xf32, #tpu.memory_space<vmem>>, vector<16x32xf32>,
    return
  }
  func.func @transform_0(%arg0: i32) -> (i32, i32) {
    %c0_i32 = arith.constant 0 : i32
    %c0_i32_0 = arith.constant 0 : i32
    return %arg0, %c0_i32 : i32, i32
  }
  func.func @transform_1(%arg0: i32) -> (i32, i32) {
    %c0_i32 = arith.constant 0 : i32
    %c0_i32_0 = arith.constant 0 : i32
    return %arg0, %c0_i32 : i32, i32
  }
  func.func @transform_2(%arg0: i32) -> (i32, i32) {
    %c0_i32 = arith.constant 0 : i32
    %c0_i32_0 = arith.constant 0 : i32
    return %arg0, %c0_i32 : i32, i32
  }
  func.func @transform_3(%arg0: i32) -> (i32, i32) {
    %c0_i32 = arith.constant 0 : i32
    %c0_i32_0 = arith.constant 0 : i32
    return %arg0, %c0_i32 : i32, i32
  }
  func.func @transform_4(%arg0: i32) -> (i32, i32, i32) {
    %c0_i32 = arith.constant 0 : i32
    %c0_i32_0 = arith.constant 0 : i32
    %c0_i32_1 = arith.constant 0 : i32
    return %arg0, %c0_i32, %c0_i32_0 : i32, i32, i32
  }
  func.func @transform_5(%arg0: i32) -> (i32, i32) {
    %c0_i32 = arith.constant 0 : i32
    %c0_i32_0 = arith.constant 0 : i32
    %c0_i32_1 = arith.constant 0 : i32
    return %c0_i32, %c0_i32_0 : i32, i32
  }
  func.func @transform_6(%arg0: i32) -> (i32, i32) {
    %c0_i32 = arith.constant 0 : i32
    %c0_i32_0 = arith.constant 0 : i32
    return %arg0, %c0_i32 : i32, i32
  }
}

</mosaic_0001>

<llo_original>
// kernel: tpu_custom_call.1
$region0: #{tpu_custom_call.1}
  #allocation0 [shape = 'u32[]', space=smem, size = 0x4, offset = 0x4, fixed_abs, tag = 'smem constant byte address 0x4 - core index']
  #allocation1 [shape = 'u32[72,128]{1,0:T(1,128)}', space=vmem, size = 0x9000, scoped, tag = 'internal scratch']
  %s0 = inlined_call_operand.vmem [shape: f32[16,32], index: 0, kind: input, shape index: {}]
  %s1 = inlined_call_operand.vmem [shape: f32[32,32], index: 1, kind: input, shape index: {}]
  %s2 = inlined_call_operand.vmem [shape: f32[32,32], index: 2, kind: input, shape index: {}]
  %s3 = inlined_call_operand.vmem [shape: f32[16,1], index: 3, kind: input, shape index: {}]
  %s4 = inlined_call_operand.vmem [shape: f32[2,10,16], index: 4, kind: input, shape index: {}]
  %s5 = inlined_call_operand.vmem [shape: bf16[352,64], index: 5, kind: input, shape index: {}]
  %s6 = inlined_call_operand.hbm [shape: f32[16,32], index: 6, kind: output, shape index: {}]
  %s7 = sld [smem:[#allocation0]]
  $region34: #{tpu_custom_call.1} parent=0
    _
  %s9 = ssub.s32 1, %s7
  %s10 = scalar_select 0, %s9, %s7
  $region1: #{tpu_custom_call.1} parent=0
    #allocation2 [shape = 'u8[8192]{0}', space=vmem, size = 0x2000, scoped, tag = 'output window, operand 0, single buffered']
    #allocation3 [shape = 's32[1]{0}', space=sflag, size = 0x4, scoped, tag = 'scoped memory for tpu_custom_call.1']
    %11 = vsyncpa [#allocation3], 0
    // Predicated region
    $region2: #{tpu_custom_call.1} parent=1 // pred_check
      _
    $region3: #{tpu_custom_call.1} parent=1 // pred_check_branch
      %13 = sbr.rel (0) target = $region5
    $region4: #{tpu_custom_call.1} parent=1 // pred_region
      _
    $region5: #{tpu_custom_call.1} parent=1 // pred_fallthru
      _
    // Predicated region
    $region6: #{tpu_custom_call.1} parent=1 // pred_check
      _
    $region7: #{tpu_custom_call.1} parent=1 // pred_check_branch
      %15 = sbr.rel (0) target = $region9
    $region8: #{tpu_custom_call.1} parent=1 // pred_region
      _
    $region9: #{tpu_custom_call.1} parent=1 // pred_fallthru
      _
    // Predicated region
    $region10: #{tpu_custom_call.1} parent=1 // pred_check
      _
    $region11: #{tpu_custom_call.1} parent=1 // pred_check_branch
      %17 = sbr.rel (0) target = $region13
    $region12: #{tpu_custom_call.1} parent=1 // pred_region
      _
    $region13: #{tpu_custom_call.1} parent=1 // pred_fallthru
      _
    // Predicated region
    $region14: #{tpu_custom_call.1} parent=1 // pred_check
      _
    $region15: #{tpu_custom_call.1} parent=1 // pred_check_branch
      %19 = sbr.rel (0) target = $region17
    $region16: #{tpu_custom_call.1} parent=1 // pred_region
      _
    $region17: #{tpu_custom_call.1} parent=1 // pred_fallthru
      _
    // Predicated region
    $region18: #{tpu_custom_call.1} parent=1 // pred_check
      _
    $region19: #{tpu_custom_call.1} parent=1 // pred_check_branch
      %21 = sbr.rel (0) target = $region21
    $region20: #{tpu_custom_call.1} parent=1 // pred_region
      _
    $region21: #{tpu_custom_call.1} parent=1 // pred_fallthru
      _
    // Predicated region
    $region22: #{tpu_custom_call.1} parent=1 // pred_check
      _
    $region23: #{tpu_custom_call.1} parent=1 // pred_check_branch
      %23 = sbr.rel (0) target = $region25
    $region24: #{tpu_custom_call.1} parent=1 // pred_region
      _
    $region25: #{tpu_custom_call.1} parent=1 // pred_fallthru
      _
    %v25 = vld [vmem:[%s0] sm:$0xff]
    %v26 = vld [vmem:[%s0 + $0x8] sm:$0xff]
    %v27 = vld [vmem:[%s1] sm:$0xff]
    %v28 = vld [vmem:[%s1 + $0x8] sm:$0xff]
    %v29 = vld [vmem:[%s1 + $0x10] sm:$0xff]
    %v30 = vld [vmem:[%s1 + $0x18] sm:$0xff]
    %v31 = vld [vmem:[%s2] sm:$0xff]
    %v32 = vld [vmem:[%s2 + $0x8] sm:$0xff]
    %v33 = vld [vmem:[%s2 + $0x10] sm:$0xff]
    %v34 = vld [vmem:[%s2 + $0x18] sm:$0xff]
    %v35 = vld [vmem:[%s3] sm:$0xff]
    %v36 = vld [vmem:[%s3 + $0x8] sm:$0xff]
    %v37 = vld [vmem:[%s4] sm:$0xff]
    %v38 = vld [vmem:[%s4 + $0x8] sm:$0x3]
    %v39 = vld [vmem:[%s4 + $0x10] sm:$0xff]
    %v40 = vld [vmem:[%s4 + $0x18] sm:$0x3]
    %v41 = vmul.f32 %v37, -1e+30
    %v42 = vmul.f32 %v38, -1e+30
    %v43 = vmul.f32 %v39, -1e+30
    %v44 = vmul.f32 %v40, -1e+30
    %v45 = vld [vmem:[%s5] sm:$0xf]
    %v46 = vld [vmem:[%s5 + $0x4] sm:$0xf]
    %v47 = vld [vmem:[%s5 + $0x8] sm:$0xf]
    %v48 = vld [vmem:[%s5 + $0xc] sm:$0xf]
    %v49 = vld [vmem:[%s5 + $0x10] sm:$0xf]
    %v50 = vld [vmem:[%s5 + $0x14] sm:$0xf]
    %v51 = vld [vmem:[%s5 + $0x18] sm:$0xf]
    %v52 = vld [vmem:[%s5 + $0x1c] sm:$0xf]
    %v53 = vld [vmem:[%s5 + $0x20] sm:$0x3]
    %v54 = vunpack.c.l.bf16 %v53
    %v55 = vpack.c.bf16 %v26, %v25
    %v56 = vperm.slane %v54, 0
    %v61 = vunpack.c.l.b16 %v45
    %v62 = vunpack.c.l.b16 %v46
    %v63 = vunpack.c.l.b16 %v47
    %v64 = vunpack.c.l.b16 %v48
    %v65 = vpack.c.b16 %v62, %v61
    %v66 = vpack.c.b16 %v64, %v63
    %vm69 = vcmask 261120
    %v71 = vsel %vm69, %v55, 0
    %73 = vmatpush.bf16.msra.mxu0 0
    %74 = vmatpush.bf16.msra.mxu0 0
    %75 = vmatpush.bf16.msra.mxu0 0
    %76 = vmatpush.bf16.msra.mxu0 0
    %77 = vmatpush.bf16.msra.mxu0 0
    %78 = vmatpush.bf16.msra.mxu0 0
    %79 = vmatpush.bf16.msra.mxu0 %v66
    %80 = vmatpush.bf16.msra.mxu0 %v65
    %81 = vmatmul.bf16.gmra.mxu0 %v71
    %v82 = vpop.f32.mrf.mxu0
    %v83 = vadd.f32 %v56, %v82
    %v84 = vpop.f32.mrf.mxu0
    %v85 = vadd.f32 %v56, %v84
    %86 = vdwg.mxu0
    %v87 = vperm.slane %v54, 1
    %v92 = vunpack.c.l.b16 %v49
    %v93 = vunpack.c.l.b16 %v50
    %v94 = vunpack.c.l.b16 %v51
    %v95 = vunpack.c.l.b16 %v52
    %v96 = vpack.c.b16 %v93, %v92
    %v97 = vpack.c.b16 %v95, %v94
    %100 = vmatpush.bf16.msra.mxu0 0
    %101 = vmatpush.bf16.msra.mxu0 0
    %102 = vmatpush.bf16.msra.mxu0 0
    %103 = vmatpush.bf16.msra.mxu0 0
    %104 = vmatpush.bf16.msra.mxu0 0
    %105 = vmatpush.bf16.msra.mxu0 0
    %106 = vmatpush.bf16.msra.mxu0 %v97
    %107 = vmatpush.bf16.msra.mxu0 %v96
    %108 = vmatmul.bf16.gmra.mxu0 %v71
    %v109 = vpop.f32.mrf.mxu0
    %v110 = vadd.f32 %v87, %v109
    %v111 = vpop.f32.mrf.mxu0
    %v112 = vadd.f32 %v87, %v111
    %113 = vdwg.mxu0
    %v114 = vpack.c.bf16 %v83, %v83
    %v115 = vpack.c.bf16 %v110, %v110
    %vm116 = vcmask 64512
    %v118 = vsel %vm116, %v114, 0
    %v121 = vsel %vm116, %v115, 0
    %123 = vmatpush.bf16.xpose.msra.mxu0 0
    %124 = vmatpush.bf16.xpose.msra.mxu0 0
    %125 = vmatpush.bf16.xpose.msra.mxu0 0
    %126 = vmatpush.bf16.xpose.msra.mxu0 0
    %127 = vmatpush.bf16.xpose.msra.mxu0 0
    %128 = vmatpush.bf16.xpose.msra.mxu0 0
    %129 = vmatpush.bf16.xpose.msra.mxu0 0
    %130 = vmatpush.bf16.xpose.msra.mxu0 %v121
    %131 = vmatmul.bf16.gmra.mxu0 %v118
    %v132 = vpop.f32.mrf.mxu0
    %v133 = vadd.f32 0.0, %v132
    %v134 = vpop.f32.mrf.mxu0
    %135 = vdwg.mxu0
    %v136 = vmul.f32 %v133, 0.35355338
    %v137 = vadd.f32 %v136, %v41
    %v138 = vsel %vm116, %v137, -inf
    %139 = vmax.xlane.f32.xlu0 %v138
    %v140 = vpop.xlane.xlu0 %139
    %v141 = vsub.f32 %v137, %v140
    %v142 = vmul.f32 %v141, 1.442695
    %v143 = vpow.pop %v142
    %v144 = vsel %vm116, %v143, 0.0
    %145 = vadd.xlane.f32.xlu0 %v144
    %v146 = vpop.xlane.xlu0 %145
    %v147 = vrcp.pop %v146
    %v148 = vmul.f32 %v146, %v147
    %v149 = vsub.f32 1.0, %v148
    %v150 = vmul.f32 %v147, %v149
    %v151 = vadd.f32 %v147, %v150
    %vm152 = vweird.f32 %v146
    %vm153 = vweird.f32 %v147
    %vm154 = vmor %vm152, %vm153
    %v155 = vsel %vm154, %v147, %v151
    %v156 = vand.u32 2147483647, %v146
    %vm157 = vcmp.eq.f32.partialorder %v156, 8.507059e+37
    %v158 = vand.u32 %v146, 2147483648
    %v159 = vor.u32 1.1754944e-38, %v158
    %v160 = vsel %vm157, %v159, %v155
    %v161 = vmul.f32 %v143, %v160
    %v162 = vpack.c.bf16 %v161, %v161
    %164 = vrot.lane.b32.xlu0 %v115, 96
    %v165 = vpop.permute.xlu0 %164
    %v167 = vsel %vm116, %v162, 0
    %vm169 = vcmask 1043456
    %v171 = vsel %vm169, %v165, 0
    %173 = vmatpush.bf16.msra.mxu0 0
    %174 = vmatpush.bf16.msra.mxu0 0
    %175 = vmatpush.bf16.msra.mxu0 0
    %176 = vmatpush.bf16.msra.mxu0 0
    %177 = vmatpush.bf16.msra.mxu0 0
    %178 = vmatpush.bf16.msra.mxu0 0
    %179 = vmatpush.bf16.msra.mxu0 0
    %180 = vmatpush.bf16.msra.mxu0 %v171
    %181 = vmatmul.bf16.gmra.mxu0 %v167
    %v182 = vpop.f32.mrf.mxu0
    %v183 = vadd.f32 0.0, %v182
    %v184 = vpop.f32.mrf.mxu0
    %185 = vdwg.mxu0
    %187 = vrot.lane.b32.xlu0 %v114, 120
    %v188 = vpop.permute.xlu0 %187
    %189 = vrot.lane.b32.xlu0 %v115, 120
    %v190 = vpop.permute.xlu0 %189
    %v192 = vsel %vm116, %v188, 0
    %v195 = vsel %vm116, %v190, 0
    %197 = vmatpush.bf16.xpose.msra.mxu0 0
    %198 = vmatpush.bf16.xpose.msra.mxu0 0
    %199 = vmatpush.bf16.xpose.msra.mxu0 0
    %200 = vmatpush.bf16.xpose.msra.mxu0 0
    %201 = vmatpush.bf16.xpose.msra.mxu0 0
    %202 = vmatpush.bf16.xpose.msra.mxu0 0
    %203 = vmatpush.bf16.xpose.msra.mxu0 0
    %204 = vmatpush.bf16.xpose.msra.mxu0 %v195
    %205 = vmatmul.bf16.gmra.mxu0 %v192
    %v206 = vpop.f32.mrf.mxu0
    %v207 = vadd.f32 0.0, %v206
    %v208 = vpop.f32.mrf.mxu0
    %209 = vdwg.mxu0
    %v210 = vmul.f32 %v207, 0.35355338
    %v211 = vadd.f32 %v210, %v41
    %v212 = vsel %vm116, %v211, -inf
    %213 = vmax.xlane.f32.xlu0 %v212
    %v214 = vpop.xlane.xlu0 %213
    %v215 = vsub.f32 %v211, %v214
    %v216 = vmul.f32 %v215, 1.442695
    %v217 = vpow.pop %v216
    %v218 = vsel %vm116, %v217, 0.0
    %219 = vadd.xlane.f32.xlu0 %v218
    %v220 = vpop.xlane.xlu0 %219
    %v221 = vrcp.pop %v220
    %v222 = vmul.f32 %v220, %v221
    %v223 = vsub.f32 1.0, %v222
    %v224 = vmul.f32 %v221, %v223
    %v225 = vadd.f32 %v221, %v224
    %vm226 = vweird.f32 %v220
    %vm227 = vweird.f32 %v221
    %vm228 = vmor %vm226, %vm227
    %v229 = vsel %vm228, %v221, %v225
    %v230 = vand.u32 2147483647, %v220
    %vm231 = vcmp.eq.f32.partialorder %v230, 8.507059e+37
    %v232 = vand.u32 %v220, 2147483648
    %v233 = vor.u32 1.1754944e-38, %v232
    %v234 = vsel %vm231, %v233, %v229
    %v235 = vmul.f32 %v217, %v234
    %v236 = vpack.c.bf16 %v235, %v235
    %237 = vrot.lane.b32.xlu0 %v115, 88
    %v238 = vpop.permute.xlu0 %237
    %v240 = vsel %vm116, %v236, 0
    %v243 = vsel %vm169, %v238, 0
    %245 = vmatpush.bf16.msra.mxu0 0
    %246 = vmatpush.bf16.msra.mxu0 0
    %247 = vmatpush.bf16.msra.mxu0 0
    %248 = vmatpush.bf16.msra.mxu0 0
    %249 = vmatpush.bf16.msra.mxu0 0
    %250 = vmatpush.bf16.msra.mxu0 0
    %251 = vmatpush.bf16.msra.mxu0 0
    %252 = vmatpush.bf16.msra.mxu0 %v243
    %253 = vmatmul.bf16.gmra.mxu0 %v240
    %v254 = vpop.f32.mrf.mxu0
    %v255 = vadd.f32 0.0, %v254
    %v256 = vpop.f32.mrf.mxu0
    %257 = vdwg.mxu0
    %258 = vrot.lane.b32.xlu0 %v114, 112
    %v259 = vpop.permute.xlu0 %258
    %260 = vrot.lane.b32.xlu0 %v115, 112
    %v261 = vpop.permute.xlu0 %260
    %v263 = vsel %vm116, %v259, 0
    %v266 = vsel %vm116, %v261, 0
    %268 = vmatpush.bf16.xpose.msra.mxu0 0
    %269 = vmatpush.bf16.xpose.msra.mxu0 0
    %270 = vmatpush.bf16.xpose.msra.mxu0 0
    %271 = vmatpush.bf16.xpose.msra.mxu0 0
    %272 = vmatpush.bf16.xpose.msra.mxu0 0
    %273 = vmatpush.bf16.xpose.msra.mxu0 0
    %274 = vmatpush.bf16.xpose.msra.mxu0 0
    %275 = vmatpush.bf16.xpose.msra.mxu0 %v266
    %276 = vmatmul.bf16.gmra.mxu0 %v263
    %v277 = vpop.f32.mrf.mxu0
    %v278 = vadd.f32 0.0, %v277
    %v279 = vpop.f32.mrf.mxu0
    %280 = vdwg.mxu0
    %v281 = vmul.f32 %v278, 0.35355338
    %v282 = vadd.f32 %v281, %v41
    %v283 = vsel %vm116, %v282, -inf
    %284 = vmax.xlane.f32.xlu0 %v283
    %v285 = vpop.xlane.xlu0 %284
    %v286 = vsub.f32 %v282, %v285
    %v287 = vmul.f32 %v286, 1.442695
    %v288 = vpow.pop %v287
    %v289 = vsel %vm116, %v288, 0.0
    %290 = vadd.xlane.f32.xlu0 %v289
    %v291 = vpop.xlane.xlu0 %290
    %v292 = vrcp.pop %v291
    %v293 = vmul.f32 %v291, %v292
    %v294 = vsub.f32 1.0, %v293
    %v295 = vmul.f32 %v292, %v294
    %v296 = vadd.f32 %v292, %v295
    %vm297 = vweird.f32 %v291
    %vm298 = vweird.f32 %v292
    %vm299 = vmor %vm297, %vm298
    %v300 = vsel %vm299, %v292, %v296
    %v301 = vand.u32 2147483647, %v291
    %vm302 = vcmp.eq.f32.partialorder %v301, 8.507059e+37
    %v303 = vand.u32 %v291, 2147483648
    %v304 = vor.u32 1.1754944e-38, %v303
    %v305 = vsel %vm302, %v304, %v300
    %v306 = vmul.f32 %v288, %v305
    %v307 = vpack.c.bf16 %v306, %v306
    %308 = vrot.lane.b32.xlu0 %v115, 80
    %v309 = vpop.permute.xlu0 %308
    %v311 = vsel %vm116, %v307, 0
    %v314 = vsel %vm169, %v309, 0
    %316 = vmatpush.bf16.msra.mxu0 0
    %317 = vmatpush.bf16.msra.mxu0 0
    %318 = vmatpush.bf16.msra.mxu0 0
    %319 = vmatpush.bf16.msra.mxu0 0
    %320 = vmatpush.bf16.msra.mxu0 0
    %321 = vmatpush.bf16.msra.mxu0 0
    %322 = vmatpush.bf16.msra.mxu0 0
    %323 = vmatpush.bf16.msra.mxu0 %v314
    %324 = vmatmul.bf16.gmra.mxu0 %v311
    %v325 = vpop.f32.mrf.mxu0
    %v326 = vadd.f32 0.0, %v325
    %v327 = vpop.f32.mrf.mxu0
    %328 = vdwg.mxu0
    %329 = vrot.lane.b32.xlu0 %v114, 104
    %v330 = vpop.permute.xlu0 %329
    %331 = vrot.lane.b32.xlu0 %v115, 104
    %v332 = vpop.permute.xlu0 %331
    %v334 = vsel %vm116, %v330, 0
    %v337 = vsel %vm116, %v332, 0
    %339 = vmatpush.bf16.xpose.msra.mxu0 0
    %340 = vmatpush.bf16.xpose.msra.mxu0 0
    %341 = vmatpush.bf16.xpose.msra.mxu0 0
    %342 = vmatpush.bf16.xpose.msra.mxu0 0
    %343 = vmatpush.bf16.xpose.msra.mxu0 0
    %344 = vmatpush.bf16.xpose.msra.mxu0 0
    %345 = vmatpush.bf16.xpose.msra.mxu0 0
    %346 = vmatpush.bf16.xpose.msra.mxu0 %v337
    %347 = vmatmul.bf16.gmra.mxu0 %v334
    %v348 = vpop.f32.mrf.mxu0
    %v349 = vadd.f32 0.0, %v348
    %v350 = vpop.f32.mrf.mxu0
    %351 = vdwg.mxu0
    %v352 = vmul.f32 %v349, 0.35355338
    %v353 = vadd.f32 %v352, %v41
    %v354 = vsel %vm116, %v353, -inf
    %355 = vmax.xlane.f32.xlu0 %v354
    %v356 = vpop.xlane.xlu0 %355
    %v357 = vsub.f32 %v353, %v356
    %v358 = vmul.f32 %v357, 1.442695
    %v359 = vpow.pop %v358
    %v360 = vsel %vm116, %v359, 0.0
    %361 = vadd.xlane.f32.xlu0 %v360
    %v362 = vpop.xlane.xlu0 %361
    %v363 = vrcp.pop %v362
    %v364 = vmul.f32 %v362, %v363
    %v365 = vsub.f32 1.0, %v364
    %v366 = vmul.f32 %v363, %v365
    %v367 = vadd.f32 %v363, %v366
    %vm368 = vweird.f32 %v362
    %vm369 = vweird.f32 %v363
    %vm370 = vmor %vm368, %vm369
    %v371 = vsel %vm370, %v363, %v367
    %v372 = vand.u32 2147483647, %v362
    %vm373 = vcmp.eq.f32.partialorder %v372, 8.507059e+37
    %v374 = vand.u32 %v362, 2147483648
    %v375 = vor.u32 1.1754944e-38, %v374
    %v376 = vsel %vm373, %v375, %v371
    %v377 = vmul.f32 %v359, %v376
    %v378 = vpack.c.bf16 %v377, %v377
    %379 = vrot.lane.b32.xlu0 %v115, 72
    %v380 = vpop.permute.xlu0 %379
    %v382 = vsel %vm116, %v378, 0
    %v385 = vsel %vm169, %v380, 0
    %387 = vmatpush.bf16.msra.mxu0 0
    %388 = vmatpush.bf16.msra.mxu0 0
    %389 = vmatpush.bf16.msra.mxu0 0
    %390 = vmatpush.bf16.msra.mxu0 0
    %391 = vmatpush.bf16.msra.mxu0 0
    %392 = vmatpush.bf16.msra.mxu0 0
    %393 = vmatpush.bf16.msra.mxu0 0
    %394 = vmatpush.bf16.msra.mxu0 %v385
    %395 = vmatmul.bf16.gmra.mxu0 %v382
    %v396 = vpop.f32.mrf.mxu0
    %v397 = vadd.f32 0.0, %v396
    %v398 = vpop.f32.mrf.mxu0
    %399 = vdwg.mxu0
    %401 = vrot.lane.b32.xlu0 %v255, 8
    %v402 = vpop.permute.xlu0 %401
    %405 = vrot.lane.b32.xlu0 %v326, 16
    %v406 = vpop.permute.xlu0 %405
    %409 = vrot.lane.b32.xlu0 %v397, 24
    %v410 = vpop.permute.xlu0 %409
    %v412 = vsel %vm116, %v183, %v402
    %vm413 = vcmask 130048
    %v414 = vsel %vm413, %v412, %v406
    %vm415 = vcmask 195584
    %v416 = vsel %vm415, %v414, %v410
    %v417 = vpack.c.bf16 %v85, %v85
    %v418 = vpack.c.bf16 %v112, %v112
    %v420 = vsel %vm116, %v417, 0
    %v423 = vsel %vm116, %v418, 0
    %425 = vmatpush.bf16.xpose.msra.mxu0 0
    %426 = vmatpush.bf16.xpose.msra.mxu0 0
    %427 = vmatpush.bf16.xpose.msra.mxu0 0
    %428 = vmatpush.bf16.xpose.msra.mxu0 0
    %429 = vmatpush.bf16.xpose.msra.mxu0 0
    %430 = vmatpush.bf16.xpose.msra.mxu0 0
    %431 = vmatpush.bf16.xpose.msra.mxu0 0
    %432 = vmatpush.bf16.xpose.msra.mxu0 %v423
    %433 = vmatmul.bf16.gmra.mxu0 %v420
    %v434 = vpop.f32.mrf.mxu0
    %v435 = vadd.f32 0.0, %v434
    %v436 = vpop.f32.mrf.mxu0
    %437 = vdwg.mxu0
    %v438 = vmul.f32 %v435, 0.35355338
    %v439 = vadd.f32 %v438, %v43
    %v440 = vsel %vm116, %v439, -inf
    %441 = vmax.xlane.f32.xlu0 %v440
    %v442 = vpop.xlane.xlu0 %441
    %v443 = vsub.f32 %v439, %v442
    %v444 = vmul.f32 %v443, 1.442695
    %v445 = vpow.pop %v444
    %v446 = vsel %vm116, %v445, 0.0
    %447 = vadd.xlane.f32.xlu0 %v446
    %v448 = vpop.xlane.xlu0 %447
    %v449 = vrcp.pop %v448
    %v450 = vmul.f32 %v448, %v449
    %v451 = vsub.f32 1.0, %v450
    %v452 = vmul.f32 %v449, %v451
    %v453 = vadd.f32 %v449, %v452
    %vm454 = vweird.f32 %v448
    %vm455 = vweird.f32 %v449
    %vm456 = vmor %vm454, %vm455
    %v457 = vsel %vm456, %v449, %v453
    %v458 = vand.u32 2147483647, %v448
    %vm459 = vcmp.eq.f32.partialorder %v458, 8.507059e+37
    %v460 = vand.u32 %v448, 2147483648
    %v461 = vor.u32 1.1754944e-38, %v460
    %v462 = vsel %vm459, %v461, %v457
    %v463 = vmul.f32 %v445, %v462
    %v464 = vpack.c.bf16 %v463, %v463
    %466 = vrot.lane.b32.xlu0 %v418, 96
    %v467 = vpop.permute.xlu0 %466
    %v469 = vsel %vm116, %v464, 0
    %v472 = vsel %vm169, %v467, 0
    %474 = vmatpush.bf16.msra.mxu0 0
    %475 = vmatpush.bf16.msra.mxu0 0
    %476 = vmatpush.bf16.msra.mxu0 0
    %477 = vmatpush.bf16.msra.mxu0 0
    %478 = vmatpush.bf16.msra.mxu0 0
    %479 = vmatpush.bf16.msra.mxu0 0
    %480 = vmatpush.bf16.msra.mxu0 0
    %481 = vmatpush.bf16.msra.mxu0 %v472
    %482 = vmatmul.bf16.gmra.mxu0 %v469
    %v483 = vpop.f32.mrf.mxu0
    %v484 = vadd.f32 0.0, %v483
    %v485 = vpop.f32.mrf.mxu0
    %486 = vdwg.mxu0
    %488 = vrot.lane.b32.xlu0 %v417, 120
    %v489 = vpop.permute.xlu0 %488
    %490 = vrot.lane.b32.xlu0 %v418, 120
    %v491 = vpop.permute.xlu0 %490
    %v493 = vsel %vm116, %v489, 0
    %v496 = vsel %vm116, %v491, 0
    %498 = vmatpush.bf16.xpose.msra.mxu0 0
    %499 = vmatpush.bf16.xpose.msra.mxu0 0
    %500 = vmatpush.bf16.xpose.msra.mxu0 0
    %501 = vmatpush.bf16.xpose.msra.mxu0 0
    %502 = vmatpush.bf16.xpose.msra.mxu0 0
    %503 = vmatpush.bf16.xpose.msra.mxu0 0
    %504 = vmatpush.bf16.xpose.msra.mxu0 0
    %505 = vmatpush.bf16.xpose.msra.mxu0 %v496
    %506 = vmatmul.bf16.gmra.mxu0 %v493
    %v507 = vpop.f32.mrf.mxu0
    %v508 = vadd.f32 0.0, %v507
    %v509 = vpop.f32.mrf.mxu0
    %510 = vdwg.mxu0
    %v511 = vmul.f32 %v508, 0.35355338
    %v512 = vadd.f32 %v511, %v43
    %v513 = vsel %vm116, %v512, -inf
    %514 = vmax.xlane.f32.xlu0 %v513
    %v515 = vpop.xlane.xlu0 %514
    %v516 = vsub.f32 %v512, %v515
    %v517 = vmul.f32 %v516, 1.442695
    %v518 = vpow.pop %v517
    %v519 = vsel %vm116, %v518, 0.0
    %520 = vadd.xlane.f32.xlu0 %v519
    %v521 = vpop.xlane.xlu0 %520
    %v522 = vrcp.pop %v521
    %v523 = vmul.f32 %v521, %v522
    %v524 = vsub.f32 1.0, %v523
    %v525 = vmul.f32 %v522, %v524
    %v526 = vadd.f32 %v522, %v525
    %vm527 = vweird.f32 %v521
    %vm528 = vweird.f32 %v522
    %vm529 = vmor %vm527, %vm528
    %v530 = vsel %vm529, %v522, %v526
    %v531 = vand.u32 2147483647, %v521
    %vm532 = vcmp.eq.f32.partialorder %v531, 8.507059e+37
    %v533 = vand.u32 %v521, 2147483648
    %v534 = vor.u32 1.1754944e-38, %v533
    %v535 = vsel %vm532, %v534, %v530
    %v536 = vmul.f32 %v518, %v535
    %v537 = vpack.c.bf16 %v536, %v536
    %538 = vrot.lane.b32.xlu0 %v418, 88
    %v539 = vpop.permute.xlu0 %538
    %v541 = vsel %vm116, %v537, 0
    %v544 = vsel %vm169, %v539, 0
    %546 = vmatpush.bf16.msra.mxu0 0
    %547 = vmatpush.bf16.msra.mxu0 0
    %548 = vmatpush.bf16.msra.mxu0 0
    %549 = vmatpush.bf16.msra.mxu0 0
    %550 = vmatpush.bf16.msra.mxu0 0
    %551 = vmatpush.bf16.msra.mxu0 0
    %552 = vmatpush.bf16.msra.mxu0 0
    %553 = vmatpush.bf16.msra.mxu0 %v544
    %554 = vmatmul.bf16.gmra.mxu0 %v541
    %v555 = vpop.f32.mrf.mxu0
    %v556 = vadd.f32 0.0, %v555
    %v557 = vpop.f32.mrf.mxu0
    %558 = vdwg.mxu0
    %559 = vrot.lane.b32.xlu0 %v417, 112
    %v560 = vpop.permute.xlu0 %559
    %561 = vrot.lane.b32.xlu0 %v418, 112
    %v562 = vpop.permute.xlu0 %561
    %v564 = vsel %vm116, %v560, 0
    %v567 = vsel %vm116, %v562, 0
    %569 = vmatpush.bf16.xpose.msra.mxu0 0
    %570 = vmatpush.bf16.xpose.msra.mxu0 0
    %571 = vmatpush.bf16.xpose.msra.mxu0 0
    %572 = vmatpush.bf16.xpose.msra.mxu0 0
    %573 = vmatpush.bf16.xpose.msra.mxu0 0
    %574 = vmatpush.bf16.xpose.msra.mxu0 0
    %575 = vmatpush.bf16.xpose.msra.mxu0 0
    %576 = vmatpush.bf16.xpose.msra.mxu0 %v567
    %577 = vmatmul.bf16.gmra.mxu0 %v564
    %v578 = vpop.f32.mrf.mxu0
    %v579 = vadd.f32 0.0, %v578
    %v580 = vpop.f32.mrf.mxu0
    %581 = vdwg.mxu0
    %v582 = vmul.f32 %v579, 0.35355338
    %v583 = vadd.f32 %v582, %v43
    %v584 = vsel %vm116, %v583, -inf
    %585 = vmax.xlane.f32.xlu0 %v584
    %v586 = vpop.xlane.xlu0 %585
    %v587 = vsub.f32 %v583, %v586
    %v588 = vmul.f32 %v587, 1.442695
    %v589 = vpow.pop %v588
    %v590 = vsel %vm116, %v589, 0.0
    %591 = vadd.xlane.f32.xlu0 %v590
    %v592 = vpop.xlane.xlu0 %591
    %v593 = vrcp.pop %v592
    %v594 = vmul.f32 %v592, %v593
    %v595 = vsub.f32 1.0, %v594
    %v596 = vmul.f32 %v593, %v595
    %v597 = vadd.f32 %v593, %v596
    %vm598 = vweird.f32 %v592
    %vm599 = vweird.f32 %v593
    %vm600 = vmor %vm598, %vm599
    %v601 = vsel %vm600, %v593, %v597
    %v602 = vand.u32 2147483647, %v592
    %vm603 = vcmp.eq.f32.partialorder %v602, 8.507059e+37
    %v604 = vand.u32 %v592, 2147483648
    %v605 = vor.u32 1.1754944e-38, %v604
    %v606 = vsel %vm603, %v605, %v601
    %v607 = vmul.f32 %v589, %v606
    %v608 = vpack.c.bf16 %v607, %v607
    %609 = vrot.lane.b32.xlu0 %v418, 80
    %v610 = vpop.permute.xlu0 %609
    %v612 = vsel %vm116, %v608, 0
    %v615 = vsel %vm169, %v610, 0
    %617 = vmatpush.bf16.msra.mxu0 0
    %618 = vmatpush.bf16.msra.mxu0 0
    %619 = vmatpush.bf16.msra.mxu0 0
    %620 = vmatpush.bf16.msra.mxu0 0
    %621 = vmatpush.bf16.msra.mxu0 0
    %622 = vmatpush.bf16.msra.mxu0 0
    %623 = vmatpush.bf16.msra.mxu0 0
    %624 = vmatpush.bf16.msra.mxu0 %v615
    %625 = vmatmul.bf16.gmra.mxu0 %v612
    %v626 = vpop.f32.mrf.mxu0
    %v627 = vadd.f32 0.0, %v626
    %v628 = vpop.f32.mrf.mxu0
    %629 = vdwg.mxu0
    %630 = vrot.lane.b32.xlu0 %v417, 104
    %v631 = vpop.permute.xlu0 %630
    %632 = vrot.lane.b32.xlu0 %v418, 104
    %v633 = vpop.permute.xlu0 %632
    %v635 = vsel %vm116, %v631, 0
    %v638 = vsel %vm116, %v633, 0
    %640 = vmatpush.bf16.xpose.msra.mxu0 0
    %641 = vmatpush.bf16.xpose.msra.mxu0 0
    %642 = vmatpush.bf16.xpose.msra.mxu0 0
    %643 = vmatpush.bf16.xpose.msra.mxu0 0
    %644 = vmatpush.bf16.xpose.msra.mxu0 0
    %645 = vmatpush.bf16.xpose.msra.mxu0 0
    %646 = vmatpush.bf16.xpose.msra.mxu0 0
    %647 = vmatpush.bf16.xpose.msra.mxu0 %v638
    %648 = vmatmul.bf16.gmra.mxu0 %v635
    %v649 = vpop.f32.mrf.mxu0
    %v650 = vadd.f32 0.0, %v649
    %v651 = vpop.f32.mrf.mxu0
    %652 = vdwg.mxu0
    %v653 = vmul.f32 %v650, 0.35355338
    %v654 = vadd.f32 %v653, %v43
    %v655 = vsel %vm116, %v654, -inf
    %656 = vmax.xlane.f32.xlu0 %v655
    %v657 = vpop.xlane.xlu0 %656
    %v658 = vsub.f32 %v654, %v657
    %v659 = vmul.f32 %v658, 1.442695
    %v660 = vpow.pop %v659
    %v661 = vsel %vm116, %v660, 0.0
    %662 = vadd.xlane.f32.xlu0 %v661
    %v663 = vpop.xlane.xlu0 %662
    %v664 = vrcp.pop %v663
    %v665 = vmul.f32 %v663, %v664
    %v666 = vsub.f32 1.0, %v665
    %v667 = vmul.f32 %v664, %v666
    %v668 = vadd.f32 %v664, %v667
    %vm669 = vweird.f32 %v663
    %vm670 = vweird.f32 %v664
    %vm671 = vmor %vm669, %vm670
    %v672 = vsel %vm671, %v664, %v668
    %v673 = vand.u32 2147483647, %v663
    %vm674 = vcmp.eq.f32.partialorder %v673, 8.507059e+37
    %v675 = vand.u32 %v663, 2147483648
    %v676 = vor.u32 1.1754944e-38, %v675
    %v677 = vsel %vm674, %v676, %v672
    %v678 = vmul.f32 %v660, %v677
    %v679 = vpack.c.bf16 %v678, %v678
    %680 = vrot.lane.b32.xlu0 %v418, 72
    %v681 = vpop.permute.xlu0 %680
    %v683 = vsel %vm116, %v679, 0
    %v686 = vsel %vm169, %v681, 0
    %688 = vmatpush.bf16.msra.mxu0 0
    %689 = vmatpush.bf16.msra.mxu0 0
    %690 = vmatpush.bf16.msra.mxu0 0
    %691 = vmatpush.bf16.msra.mxu0 0
    %692 = vmatpush.bf16.msra.mxu0 0
    %693 = vmatpush.bf16.msra.mxu0 0
    %694 = vmatpush.bf16.msra.mxu0 0
    %695 = vmatpush.bf16.msra.mxu0 %v686
    %696 = vmatmul.bf16.gmra.mxu0 %v683
    %v697 = vpop.f32.mrf.mxu0
    %v698 = vadd.f32 0.0, %v697
    %v699 = vpop.f32.mrf.mxu0
    %700 = vdwg.mxu0
    %702 = vrot.lane.b32.xlu0 %v556, 8
    %v703 = vpop.permute.xlu0 %702
    %706 = vrot.lane.b32.xlu0 %v627, 16
    %v707 = vpop.permute.xlu0 %706
    %710 = vrot.lane.b32.xlu0 %v698, 24
    %v711 = vpop.permute.xlu0 %710
    %v713 = vsel %vm116, %v484, %v703
    %v714 = vsel %vm413, %v713, %v707
    %v715 = vsel %vm415, %v714, %v711
    %v716 = vpack.c.bf16 %v715, %v416
    %717 = vrot.lane.b32.xlu0 %v65, 96
    %v718 = vpop.permute.xlu0 %717
    %719 = vrot.lane.b32.xlu0 %v66, 96
    %v720 = vpop.permute.xlu0 %719
    %724 = vrot.lane.b32.xlu0 %v56, 96
    %v725 = vpop.permute.xlu0 %724
    %v728 = vsel %vm69, %v716, 0
    %730 = vmatpush.bf16.msra.mxu0 0
    %731 = vmatpush.bf16.msra.mxu0 0
    %732 = vmatpush.bf16.msra.mxu0 0
    %733 = vmatpush.bf16.msra.mxu0 0
    %734 = vmatpush.bf16.msra.mxu0 0
    %735 = vmatpush.bf16.msra.mxu0 0
    %736 = vmatpush.bf16.msra.mxu0 %v720
    %737 = vmatpush.bf16.msra.mxu0 %v718
    %738 = vmatmul.bf16.gmra.mxu0 %v728
    %v739 = vpop.f32.mrf.mxu0
    %v740 = vadd.f32 %v725, %v739
    %v741 = vpop.f32.mrf.mxu0
    %v742 = vadd.f32 %v725, %v741
    %743 = vdwg.mxu0
    %v744 = vadd.f32 %v25, %v740
    %v745 = vadd.f32 %v26, %v742
    %v746 = vsel %vm69, %v744, 0.0
    %747 = vadd.xlane.f32.xlu0 %v746
    %v748 = vpop.xlane.xlu0 %747
    %v749 = vsel %vm69, %v745, 0.0
    %750 = vadd.xlane.f32.xlu0 %v749
    %v751 = vpop.xlane.xlu0 %750
    %v752 = vrcp.pop 32.0
    %v753 = vmul.f32 32.0, %v752
    %v754 = vsub.f32 1.0, %v753
    %v755 = vmul.f32 %v752, %v754
    %v756 = vadd.f32 %v752, %v755
    %vm757 = vweird.f32 %v752
    %v758 = vsel %vm757, %v752, %v756
    %v759 = vmul.f32 %v748, %v758
    %v760 = vmul.f32 %v751, %v758
    %v761 = vsub.f32 %v744, %v759
    %v762 = vsub.f32 %v745, %v760
    %v763 = vmul.f32 %v761, %v761
    %v764 = vmul.f32 %v762, %v762
    %v765 = vsel %vm69, %v763, 0.0
    %766 = vadd.xlane.f32.xlu0 %v765
    %v767 = vpop.xlane.xlu0 %766
    %v768 = vsel %vm69, %v764, 0.0
    %769 = vadd.xlane.f32.xlu0 %v768
    %v770 = vpop.xlane.xlu0 %769
    %v771 = vmul.f32 %v767, %v758
    %v772 = vmul.f32 %v770, %v758
    %v773 = vadd.f32 %v771, 1e-05
    %v774 = vadd.f32 %v772, 1e-05
    %v775 = vrsqrt.pop %v773
    %v776 = vmul.f32 %v775, %v773
    %v777 = vmul.f32 %v776, %v775
    %v778 = vmul.f32 0.5, %v777
    %v779 = vsub.f32 1.5, %v778
    %v780 = vmul.f32 %v775, %v779
    %vm781 = vweird.f32 %v773
    %vm782 = vweird.f32 %v775
    %vm783 = vmor %vm781, %vm782
    %v784 = vsel %vm783, %v775, %v780
    %v785 = vrsqrt.pop %v774
    %v786 = vmul.f32 %v785, %v774
    %v787 = vmul.f32 %v786, %v785
    %v788 = vmul.f32 0.5, %v787
    %v789 = vsub.f32 1.5, %v788
    %v790 = vmul.f32 %v785, %v789
    %vm791 = vweird.f32 %v774
    %vm792 = vweird.f32 %v785
    %vm793 = vmor %vm791, %vm792
    %v794 = vsel %vm793, %v785, %v790
    %v795 = vmul.f32 %v761, %v784
    %v796 = vmul.f32 %v762, %v794
    %v797 = vperm.slane %v54, 2
    %v798 = vmul.f32 %v795, %v797
    %v799 = vmul.f32 %v796, %v797
    %801 = vrot.lane.b32.xlu0 %v797, 96
    %v802 = vpop.permute.xlu0 %801
    %v804 = vadd.f32 %v798, %v802
    %v805 = vadd.f32 %v799, %v802
    %807 = vset.pattern.permute.xlu0 0
    %808 = vperm.xlu0 %807, %v35
    %v809 = vpop.permute.xlu0 %808
    %812 = vset.pattern.permute.xlu0 0
    %813 = vperm.xlu0 %812, %v36
    %v814 = vpop.permute.xlu0 %813
    %v816 = vmul.f32 %v804, %v809
    %v817 = vmul.f32 %v805, %v814
    %v818 = vld [vmem:[%s5 + $0x28] sm:$0xf]
    %v819 = vld [vmem:[%s5 + $0x2c] sm:$0xf]
    %v820 = vld [vmem:[%s5 + $0x30] sm:$0xf]
    %v821 = vld [vmem:[%s5 + $0x34] sm:$0xf]
    %v822 = vld [vmem:[%s5 + $0x38] sm:$0xf]
    %v823 = vld [vmem:[%s5 + $0x3c] sm:$0xf]
    %v824 = vld [vmem:[%s5 + $0x40] sm:$0xf]
    %v825 = vld [vmem:[%s5 + $0x44] sm:$0xf]
    %v826 = vld [vmem:[%s5 + $0x48] sm:$0x3]
    %v827 = vunpack.c.l.bf16 %v826
    %v828 = vpack.c.bf16 %v817, %v816
    %v829 = vperm.slane %v827, 0
    %v834 = vunpack.c.l.b16 %v818
    %v835 = vunpack.c.l.b16 %v819
    %v836 = vunpack.c.l.b16 %v820
    %v837 = vunpack.c.l.b16 %v821
    %v838 = vpack.c.b16 %v835, %v834
    %v839 = vpack.c.b16 %v837, %v836
    %v843 = vsel %vm69, %v828, 0
    %845 = vmatpush.bf16.msra.mxu0 0
    %846 = vmatpush.bf16.msra.mxu0 0
    %847 = vmatpush.bf16.msra.mxu0 0
    %848 = vmatpush.bf16.msra.mxu0 0
    %849 = vmatpush.bf16.msra.mxu0 0
    %850 = vmatpush.bf16.msra.mxu0 0
    %851 = vmatpush.bf16.msra.mxu0 %v839
    %852 = vmatpush.bf16.msra.mxu0 %v838
    %853 = vmatmul.bf16.gmra.mxu0 %v843
    %v854 = vpop.f32.mrf.mxu0
    %v855 = vadd.f32 %v829, %v854
    %v856 = vpop.f32.mrf.mxu0
    %v857 = vadd.f32 %v829, %v856
    %858 = vdwg.mxu0
    %v859 = vpack.c.bf16 %v28, %v27
    %v860 = vpack.c.bf16 %v30, %v29
    %v861 = vperm.slane %v827, 1
    %v866 = vunpack.c.l.b16 %v822
    %v867 = vunpack.c.l.b16 %v823
    %v868 = vunpack.c.l.b16 %v824
    %v869 = vunpack.c.l.b16 %v825
    %v870 = vpack.c.b16 %v867, %v866
    %v871 = vpack.c.b16 %v869, %v868
    %v875 = vsel %vm69, %v859, 0
    %v878 = vsel %vm69, %v860, 0
    %880 = vmatpush.bf16.msra.mxu0 0
    %881 = vmatpush.bf16.msra.mxu0 0
    %882 = vmatpush.bf16.msra.mxu0 0
    %883 = vmatpush.bf16.msra.mxu0 0
    %884 = vmatpush.bf16.msra.mxu0 0
    %885 = vmatpush.bf16.msra.mxu0 0
    %886 = vmatpush.bf16.msra.mxu0 %v871
    %887 = vmatpush.bf16.msra.mxu0 %v870
    %888 = vmatmul.bf16.gmra.mxu0 %v875
    %v889 = vpop.f32.mrf.mxu0
    %v890 = vadd.f32 %v861, %v889
    %v891 = vpop.f32.mrf.mxu0
    %v892 = vadd.f32 %v861, %v891
    %893 = vmatmul.bf16.gmra.mxu0 %v878
    %v894 = vpop.f32.mrf.mxu0
    %v895 = vadd.f32 %v861, %v894
    %v896 = vpop.f32.mrf.mxu0
    %v897 = vadd.f32 %v861, %v896
    %898 = vdwg.mxu0
    %v899 = vpack.c.bf16 %v855, %v855
    %v900 = vpack.c.bf16 %v892, %v890
    %v902 = vsel %vm116, %v899, 0
    %v905 = vsel %vm116, %v900, 0
    %907 = vmatpush.bf16.xpose.msra.mxu0 0
    %908 = vmatpush.bf16.xpose.msra.mxu0 0
    %909 = vmatpush.bf16.xpose.msra.mxu0 0
    %910 = vmatpush.bf16.xpose.msra.mxu0 0
    %911 = vmatpush.bf16.xpose.msra.mxu0 0
    %912 = vmatpush.bf16.xpose.msra.mxu0 0
    %913 = vmatpush.bf16.xpose.msra.mxu0 0
    %914 = vmatpush.bf16.xpose.msra.mxu0 %v905
    %915 = vmatmul.bf16.gmra.mxu0 %v902
    %v916 = vpop.f32.mrf.mxu0
    %v917 = vadd.f32 0.0, %v916
    %v918 = vpop.f32.mrf.mxu0
    %919 = vdwg.mxu0
    %v920 = vmul.f32 %v917, 0.35355338
    %v921 = vperm.slane %v42, 0
    %v922 = vadd.f32 %v920, %v921
    %v923 = vsel %vm413, %v922, -inf
    %924 = vmax.xlane.f32.xlu0 %v923
    %v925 = vpop.xlane.xlu0 %924
    %v926 = vsub.f32 %v922, %v925
    %v927 = vmul.f32 %v926, 1.442695
    %v928 = vpow.pop %v927
    %v929 = vsel %vm413, %v928, 0.0
    %930 = vadd.xlane.f32.xlu0 %v929
    %v931 = vpop.xlane.xlu0 %930
    %v932 = vrcp.pop %v931
    %v933 = vmul.f32 %v931, %v932
    %v934 = vsub.f32 1.0, %v933
    %v935 = vmul.f32 %v932, %v934
    %v936 = vadd.f32 %v932, %v935
    %vm937 = vweird.f32 %v931
    %vm938 = vweird.f32 %v932
    %vm939 = vmor %vm937, %vm938
    %v940 = vsel %vm939, %v932, %v936
    %v941 = vand.u32 2147483647, %v931
    %vm942 = vcmp.eq.f32.partialorder %v941, 8.507059e+37
    %v943 = vand.u32 %v931, 2147483648
    %v944 = vor.u32 1.1754944e-38, %v943
    %v945 = vsel %vm942, %v944, %v940
    %v946 = vmul.f32 %v928, %v945
    %v947 = vpack.c.bf16 %v946, %v946
    %949 = vrot.lane.b32.xlu0 %v900, 96
    %v950 = vpop.permute.xlu0 %949
    %v953 = vsel %vm413, %v947, 0
    %955 = vmatpush.bf16.msra.mxu0 0
    %956 = vmatpush.bf16.msra.mxu0 0
    %957 = vmatpush.bf16.msra.mxu0 0
    %958 = vmatpush.bf16.msra.mxu0 0
    %959 = vmatpush.bf16.msra.mxu0 0
    %960 = vmatpush.bf16.msra.mxu0 0
    %961 = vmatpush.bf16.msra.mxu0 0
    %962 = vmatpush.bf16.msra.mxu0 %v950
    %963 = vmatmul.bf16.gmra.mxu0 %v953
    %v964 = vpop.f32.mrf.mxu0
    %v965 = vadd.f32 0.0, %v964
    %v966 = vpop.f32.mrf.mxu0
    %967 = vdwg.mxu0
    %969 = vrot.lane.b32.xlu0 %v899, 120
    %v970 = vpop.permute.xlu0 %969
    %971 = vrot.lane.b32.xlu0 %v900, 120
    %v972 = vpop.permute.xlu0 %971
    %v974 = vsel %vm116, %v970, 0
    %v977 = vsel %vm116, %v972, 0
    %979 = vmatpush.bf16.xpose.msra.mxu0 0
    %980 = vmatpush.bf16.xpose.msra.mxu0 0
    %981 = vmatpush.bf16.xpose.msra.mxu0 0
    %982 = vmatpush.bf16.xpose.msra.mxu0 0
    %983 = vmatpush.bf16.xpose.msra.mxu0 0
    %984 = vmatpush.bf16.xpose.msra.mxu0 0
    %985 = vmatpush.bf16.xpose.msra.mxu0 0
    %986 = vmatpush.bf16.xpose.msra.mxu0 %v977
    %987 = vmatmul.bf16.gmra.mxu0 %v974
    %v988 = vpop.f32.mrf.mxu0
    %v989 = vadd.f32 0.0, %v988
    %v990 = vpop.f32.mrf.mxu0
    %991 = vdwg.mxu0
    %v992 = vmul.f32 %v989, 0.35355338
    %v993 = vadd.f32 %v992, %v921
    %v994 = vsel %vm413, %v993, -inf
    %995 = vmax.xlane.f32.xlu0 %v994
    %v996 = vpop.xlane.xlu0 %995
    %v997 = vsub.f32 %v993, %v996
    %v998 = vmul.f32 %v997, 1.442695
    %v999 = vpow.pop %v998
    %v1000 = vsel %vm413, %v999, 0.0
    %1001 = vadd.xlane.f32.xlu0 %v1000
    %v1002 = vpop.xlane.xlu0 %1001
    %v1003 = vrcp.pop %v1002
    %v1004 = vmul.f32 %v1002, %v1003
    %v1005 = vsub.f32 1.0, %v1004
    %v1006 = vmul.f32 %v1003, %v1005
    %v1007 = vadd.f32 %v1003, %v1006
    %vm1008 = vweird.f32 %v1002
    %vm1009 = vweird.f32 %v1003
    %vm1010 = vmor %vm1008, %vm1009
    %v1011 = vsel %vm1010, %v1003, %v1007
    %v1012 = vand.u32 2147483647, %v1002
    %vm1013 = vcmp.eq.f32.partialorder %v1012, 8.507059e+37
    %v1014 = vand.u32 %v1002, 2147483648
    %v1015 = vor.u32 1.1754944e-38, %v1014
    %v1016 = vsel %vm1013, %v1015, %v1011
    %v1017 = vmul.f32 %v999, %v1016
    %v1018 = vpack.c.bf16 %v1017, %v1017
    %1019 = vrot.lane.b32.xlu0 %v900, 88
    %v1020 = vpop.permute.xlu0 %1019
    %v1023 = vsel %vm413, %v1018, 0
    %1025 = vmatpush.bf16.msra.mxu0 0
    %1026 = vmatpush.bf16.msra.mxu0 0
    %1027 = vmatpush.bf16.msra.mxu0 0
    %1028 = vmatpush.bf16.msra.mxu0 0
    %1029 = vmatpush.bf16.msra.mxu0 0
    %1030 = vmatpush.bf16.msra.mxu0 0
    %1031 = vmatpush.bf16.msra.mxu0 0
    %1032 = vmatpush.bf16.msra.mxu0 %v1020
    %1033 = vmatmul.bf16.gmra.mxu0 %v1023
    %v1034 = vpop.f32.mrf.mxu0
    %v1035 = vadd.f32 0.0, %v1034
    %v1036 = vpop.f32.mrf.mxu0
    %1037 = vdwg.mxu0
    %1038 = vrot.lane.b32.xlu0 %v899, 112
    %v1039 = vpop.permute.xlu0 %1038
    %1040 = vrot.lane.b32.xlu0 %v900, 112
    %v1041 = vpop.permute.xlu0 %1040
    %v1043 = vsel %vm116, %v1039, 0
    %v1046 = vsel %vm116, %v1041, 0
    %1048 = vmatpush.bf16.xpose.msra.mxu0 0
    %1049 = vmatpush.bf16.xpose.msra.mxu0 0
    %1050 = vmatpush.bf16.xpose.msra.mxu0 0
    %1051 = vmatpush.bf16.xpose.msra.mxu0 0
    %1052 = vmatpush.bf16.xpose.msra.mxu0 0
    %1053 = vmatpush.bf16.xpose.msra.mxu0 0
    %1054 = vmatpush.bf16.xpose.msra.mxu0 0
    %1055 = vmatpush.bf16.xpose.msra.mxu0 %v1046
    %1056 = vmatmul.bf16.gmra.mxu0 %v1043
    %v1057 = vpop.f32.mrf.mxu0
    %v1058 = vadd.f32 0.0, %v1057
    %v1059 = vpop.f32.mrf.mxu0
    %1060 = vdwg.mxu0
    %v1061 = vmul.f32 %v1058, 0.35355338
    %v1062 = vadd.f32 %v1061, %v921
    %v1063 = vsel %vm413, %v1062, -inf
    %1064 = vmax.xlane.f32.xlu0 %v1063
    %v1065 = vpop.xlane.xlu0 %1064
    %v1066 = vsub.f32 %v1062, %v1065
    %v1067 = vmul.f32 %v1066, 1.442695
    %v1068 = vpow.pop %v1067
    %v1069 = vsel %vm413, %v1068, 0.0
    %1070 = vadd.xlane.f32.xlu0 %v1069
    %v1071 = vpop.xlane.xlu0 %1070
    %v1072 = vrcp.pop %v1071
    %v1073 = vmul.f32 %v1071, %v1072
    %v1074 = vsub.f32 1.0, %v1073
    %v1075 = vmul.f32 %v1072, %v1074
    %v1076 = vadd.f32 %v1072, %v1075
    %vm1077 = vweird.f32 %v1071
    %vm1078 = vweird.f32 %v1072
    %vm1079 = vmor %vm1077, %vm1078
    %v1080 = vsel %vm1079, %v1072, %v1076
    %v1081 = vand.u32 2147483647, %v1071
    %vm1082 = vcmp.eq.f32.partialorder %v1081, 8.507059e+37
    %v1083 = vand.u32 %v1071, 2147483648
    %v1084 = vor.u32 1.1754944e-38, %v1083
    %v1085 = vsel %vm1082, %v1084, %v1080
    %v1086 = vmul.f32 %v1068, %v1085
    %v1087 = vpack.c.bf16 %v1086, %v1086
    %1088 = vrot.lane.b32.xlu0 %v900, 80
    %v1089 = vpop.permute.xlu0 %1088
    %v1092 = vsel %vm413, %v1087, 0
    %1094 = vmatpush.bf16.msra.mxu0 0
    %1095 = vmatpush.bf16.msra.mxu0 0
    %1096 = vmatpush.bf16.msra.mxu0 0
    %1097 = vmatpush.bf16.msra.mxu0 0
    %1098 = vmatpush.bf16.msra.mxu0 0
    %1099 = vmatpush.bf16.msra.mxu0 0
    %1100 = vmatpush.bf16.msra.mxu0 0
    %1101 = vmatpush.bf16.msra.mxu0 %v1089
    %1102 = vmatmul.bf16.gmra.mxu0 %v1092
    %v1103 = vpop.f32.mrf.mxu0
    %v1104 = vadd.f32 0.0, %v1103
    %v1105 = vpop.f32.mrf.mxu0
    %1106 = vdwg.mxu0
    %1107 = vrot.lane.b32.xlu0 %v899, 104
    %v1108 = vpop.permute.xlu0 %1107
    %1109 = vrot.lane.b32.xlu0 %v900, 104
    %v1110 = vpop.permute.xlu0 %1109
    %v1112 = vsel %vm116, %v1108, 0
    %v1115 = vsel %vm116, %v1110, 0
    %1117 = vmatpush.bf16.xpose.msra.mxu0 0
    %1118 = vmatpush.bf16.xpose.msra.mxu0 0
    %1119 = vmatpush.bf16.xpose.msra.mxu0 0
    %1120 = vmatpush.bf16.xpose.msra.mxu0 0
    %1121 = vmatpush.bf16.xpose.msra.mxu0 0
    %1122 = vmatpush.bf16.xpose.msra.mxu0 0
    %1123 = vmatpush.bf16.xpose.msra.mxu0 0
    %1124 = vmatpush.bf16.xpose.msra.mxu0 %v1115
    %1125 = vmatmul.bf16.gmra.mxu0 %v1112
    %v1126 = vpop.f32.mrf.mxu0
    %v1127 = vadd.f32 0.0, %v1126
    %v1128 = vpop.f32.mrf.mxu0
    %1129 = vdwg.mxu0
    %v1130 = vmul.f32 %v1127, 0.35355338
    %v1131 = vadd.f32 %v1130, %v921
    %v1132 = vsel %vm413, %v1131, -inf
    %1133 = vmax.xlane.f32.xlu0 %v1132
    %v1134 = vpop.xlane.xlu0 %1133
    %v1135 = vsub.f32 %v1131, %v1134
    %v1136 = vmul.f32 %v1135, 1.442695
    %v1137 = vpow.pop %v1136
    %v1138 = vsel %vm413, %v1137, 0.0
    %1139 = vadd.xlane.f32.xlu0 %v1138
    %v1140 = vpop.xlane.xlu0 %1139
    %v1141 = vrcp.pop %v1140
    %v1142 = vmul.f32 %v1140, %v1141
    %v1143 = vsub.f32 1.0, %v1142
    %v1144 = vmul.f32 %v1141, %v1143
    %v1145 = vadd.f32 %v1141, %v1144
    %vm1146 = vweird.f32 %v1140
    %vm1147 = vweird.f32 %v1141
    %vm1148 = vmor %vm1146, %vm1147
    %v1149 = vsel %vm1148, %v1141, %v1145
    %v1150 = vand.u32 2147483647, %v1140
    %vm1151 = vcmp.eq.f32.partialorder %v1150, 8.507059e+37
    %v1152 = vand.u32 %v1140, 2147483648
    %v1153 = vor.u32 1.1754944e-38, %v1152
    %v1154 = vsel %vm1151, %v1153, %v1149
    %v1155 = vmul.f32 %v1137, %v1154
    %v1156 = vpack.c.bf16 %v1155, %v1155
    %1157 = vrot.lane.b32.xlu0 %v900, 72
    %v1158 = vpop.permute.xlu0 %1157
    %v1161 = vsel %vm413, %v1156, 0
    %1163 = vmatpush.bf16.msra.mxu0 0
    %1164 = vmatpush.bf16.msra.mxu0 0
    %1165 = vmatpush.bf16.msra.mxu0 0
    %1166 = vmatpush.bf16.msra.mxu0 0
    %1167 = vmatpush.bf16.msra.mxu0 0
    %1168 = vmatpush.bf16.msra.mxu0 0
    %1169 = vmatpush.bf16.msra.mxu0 0
    %1170 = vmatpush.bf16.msra.mxu0 %v1158
    %1171 = vmatmul.bf16.gmra.mxu0 %v1161
    %v1172 = vpop.f32.mrf.mxu0
    %v1173 = vadd.f32 0.0, %v1172
    %v1174 = vpop.f32.mrf.mxu0
    %1175 = vdwg.mxu0
    %1177 = vrot.lane.b32.xlu0 %v1035, 8
    %v1178 = vpop.permute.xlu0 %1177
    %1181 = vrot.lane.b32.xlu0 %v1104, 16
    %v1182 = vpop.permute.xlu0 %1181
    %1185 = vrot.lane.b32.xlu0 %v1173, 24
    %v1186 = vpop.permute.xlu0 %1185
    %v1188 = vsel %vm116, %v965, %v1178
    %v1189 = vsel %vm413, %v1188, %v1182
    %v1190 = vsel %vm415, %v1189, %v1186
    %v1191 = vpack.c.bf16 %v857, %v857
    %v1192 = vpack.c.bf16 %v897, %v895
    %v1194 = vsel %vm116, %v1191, 0
    %v1197 = vsel %vm116, %v1192, 0
    %1199 = vmatpush.bf16.xpose.msra.mxu0 0
    %1200 = vmatpush.bf16.xpose.msra.mxu0 0
    %1201 = vmatpush.bf16.xpose.msra.mxu0 0
    %1202 = vmatpush.bf16.xpose.msra.mxu0 0
    %1203 = vmatpush.bf16.xpose.msra.mxu0 0
    %1204 = vmatpush.bf16.xpose.msra.mxu0 0
    %1205 = vmatpush.bf16.xpose.msra.mxu0 0
    %1206 = vmatpush.bf16.xpose.msra.mxu0 %v1197
    %1207 = vmatmul.bf16.gmra.mxu0 %v1194
    %v1208 = vpop.f32.mrf.mxu0
    %v1209 = vadd.f32 0.0, %v1208
    %v1210 = vpop.f32.mrf.mxu0
    %1211 = vdwg.mxu0
    %v1212 = vmul.f32 %v1209, 0.35355338
    %v1213 = vperm.slane %v44, 0
    %v1214 = vadd.f32 %v1212, %v1213
    %v1215 = vsel %vm413, %v1214, -inf
    %1216 = vmax.xlane.f32.xlu0 %v1215
    %v1217 = vpop.xlane.xlu0 %1216
    %v1218 = vsub.f32 %v1214, %v1217
    %v1219 = vmul.f32 %v1218, 1.442695
    %v1220 = vpow.pop %v1219
    %v1221 = vsel %vm413, %v1220, 0.0
    %1222 = vadd.xlane.f32.xlu0 %v1221
    %v1223 = vpop.xlane.xlu0 %1222
    %v1224 = vrcp.pop %v1223
    %v1225 = vmul.f32 %v1223, %v1224
    %v1226 = vsub.f32 1.0, %v1225
    %v1227 = vmul.f32 %v1224, %v1226
    %v1228 = vadd.f32 %v1224, %v1227
    %vm1229 = vweird.f32 %v1223
    %vm1230 = vweird.f32 %v1224
    %vm1231 = vmor %vm1229, %vm1230
    %v1232 = vsel %vm1231, %v1224, %v1228
    %v1233 = vand.u32 2147483647, %v1223
    %vm1234 = vcmp.eq.f32.partialorder %v1233, 8.507059e+37
    %v1235 = vand.u32 %v1223, 2147483648
    %v1236 = vor.u32 1.1754944e-38, %v1235
    %v1237 = vsel %vm1234, %v1236, %v1232
    %v1238 = vmul.f32 %v1220, %v1237
    %v1239 = vpack.c.bf16 %v1238, %v1238
    %1241 = vrot.lane.b32.xlu0 %v1192, 96
    %v1242 = vpop.permute.xlu0 %1241
    %v1245 = vsel %vm413, %v1239, 0
    %1247 = vmatpush.bf16.msra.mxu0 0
    %1248 = vmatpush.bf16.msra.mxu0 0
    %1249 = vmatpush.bf16.msra.mxu0 0
    %1250 = vmatpush.bf16.msra.mxu0 0
    %1251 = vmatpush.bf16.msra.mxu0 0
    %1252 = vmatpush.bf16.msra.mxu0 0
    %1253 = vmatpush.bf16.msra.mxu0 0
    %1254 = vmatpush.bf16.msra.mxu0 %v1242
    %1255 = vmatmul.bf16.gmra.mxu0 %v1245
    %v1256 = vpop.f32.mrf.mxu0
    %v1257 = vadd.f32 0.0, %v1256
    %v1258 = vpop.f32.mrf.mxu0
    %1259 = vdwg.mxu0
    %1261 = vrot.lane.b32.xlu0 %v1191, 120
    %v1262 = vpop.permute.xlu0 %1261
    %1263 = vrot.lane.b32.xlu0 %v1192, 120
    %v1264 = vpop.permute.xlu0 %1263
    %v1266 = vsel %vm116, %v1262, 0
    %v1269 = vsel %vm116, %v1264, 0
    %1271 = vmatpush.bf16.xpose.msra.mxu0 0
    %1272 = vmatpush.bf16.xpose.msra.mxu0 0
    %1273 = vmatpush.bf16.xpose.msra.mxu0 0
    %1274 = vmatpush.bf16.xpose.msra.mxu0 0
    %1275 = vmatpush.bf16.xpose.msra.mxu0 0
    %1276 = vmatpush.bf16.xpose.msra.mxu0 0
    %1277 = vmatpush.bf16.xpose.msra.mxu0 0
    %1278 = vmatpush.bf16.xpose.msra.mxu0 %v1269
    %1279 = vmatmul.bf16.gmra.mxu0 %v1266
    %v1280 = vpop.f32.mrf.mxu0
    %v1281 = vadd.f32 0.0, %v1280
    %v1282 = vpop.f32.mrf.mxu0
    %1283 = vdwg.mxu0
    %v1284 = vmul.f32 %v1281, 0.35355338
    %v1285 = vadd.f32 %v1284, %v1213
    %v1286 = vsel %vm413, %v1285, -inf
    %1287 = vmax.xlane.f32.xlu0 %v1286
    %v1288 = vpop.xlane.xlu0 %1287
    %v1289 = vsub.f32 %v1285, %v1288
    %v1290 = vmul.f32 %v1289, 1.442695
    %v1291 = vpow.pop %v1290
    %v1292 = vsel %vm413, %v1291, 0.0
    %1293 = vadd.xlane.f32.xlu0 %v1292
    %v1294 = vpop.xlane.xlu0 %1293
    %v1295 = vrcp.pop %v1294
    %v1296 = vmul.f32 %v1294, %v1295
    %v1297 = vsub.f32 1.0, %v1296
    %v1298 = vmul.f32 %v1295, %v1297
    %v1299 = vadd.f32 %v1295, %v1298
    %vm1300 = vweird.f32 %v1294
    %vm1301 = vweird.f32 %v1295
    %vm1302 = vmor %vm1300, %vm1301
    %v1303 = vsel %vm1302, %v1295, %v1299
    %v1304 = vand.u32 2147483647, %v1294
    %vm1305 = vcmp.eq.f32.partialorder %v1304, 8.507059e+37
    %v1306 = vand.u32 %v1294, 2147483648
    %v1307 = vor.u32 1.1754944e-38, %v1306
    %v1308 = vsel %vm1305, %v1307, %v1303
    %v1309 = vmul.f32 %v1291, %v1308
    %v1310 = vpack.c.bf16 %v1309, %v1309
    %1311 = vrot.lane.b32.xlu0 %v1192, 88
    %v1312 = vpop.permute.xlu0 %1311
    %v1315 = vsel %vm413, %v1310, 0
    %1317 = vmatpush.bf16.msra.mxu0 0
    %1318 = vmatpush.bf16.msra.mxu0 0
    %1319 = vmatpush.bf16.msra.mxu0 0
    %1320 = vmatpush.bf16.msra.mxu0 0
    %1321 = vmatpush.bf16.msra.mxu0 0
    %1322 = vmatpush.bf16.msra.mxu0 0
    %1323 = vmatpush.bf16.msra.mxu0 0
    %1324 = vmatpush.bf16.msra.mxu0 %v1312
    %1325 = vmatmul.bf16.gmra.mxu0 %v1315
    %v1326 = vpop.f32.mrf.mxu0
    %v1327 = vadd.f32 0.0, %v1326
    %v1328 = vpop.f32.mrf.mxu0
    %1329 = vdwg.mxu0
    %1330 = vrot.lane.b32.xlu0 %v1191, 112
    %v1331 = vpop.permute.xlu0 %1330
    %1332 = vrot.lane.b32.xlu0 %v1192, 112
    %v1333 = vpop.permute.xlu0 %1332
    %v1335 = vsel %vm116, %v1331, 0
    %v1338 = vsel %vm116, %v1333, 0
    %1340 = vmatpush.bf16.xpose.msra.mxu0 0
    %1341 = vmatpush.bf16.xpose.msra.mxu0 0
    %1342 = vmatpush.bf16.xpose.msra.mxu0 0
    %1343 = vmatpush.bf16.xpose.msra.mxu0 0
    %1344 = vmatpush.bf16.xpose.msra.mxu0 0
    %1345 = vmatpush.bf16.xpose.msra.mxu0 0
    %1346 = vmatpush.bf16.xpose.msra.mxu0 0
    %1347 = vmatpush.bf16.xpose.msra.mxu0 %v1338
    %1348 = vmatmul.bf16.gmra.mxu0 %v1335
    %v1349 = vpop.f32.mrf.mxu0
    %v1350 = vadd.f32 0.0, %v1349
    %v1351 = vpop.f32.mrf.mxu0
    %1352 = vdwg.mxu0
    %v1353 = vmul.f32 %v1350, 0.35355338
    %v1354 = vadd.f32 %v1353, %v1213
    %v1355 = vsel %vm413, %v1354, -inf
    %1356 = vmax.xlane.f32.xlu0 %v1355
    %v1357 = vpop.xlane.xlu0 %1356
    %v1358 = vsub.f32 %v1354, %v1357
    %v1359 = vmul.f32 %v1358, 1.442695
    %v1360 = vpow.pop %v1359
    %v1361 = vsel %vm413, %v1360, 0.0
    %1362 = vadd.xlane.f32.xlu0 %v1361
    %v1363 = vpop.xlane.xlu0 %1362
    %v1364 = vrcp.pop %v1363
    %v1365 = vmul.f32 %v1363, %v1364
    %v1366 = vsub.f32 1.0, %v1365
    %v1367 = vmul.f32 %v1364, %v1366
    %v1368 = vadd.f32 %v1364, %v1367
    %vm1369 = vweird.f32 %v1363
    %vm1370 = vweird.f32 %v1364
    %vm1371 = vmor %vm1369, %vm1370
    %v1372 = vsel %vm1371, %v1364, %v1368
    %v1373 = vand.u32 2147483647, %v1363
    %vm1374 = vcmp.eq.f32.partialorder %v1373, 8.507059e+37
    %v1375 = vand.u32 %v1363, 2147483648
    %v1376 = vor.u32 1.1754944e-38, %v1375
    %v1377 = vsel %vm1374, %v1376, %v1372
    %v1378 = vmul.f32 %v1360, %v1377
    %v1379 = vpack.c.bf16 %v1378, %v1378
    %1380 = vrot.lane.b32.xlu0 %v1192, 80
    %v1381 = vpop.permute.xlu0 %1380
    %v1384 = vsel %vm413, %v1379, 0
    %1386 = vmatpush.bf16.msra.mxu0 0
    %1387 = vmatpush.bf16.msra.mxu0 0
    %1388 = vmatpush.bf16.msra.mxu0 0
    %1389 = vmatpush.bf16.msra.mxu0 0
    %1390 = vmatpush.bf16.msra.mxu0 0
    %1391 = vmatpush.bf16.msra.mxu0 0
    %1392 = vmatpush.bf16.msra.mxu0 0
    %1393 = vmatpush.bf16.msra.mxu0 %v1381
    %1394 = vmatmul.bf16.gmra.mxu0 %v1384
    %v1395 = vpop.f32.mrf.mxu0
    %v1396 = vadd.f32 0.0, %v1395
    %v1397 = vpop.f32.mrf.mxu0
    %1398 = vdwg.mxu0
    %1399 = vrot.lane.b32.xlu0 %v1191, 104
    %v1400 = vpop.permute.xlu0 %1399
    %1401 = vrot.lane.b32.xlu0 %v1192, 104
    %v1402 = vpop.permute.xlu0 %1401
    %v1404 = vsel %vm116, %v1400, 0
    %v1407 = vsel %vm116, %v1402, 0
    %1409 = vmatpush.bf16.xpose.msra.mxu0 0
    %1410 = vmatpush.bf16.xpose.msra.mxu0 0
    %1411 = vmatpush.bf16.xpose.msra.mxu0 0
    %1412 = vmatpush.bf16.xpose.msra.mxu0 0
    %1413 = vmatpush.bf16.xpose.msra.mxu0 0
    %1414 = vmatpush.bf16.xpose.msra.mxu0 0
    %1415 = vmatpush.bf16.xpose.msra.mxu0 0
    %1416 = vmatpush.bf16.xpose.msra.mxu0 %v1407
    %1417 = vmatmul.bf16.gmra.mxu0 %v1404
    %v1418 = vpop.f32.mrf.mxu0
    %v1419 = vadd.f32 0.0, %v1418
    %v1420 = vpop.f32.mrf.mxu0
    %1421 = vdwg.mxu0
    %v1422 = vmul.f32 %v1419, 0.35355338
    %v1423 = vadd.f32 %v1422, %v1213
    %v1424 = vsel %vm413, %v1423, -inf
    %1425 = vmax.xlane.f32.xlu0 %v1424
    %v1426 = vpop.xlane.xlu0 %1425
    %v1427 = vsub.f32 %v1423, %v1426
    %v1428 = vmul.f32 %v1427, 1.442695
    %v1429 = vpow.pop %v1428
    %v1430 = vsel %vm413, %v1429, 0.0
    %1431 = vadd.xlane.f32.xlu0 %v1430
    %v1432 = vpop.xlane.xlu0 %1431
    %v1433 = vrcp.pop %v1432
    %v1434 = vmul.f32 %v1432, %v1433
    %v1435 = vsub.f32 1.0, %v1434
    %v1436 = vmul.f32 %v1433, %v1435
    %v1437 = vadd.f32 %v1433, %v1436
    %vm1438 = vweird.f32 %v1432
    %vm1439 = vweird.f32 %v1433
    %vm1440 = vmor %vm1438, %vm1439
    %v1441 = vsel %vm1440, %v1433, %v1437
    %v1442 = vand.u32 2147483647, %v1432
    %vm1443 = vcmp.eq.f32.partialorder %v1442, 8.507059e+37
    %v1444 = vand.u32 %v1432, 2147483648
    %v1445 = vor.u32 1.1754944e-38, %v1444
    %v1446 = vsel %vm1443, %v1445, %v1441
    %v1447 = vmul.f32 %v1429, %v1446
    %v1448 = vpack.c.bf16 %v1447, %v1447
    %1449 = vrot.lane.b32.xlu0 %v1192, 72
    %v1450 = vpop.permute.xlu0 %1449
    %v1453 = vsel %vm413, %v1448, 0
    %1455 = vmatpush.bf16.msra.mxu0 0
    %1456 = vmatpush.bf16.msra.mxu0 0
    %1457 = vmatpush.bf16.msra.mxu0 0
    %1458 = vmatpush.bf16.msra.mxu0 0
    %1459 = vmatpush.bf16.msra.mxu0 0
    %1460 = vmatpush.bf16.msra.mxu0 0
    %1461 = vmatpush.bf16.msra.mxu0 0
    %1462 = vmatpush.bf16.msra.mxu0 %v1450
    %1463 = vmatmul.bf16.gmra.mxu0 %v1453
    %v1464 = vpop.f32.mrf.mxu0
    %v1465 = vadd.f32 0.0, %v1464
    %v1466 = vpop.f32.mrf.mxu0
    %1467 = vdwg.mxu0
    %1469 = vrot.lane.b32.xlu0 %v1327, 8
    %v1470 = vpop.permute.xlu0 %1469
    %1473 = vrot.lane.b32.xlu0 %v1396, 16
    %v1474 = vpop.permute.xlu0 %1473
    %1477 = vrot.lane.b32.xlu0 %v1465, 24
    %v1478 = vpop.permute.xlu0 %1477
    %v1480 = vsel %vm116, %v1257, %v1470
    %v1481 = vsel %vm413, %v1480, %v1474
    %v1482 = vsel %vm415, %v1481, %v1478
    %v1483 = vpack.c.bf16 %v1482, %v1190
    %1484 = vrot.lane.b32.xlu0 %v838, 96
    %v1485 = vpop.permute.xlu0 %1484
    %1486 = vrot.lane.b32.xlu0 %v839, 96
    %v1487 = vpop.permute.xlu0 %1486
    %1491 = vrot.lane.b32.xlu0 %v829, 96
    %v1492 = vpop.permute.xlu0 %1491
    %v1495 = vsel %vm69, %v1483, 0
    %1497 = vmatpush.bf16.msra.mxu0 0
    %1498 = vmatpush.bf16.msra.mxu0 0
    %1499 = vmatpush.bf16.msra.mxu0 0
    %1500 = vmatpush.bf16.msra.mxu0 0
    %1501 = vmatpush.bf16.msra.mxu0 0
    %1502 = vmatpush.bf16.msra.mxu0 0
    %1503 = vmatpush.bf16.msra.mxu0 %v1487
    %1504 = vmatpush.bf16.msra.mxu0 %v1485
    %1505 = vmatmul.bf16.gmra.mxu0 %v1495
    %v1506 = vpop.f32.mrf.mxu0
    %v1507 = vadd.f32 %v1492, %v1506
    %v1508 = vpop.f32.mrf.mxu0
    %v1509 = vadd.f32 %v1492, %v1508
    %1510 = vdwg.mxu0
    %v1511 = vadd.f32 %v816, %v1507
    %v1512 = vadd.f32 %v817, %v1509
    %v1513 = vsel %vm69, %v1511, 0.0
    %1514 = vadd.xlane.f32.xlu0 %v1513
    %v1515 = vpop.xlane.xlu0 %1514
    %v1516 = vsel %vm69, %v1512, 0.0
    %1517 = vadd.xlane.f32.xlu0 %v1516
    %v1518 = vpop.xlane.xlu0 %1517
    %v1519 = vmul.f32 %v1515, %v758
    %v1520 = vmul.f32 %v1518, %v758
    %v1521 = vsub.f32 %v1511, %v1519
    %v1522 = vsub.f32 %v1512, %v1520
    %v1523 = vmul.f32 %v1521, %v1521
    %v1524 = vmul.f32 %v1522, %v1522
    %v1525 = vsel %vm69, %v1523, 0.0
    %1526 = vadd.xlane.f32.xlu0 %v1525
    %v1527 = vpop.xlane.xlu0 %1526
    %v1528 = vsel %vm69, %v1524, 0.0
    %1529 = vadd.xlane.f32.xlu0 %v1528
    %v1530 = vpop.xlane.xlu0 %1529
    %v1531 = vmul.f32 %v1527, %v758
    %v1532 = vmul.f32 %v1530, %v758
    %v1533 = vadd.f32 %v1531, 1e-05
    %v1534 = vadd.f32 %v1532, 1e-05
    %v1535 = vrsqrt.pop %v1533
    %v1536 = vmul.f32 %v1535, %v1533
    %v1537 = vmul.f32 %v1536, %v1535
    %v1538 = vmul.f32 0.5, %v1537
    %v1539 = vsub.f32 1.5, %v1538
    %v1540 = vmul.f32 %v1535, %v1539
    %vm1541 = vweird.f32 %v1533
    %vm1542 = vweird.f32 %v1535
    %vm1543 = vmor %vm1541, %vm1542
    %v1544 = vsel %vm1543, %v1535, %v1540
    %v1545 = vrsqrt.pop %v1534
    %v1546 = vmul.f32 %v1545, %v1534
    %v1547 = vmul.f32 %v1546, %v1545
    %v1548 = vmul.f32 0.5, %v1547
    %v1549 = vsub.f32 1.5, %v1548
    %v1550 = vmul.f32 %v1545, %v1549
    %vm1551 = vweird.f32 %v1534
    %vm1552 = vweird.f32 %v1545
    %vm1553 = vmor %vm1551, %vm1552
    %v1554 = vsel %vm1553, %v1545, %v1550
    %v1555 = vmul.f32 %v1521, %v1544
    %v1556 = vmul.f32 %v1522, %v1554
    %v1557 = vperm.slane %v827, 2
    %v1558 = vmul.f32 %v1555, %v1557
    %v1559 = vmul.f32 %v1556, %v1557
    %1561 = vrot.lane.b32.xlu0 %v1557, 96
    %v1562 = vpop.permute.xlu0 %1561
    %v1564 = vadd.f32 %v1558, %v1562
    %v1565 = vadd.f32 %v1559, %v1562
    %v1566 = vmul.f32 %v1564, %v809
    %v1567 = vmul.f32 %v1565, %v814
    %v1568 = vld [vmem:[%s5 + $0x50] sm:$0xf]
    %v1569 = vld [vmem:[%s5 + $0x54] sm:$0xf]
    %v1570 = vld [vmem:[%s5 + $0x58] sm:$0xf]
    %v1571 = vld [vmem:[%s5 + $0x5c] sm:$0xf]
    %v1572 = vld [vmem:[%s5 + $0x60] sm:$0xf]
    %v1573 = vld [vmem:[%s5 + $0x64] sm:$0xf]
    %v1574 = vld [vmem:[%s5 + $0x68] sm:$0xf]
    %v1575 = vld [vmem:[%s5 + $0x6c] sm:$0xf]
    %v1576 = vld [vmem:[%s5 + $0x70] sm:$0x3]
    %v1577 = vunpack.c.l.bf16 %v1576
    %v1578 = vpack.c.bf16 %v1567, %v1566
    %v1579 = vperm.slane %v1577, 0
    %v1584 = vunpack.c.l.b16 %v1568
    %v1585 = vunpack.c.l.b16 %v1569
    %v1586 = vunpack.c.l.b16 %v1570
    %v1587 = vunpack.c.l.b16 %v1571
    %v1588 = vpack.c.b16 %v1585, %v1584
    %v1589 = vpack.c.b16 %v1587, %v1586
    %v1593 = vsel %vm69, %v1578, 0
    %1595 = vmatpush.bf16.msra.mxu0 0
    %1596 = vmatpush.bf16.msra.mxu0 0
    %1597 = vmatpush.bf16.msra.mxu0 0
    %1598 = vmatpush.bf16.msra.mxu0 0
    %1599 = vmatpush.bf16.msra.mxu0 0
    %1600 = vmatpush.bf16.msra.mxu0 0
    %1601 = vmatpush.bf16.msra.mxu0 %v1589
    %1602 = vmatpush.bf16.msra.mxu0 %v1588
    %1603 = vmatmul.bf16.gmra.mxu0 %v1593
    %v1604 = vpop.f32.mrf.mxu0
    %v1605 = vadd.f32 %v1579, %v1604
    %v1606 = vpop.f32.mrf.mxu0
    %v1607 = vadd.f32 %v1579, %v1606
    %1608 = vdwg.mxu0
    %v1609 = vpack.c.bf16 %v32, %v31
    %v1610 = vpack.c.bf16 %v34, %v33
    %v1611 = vperm.slane %v1577, 1
    %v1616 = vunpack.c.l.b16 %v1572
    %v1617 = vunpack.c.l.b16 %v1573
    %v1618 = vunpack.c.l.b16 %v1574
    %v1619 = vunpack.c.l.b16 %v1575
    %v1620 = vpack.c.b16 %v1617, %v1616
    %v1621 = vpack.c.b16 %v1619, %v1618
    %v1625 = vsel %vm69, %v1609, 0
    %v1628 = vsel %vm69, %v1610, 0
    %1630 = vmatpush.bf16.msra.mxu0 0
    %1631 = vmatpush.bf16.msra.mxu0 0
    %1632 = vmatpush.bf16.msra.mxu0 0
    %1633 = vmatpush.bf16.msra.mxu0 0
    %1634 = vmatpush.bf16.msra.mxu0 0
    %1635 = vmatpush.bf16.msra.mxu0 0
    %1636 = vmatpush.bf16.msra.mxu0 %v1621
    %1637 = vmatpush.bf16.msra.mxu0 %v1620
    %1638 = vmatmul.bf16.gmra.mxu0 %v1625
    %v1639 = vpop.f32.mrf.mxu0
    %v1640 = vadd.f32 %v1611, %v1639
    %v1641 = vpop.f32.mrf.mxu0
    %v1642 = vadd.f32 %v1611, %v1641
    %1643 = vmatmul.bf16.gmra.mxu0 %v1628
    %v1644 = vpop.f32.mrf.mxu0
    %v1645 = vadd.f32 %v1611, %v1644
    %v1646 = vpop.f32.mrf.mxu0
    %v1647 = vadd.f32 %v1611, %v1646
    %1648 = vdwg.mxu0
    %v1649 = vpack.c.bf16 %v1605, %v1605
    %v1650 = vpack.c.bf16 %v1642, %v1640
    %v1652 = vsel %vm116, %v1649, 0
    %v1655 = vsel %vm116, %v1650, 0
    %1657 = vmatpush.bf16.xpose.msra.mxu0 0
    %1658 = vmatpush.bf16.xpose.msra.mxu0 0
    %1659 = vmatpush.bf16.xpose.msra.mxu0 0
    %1660 = vmatpush.bf16.xpose.msra.mxu0 0
    %1661 = vmatpush.bf16.xpose.msra.mxu0 0
    %1662 = vmatpush.bf16.xpose.msra.mxu0 0
    %1663 = vmatpush.bf16.xpose.msra.mxu0 0
    %1664 = vmatpush.bf16.xpose.msra.mxu0 %v1655
    %1665 = vmatmul.bf16.gmra.mxu0 %v1652
    %v1666 = vpop.f32.mrf.mxu0
    %v1667 = vadd.f32 0.0, %v1666
    %v1668 = vpop.f32.mrf.mxu0
    %1669 = vdwg.mxu0
    %v1670 = vmul.f32 %v1667, 0.35355338
    %v1671 = vperm.slane %v42, 1
    %v1672 = vadd.f32 %v1670, %v1671
    %v1673 = vsel %vm413, %v1672, -inf
    %1674 = vmax.xlane.f32.xlu0 %v1673
    %v1675 = vpop.xlane.xlu0 %1674
    %v1676 = vsub.f32 %v1672, %v1675
    %v1677 = vmul.f32 %v1676, 1.442695
    %v1678 = vpow.pop %v1677
    %v1679 = vsel %vm413, %v1678, 0.0
    %1680 = vadd.xlane.f32.xlu0 %v1679
    %v1681 = vpop.xlane.xlu0 %1680
    %v1682 = vrcp.pop %v1681
    %v1683 = vmul.f32 %v1681, %v1682
    %v1684 = vsub.f32 1.0, %v1683
    %v1685 = vmul.f32 %v1682, %v1684
    %v1686 = vadd.f32 %v1682, %v1685
    %vm1687 = vweird.f32 %v1681
    %vm1688 = vweird.f32 %v1682
    %vm1689 = vmor %vm1687, %vm1688
    %v1690 = vsel %vm1689, %v1682, %v1686
    %v1691 = vand.u32 2147483647, %v1681
    %vm1692 = vcmp.eq.f32.partialorder %v1691, 8.507059e+37
    %v1693 = vand.u32 %v1681, 2147483648
    %v1694 = vor.u32 1.1754944e-38, %v1693
    %v1695 = vsel %vm1692, %v1694, %v1690
    %v1696 = vmul.f32 %v1678, %v1695
    %v1697 = vpack.c.bf16 %v1696, %v1696
    %1699 = vrot.lane.b32.xlu0 %v1650, 96
    %v1700 = vpop.permute.xlu0 %1699
    %v1703 = vsel %vm413, %v1697, 0
    %1705 = vmatpush.bf16.msra.mxu0 0
    %1706 = vmatpush.bf16.msra.mxu0 0
    %1707 = vmatpush.bf16.msra.mxu0 0
    %1708 = vmatpush.bf16.msra.mxu0 0
    %1709 = vmatpush.bf16.msra.mxu0 0
    %1710 = vmatpush.bf16.msra.mxu0 0
    %1711 = vmatpush.bf16.msra.mxu0 0
    %1712 = vmatpush.bf16.msra.mxu0 %v1700
    %1713 = vmatmul.bf16.gmra.mxu0 %v1703
    %v1714 = vpop.f32.mrf.mxu0
    %v1715 = vadd.f32 0.0, %v1714
    %v1716 = vpop.f32.mrf.mxu0
    %1717 = vdwg.mxu0
    %1719 = vrot.lane.b32.xlu0 %v1649, 120
    %v1720 = vpop.permute.xlu0 %1719
    %1721 = vrot.lane.b32.xlu0 %v1650, 120
    %v1722 = vpop.permute.xlu0 %1721
    %v1724 = vsel %vm116, %v1720, 0
    %v1727 = vsel %vm116, %v1722, 0
    %1729 = vmatpush.bf16.xpose.msra.mxu0 0
    %1730 = vmatpush.bf16.xpose.msra.mxu0 0
    %1731 = vmatpush.bf16.xpose.msra.mxu0 0
    %1732 = vmatpush.bf16.xpose.msra.mxu0 0
    %1733 = vmatpush.bf16.xpose.msra.mxu0 0
    %1734 = vmatpush.bf16.xpose.msra.mxu0 0
    %1735 = vmatpush.bf16.xpose.msra.mxu0 0
    %1736 = vmatpush.bf16.xpose.msra.mxu0 %v1727
    %1737 = vmatmul.bf16.gmra.mxu0 %v1724
    %v1738 = vpop.f32.mrf.mxu0
    %v1739 = vadd.f32 0.0, %v1738
    %v1740 = vpop.f32.mrf.mxu0
    %1741 = vdwg.mxu0
    %v1742 = vmul.f32 %v1739, 0.35355338
    %v1743 = vadd.f32 %v1742, %v1671
    %v1744 = vsel %vm413, %v1743, -inf
    %1745 = vmax.xlane.f32.xlu0 %v1744
    %v1746 = vpop.xlane.xlu0 %1745
    %v1747 = vsub.f32 %v1743, %v1746
    %v1748 = vmul.f32 %v1747, 1.442695
    %v1749 = vpow.pop %v1748
    %v1750 = vsel %vm413, %v1749, 0.0
    %1751 = vadd.xlane.f32.xlu0 %v1750
    %v1752 = vpop.xlane.xlu0 %1751
    %v1753 = vrcp.pop %v1752
    %v1754 = vmul.f32 %v1752, %v1753
    %v1755 = vsub.f32 1.0, %v1754
    %v1756 = vmul.f32 %v1753, %v1755
    %v1757 = vadd.f32 %v1753, %v1756
    %vm1758 = vweird.f32 %v1752
    %vm1759 = vweird.f32 %v1753
    %vm1760 = vmor %vm1758, %vm1759
    %v1761 = vsel %vm1760, %v1753, %v1757
    %v1762 = vand.u32 2147483647, %v1752
    %vm1763 = vcmp.eq.f32.partialorder %v1762, 8.507059e+37
    %v1764 = vand.u32 %v1752, 2147483648
    %v1765 = vor.u32 1.1754944e-38, %v1764
    %v1766 = vsel %vm1763, %v1765, %v1761
    %v1767 = vmul.f32 %v1749, %v1766
    %v1768 = vpack.c.bf16 %v1767, %v1767
    %1769 = vrot.lane.b32.xlu0 %v1650, 88
    %v1770 = vpop.permute.xlu0 %1769
    %v1773 = vsel %vm413, %v1768, 0
    %1775 = vmatpush.bf16.msra.mxu0 0
    %1776 = vmatpush.bf16.msra.mxu0 0
    %1777 = vmatpush.bf16.msra.mxu0 0
    %1778 = vmatpush.bf16.msra.mxu0 0
    %1779 = vmatpush.bf16.msra.mxu0 0
    %1780 = vmatpush.bf16.msra.mxu0 0
    %1781 = vmatpush.bf16.msra.mxu0 0
    %1782 = vmatpush.bf16.msra.mxu0 %v1770
    %1783 = vmatmul.bf16.gmra.mxu0 %v1773
    %v1784 = vpop.f32.mrf.mxu0
    %v1785 = vadd.f32 0.0, %v1784
    %v1786 = vpop.f32.mrf.mxu0
    %1787 = vdwg.mxu0
    %1788 = vrot.lane.b32.xlu0 %v1649, 112
    %v1789 = vpop.permute.xlu0 %1788
    %1790 = vrot.lane.b32.xlu0 %v1650, 112
    %v1791 = vpop.permute.xlu0 %1790
    %v1793 = vsel %vm116, %v1789, 0
    %v1796 = vsel %vm116, %v1791, 0
    %1798 = vmatpush.bf16.xpose.msra.mxu0 0
    %1799 = vmatpush.bf16.xpose.msra.mxu0 0
    %1800 = vmatpush.bf16.xpose.msra.mxu0 0
    %1801 = vmatpush.bf16.xpose.msra.mxu0 0
    %1802 = vmatpush.bf16.xpose.msra.mxu0 0
    %1803 = vmatpush.bf16.xpose.msra.mxu0 0
    %1804 = vmatpush.bf16.xpose.msra.mxu0 0
    %1805 = vmatpush.bf16.xpose.msra.mxu0 %v1796
    %1806 = vmatmul.bf16.gmra.mxu0 %v1793
    %v1807 = vpop.f32.mrf.mxu0
    %v1808 = vadd.f32 0.0, %v1807
    %v1809 = vpop.f32.mrf.mxu0
    %1810 = vdwg.mxu0
    %v1811 = vmul.f32 %v1808, 0.35355338
    %v1812 = vadd.f32 %v1811, %v1671
    %v1813 = vsel %vm413, %v1812, -inf
    %1814 = vmax.xlane.f32.xlu0 %v1813
    %v1815 = vpop.xlane.xlu0 %1814
    %v1816 = vsub.f32 %v1812, %v1815
    %v1817 = vmul.f32 %v1816, 1.442695
    %v1818 = vpow.pop %v1817
    %v1819 = vsel %vm413, %v1818, 0.0
    %1820 = vadd.xlane.f32.xlu0 %v1819
    %v1821 = vpop.xlane.xlu0 %1820
    %v1822 = vrcp.pop %v1821
    %v1823 = vmul.f32 %v1821, %v1822
    %v1824 = vsub.f32 1.0, %v1823
    %v1825 = vmul.f32 %v1822, %v1824
    %v1826 = vadd.f32 %v1822, %v1825
    %vm1827 = vweird.f32 %v1821
    %vm1828 = vweird.f32 %v1822
    %vm1829 = vmor %vm1827, %vm1828
    %v1830 = vsel %vm1829, %v1822, %v1826
    %v1831 = vand.u32 2147483647, %v1821
    %vm1832 = vcmp.eq.f32.partialorder %v1831, 8.507059e+37
    %v1833 = vand.u32 %v1821, 2147483648
    %v1834 = vor.u32 1.1754944e-38, %v1833
    %v1835 = vsel %vm1832, %v1834, %v1830
    %v1836 = vmul.f32 %v1818, %v1835
    %v1837 = vpack.c.bf16 %v1836, %v1836
    %1838 = vrot.lane.b32.xlu0 %v1650, 80
    %v1839 = vpop.permute.xlu0 %1838
    %v1842 = vsel %vm413, %v1837, 0
    %1844 = vmatpush.bf16.msra.mxu0 0
    %1845 = vmatpush.bf16.msra.mxu0 0
    %1846 = vmatpush.bf16.msra.mxu0 0
    %1847 = vmatpush.bf16.msra.mxu0 0
    %1848 = vmatpush.bf16.msra.mxu0 0
    %1849 = vmatpush.bf16.msra.mxu0 0
    %1850 = vmatpush.bf16.msra.mxu0 0
    %1851 = vmatpush.bf16.msra.mxu0 %v1839
    %1852 = vmatmul.bf16.gmra.mxu0 %v1842
    %v1853 = vpop.f32.mrf.mxu0
    %v1854 = vadd.f32 0.0, %v1853
    %v1855 = vpop.f32.mrf.mxu0
    %1856 = vdwg.mxu0
    %1857 = vrot.lane.b32.xlu0 %v1649, 104
    %v1858 = vpop.permute.xlu0 %1857
    %1859 = vrot.lane.b32.xlu0 %v1650, 104
    %v1860 = vpop.permute.xlu0 %1859
    %v1862 = vsel %vm116, %v1858, 0
    %v1865 = vsel %vm116, %v1860, 0
    %1867 = vmatpush.bf16.xpose.msra.mxu0 0
    %1868 = vmatpush.bf16.xpose.msra.mxu0 0
    %1869 = vmatpush.bf16.xpose.msra.mxu0 0
    %1870 = vmatpush.bf16.xpose.msra.mxu0 0
    %1871 = vmatpush.bf16.xpose.msra.mxu0 0
    %1872 = vmatpush.bf16.xpose.msra.mxu0 0
    %1873 = vmatpush.bf16.xpose.msra.mxu0 0
    %1874 = vmatpush.bf16.xpose.msra.mxu0 %v1865
    %1875 = vmatmul.bf16.gmra.mxu0 %v1862
    %v1876 = vpop.f32.mrf.mxu0
    %v1877 = vadd.f32 0.0, %v1876
    %v1878 = vpop.f32.mrf.mxu0
    %1879 = vdwg.mxu0
    %v1880 = vmul.f32 %v1877, 0.35355338
    %v1881 = vadd.f32 %v1880, %v1671
    %v1882 = vsel %vm413, %v1881, -inf
    %1883 = vmax.xlane.f32.xlu0 %v1882
    %v1884 = vpop.xlane.xlu0 %1883
    %v1885 = vsub.f32 %v1881, %v1884
    %v1886 = vmul.f32 %v1885, 1.442695
    %v1887 = vpow.pop %v1886
    %v1888 = vsel %vm413, %v1887, 0.0
    %1889 = vadd.xlane.f32.xlu0 %v1888
    %v1890 = vpop.xlane.xlu0 %1889
    %v1891 = vrcp.pop %v1890
    %v1892 = vmul.f32 %v1890, %v1891
    %v1893 = vsub.f32 1.0, %v1892
    %v1894 = vmul.f32 %v1891, %v1893
    %v1895 = vadd.f32 %v1891, %v1894
    %vm1896 = vweird.f32 %v1890
    %vm1897 = vweird.f32 %v1891
    %vm1898 = vmor %vm1896, %vm1897
    %v1899 = vsel %vm1898, %v1891, %v1895
    %v1900 = vand.u32 2147483647, %v1890
    %vm1901 = vcmp.eq.f32.partialorder %v1900, 8.507059e+37
    %v1902 = vand.u32 %v1890, 2147483648
    %v1903 = vor.u32 1.1754944e-38, %v1902
    %v1904 = vsel %vm1901, %v1903, %v1899
    %v1905 = vmul.f32 %v1887, %v1904
    %v1906 = vpack.c.bf16 %v1905, %v1905
    %1907 = vrot.lane.b32.xlu0 %v1650, 72
    %v1908 = vpop.permute.xlu0 %1907
    %v1911 = vsel %vm413, %v1906, 0
    %1913 = vmatpush.bf16.msra.mxu0 0
    %1914 = vmatpush.bf16.msra.mxu0 0
    %1915 = vmatpush.bf16.msra.mxu0 0
    %1916 = vmatpush.bf16.msra.mxu0 0
    %1917 = vmatpush.bf16.msra.mxu0 0
    %1918 = vmatpush.bf16.msra.mxu0 0
    %1919 = vmatpush.bf16.msra.mxu0 0
    %1920 = vmatpush.bf16.msra.mxu0 %v1908
    %1921 = vmatmul.bf16.gmra.mxu0 %v1911
    %v1922 = vpop.f32.mrf.mxu0
    %v1923 = vadd.f32 0.0, %v1922
    %v1924 = vpop.f32.mrf.mxu0
    %1925 = vdwg.mxu0
    %1927 = vrot.lane.b32.xlu0 %v1785, 8
    %v1928 = vpop.permute.xlu0 %1927
    %1931 = vrot.lane.b32.xlu0 %v1854, 16
    %v1932 = vpop.permute.xlu0 %1931
    %1935 = vrot.lane.b32.xlu0 %v1923, 24
    %v1936 = vpop.permute.xlu0 %1935
    %v1938 = vsel %vm116, %v1715, %v1928
    %v1939 = vsel %vm413, %v1938, %v1932
    %v1940 = vsel %vm415, %v1939, %v1936
    %v1941 = vpack.c.bf16 %v1607, %v1607
    %v1942 = vpack.c.bf16 %v1647, %v1645
    %v1944 = vsel %vm116, %v1941, 0
    %v1947 = vsel %vm116, %v1942, 0
    %1949 = vmatpush.bf16.xpose.msra.mxu0 0
    %1950 = vmatpush.bf16.xpose.msra.mxu0 0
    %1951 = vmatpush.bf16.xpose.msra.mxu0 0
    %1952 = vmatpush.bf16.xpose.msra.mxu0 0
    %1953 = vmatpush.bf16.xpose.msra.mxu0 0
    %1954 = vmatpush.bf16.xpose.msra.mxu0 0
    %1955 = vmatpush.bf16.xpose.msra.mxu0 0
    %1956 = vmatpush.bf16.xpose.msra.mxu0 %v1947
    %1957 = vmatmul.bf16.gmra.mxu0 %v1944
    %v1958 = vpop.f32.mrf.mxu0
    %v1959 = vadd.f32 0.0, %v1958
    %v1960 = vpop.f32.mrf.mxu0
    %1961 = vdwg.mxu0
    %v1962 = vmul.f32 %v1959, 0.35355338
    %v1963 = vperm.slane %v44, 1
    %v1964 = vadd.f32 %v1962, %v1963
    %v1965 = vsel %vm413, %v1964, -inf
    %1966 = vmax.xlane.f32.xlu0 %v1965
    %v1967 = vpop.xlane.xlu0 %1966
    %v1968 = vsub.f32 %v1964, %v1967
    %v1969 = vmul.f32 %v1968, 1.442695
    %v1970 = vpow.pop %v1969
    %v1971 = vsel %vm413, %v1970, 0.0
    %1972 = vadd.xlane.f32.xlu0 %v1971
    %v1973 = vpop.xlane.xlu0 %1972
    %v1974 = vrcp.pop %v1973
    %v1975 = vmul.f32 %v1973, %v1974
    %v1976 = vsub.f32 1.0, %v1975
    %v1977 = vmul.f32 %v1974, %v1976
    %v1978 = vadd.f32 %v1974, %v1977
    %vm1979 = vweird.f32 %v1973
    %vm1980 = vweird.f32 %v1974
    %vm1981 = vmor %vm1979, %vm1980
    %v1982 = vsel %vm1981, %v1974, %v1978
    %v1983 = vand.u32 2147483647, %v1973
    %vm1984 = vcmp.eq.f32.partialorder %v1983, 8.507059e+37
    %v1985 = vand.u32 %v1973, 2147483648
    %v1986 = vor.u32 1.1754944e-38, %v1985
    %v1987 = vsel %vm1984, %v1986, %v1982
    %v1988 = vmul.f32 %v1970, %v1987
    %v1989 = vpack.c.bf16 %v1988, %v1988
    %1991 = vrot.lane.b32.xlu0 %v1942, 96
    %v1992 = vpop.permute.xlu0 %1991
    %v1995 = vsel %vm413, %v1989, 0
    %1997 = vmatpush.bf16.msra.mxu0 0
    %1998 = vmatpush.bf16.msra.mxu0 0
    %1999 = vmatpush.bf16.msra.mxu0 0
    %2000 = vmatpush.bf16.msra.mxu0 0
    %2001 = vmatpush.bf16.msra.mxu0 0
    %2002 = vmatpush.bf16.msra.mxu0 0
    %2003 = vmatpush.bf16.msra.mxu0 0
    %2004 = vmatpush.bf16.msra.mxu0 %v1992
    %2005 = vmatmul.bf16.gmra.mxu0 %v1995
    %v2006 = vpop.f32.mrf.mxu0
    %v2007 = vadd.f32 0.0, %v2006
    %v2008 = vpop.f32.mrf.mxu0
    %2009 = vdwg.mxu0
    %2011 = vrot.lane.b32.xlu0 %v1941, 120
    %v2012 = vpop.permute.xlu0 %2011
    %2013 = vrot.lane.b32.xlu0 %v1942, 120
    %v2014 = vpop.permute.xlu0 %2013
    %v2016 = vsel %vm116, %v2012, 0
    %v2019 = vsel %vm116, %v2014, 0
    %2021 = vmatpush.bf16.xpose.msra.mxu0 0
    %2022 = vmatpush.bf16.xpose.msra.mxu0 0
    %2023 = vmatpush.bf16.xpose.msra.mxu0 0
    %2024 = vmatpush.bf16.xpose.msra.mxu0 0
    %2025 = vmatpush.bf16.xpose.msra.mxu0 0
    %2026 = vmatpush.bf16.xpose.msra.mxu0 0
    %2027 = vmatpush.bf16.xpose.msra.mxu0 0
    %2028 = vmatpush.bf16.xpose.msra.mxu0 %v2019
    %2029 = vmatmul.bf16.gmra.mxu0 %v2016
    %v2030 = vpop.f32.mrf.mxu0
    %v2031 = vadd.f32 0.0, %v2030
    %v2032 = vpop.f32.mrf.mxu0
    %2033 = vdwg.mxu0
    %v2034 = vmul.f32 %v2031, 0.35355338
    %v2035 = vadd.f32 %v2034, %v1963
    %v2036 = vsel %vm413, %v2035, -inf
    %2037 = vmax.xlane.f32.xlu0 %v2036
    %v2038 = vpop.xlane.xlu0 %2037
    %v2039 = vsub.f32 %v2035, %v2038
    %v2040 = vmul.f32 %v2039, 1.442695
    %v2041 = vpow.pop %v2040
    %v2042 = vsel %vm413, %v2041, 0.0
    %2043 = vadd.xlane.f32.xlu0 %v2042
    %v2044 = vpop.xlane.xlu0 %2043
    %v2045 = vrcp.pop %v2044
    %v2046 = vmul.f32 %v2044, %v2045
    %v2047 = vsub.f32 1.0, %v2046
    %v2048 = vmul.f32 %v2045, %v2047
    %v2049 = vadd.f32 %v2045, %v2048
    %vm2050 = vweird.f32 %v2044
    %vm2051 = vweird.f32 %v2045
    %vm2052 = vmor %vm2050, %vm2051
    %v2053 = vsel %vm2052, %v2045, %v2049
    %v2054 = vand.u32 2147483647, %v2044
    %vm2055 = vcmp.eq.f32.partialorder %v2054, 8.507059e+37
    %v2056 = vand.u32 %v2044, 2147483648
    %v2057 = vor.u32 1.1754944e-38, %v2056
    %v2058 = vsel %vm2055, %v2057, %v2053
    %v2059 = vmul.f32 %v2041, %v2058
    %v2060 = vpack.c.bf16 %v2059, %v2059
    %2061 = vrot.lane.b32.xlu0 %v1942, 88
    %v2062 = vpop.permute.xlu0 %2061
    %v2065 = vsel %vm413, %v2060, 0
    %2067 = vmatpush.bf16.msra.mxu0 0
    %2068 = vmatpush.bf16.msra.mxu0 0
    %2069 = vmatpush.bf16.msra.mxu0 0
    %2070 = vmatpush.bf16.msra.mxu0 0
    %2071 = vmatpush.bf16.msra.mxu0 0
    %2072 = vmatpush.bf16.msra.mxu0 0
    %2073 = vmatpush.bf16.msra.mxu0 0
    %2074 = vmatpush.bf16.msra.mxu0 %v2062
    %2075 = vmatmul.bf16.gmra.mxu0 %v2065
    %v2076 = vpop.f32.mrf.mxu0
    %v2077 = vadd.f32 0.0, %v2076
    %v2078 = vpop.f32.mrf.mxu0
    %2079 = vdwg.mxu0
    %2080 = vrot.lane.b32.xlu0 %v1941, 112
    %v2081 = vpop.permute.xlu0 %2080
    %2082 = vrot.lane.b32.xlu0 %v1942, 112
    %v2083 = vpop.permute.xlu0 %2082
    %v2085 = vsel %vm116, %v2081, 0
    %v2088 = vsel %vm116, %v2083, 0
    %2090 = vmatpush.bf16.xpose.msra.mxu0 0
    %2091 = vmatpush.bf16.xpose.msra.mxu0 0
    %2092 = vmatpush.bf16.xpose.msra.mxu0 0
    %2093 = vmatpush.bf16.xpose.msra.mxu0 0
    %2094 = vmatpush.bf16.xpose.msra.mxu0 0
    %2095 = vmatpush.bf16.xpose.msra.mxu0 0
    %2096 = vmatpush.bf16.xpose.msra.mxu0 0
    %2097 = vmatpush.bf16.xpose.msra.mxu0 %v2088
    %2098 = vmatmul.bf16.gmra.mxu0 %v2085
    %v2099 = vpop.f32.mrf.mxu0
    %v2100 = vadd.f32 0.0, %v2099
    %v2101 = vpop.f32.mrf.mxu0
    %2102 = vdwg.mxu0
    %v2103 = vmul.f32 %v2100, 0.35355338
    %v2104 = vadd.f32 %v2103, %v1963
    %v2105 = vsel %vm413, %v2104, -inf
    %2106 = vmax.xlane.f32.xlu0 %v2105
    %v2107 = vpop.xlane.xlu0 %2106
    %v2108 = vsub.f32 %v2104, %v2107
    %v2109 = vmul.f32 %v2108, 1.442695
    %v2110 = vpow.pop %v2109
    %v2111 = vsel %vm413, %v2110, 0.0
    %2112 = vadd.xlane.f32.xlu0 %v2111
    %v2113 = vpop.xlane.xlu0 %2112
    %v2114 = vrcp.pop %v2113
    %v2115 = vmul.f32 %v2113, %v2114
    %v2116 = vsub.f32 1.0, %v2115
    %v2117 = vmul.f32 %v2114, %v2116
    %v2118 = vadd.f32 %v2114, %v2117
    %vm2119 = vweird.f32 %v2113
    %vm2120 = vweird.f32 %v2114
    %vm2121 = vmor %vm2119, %vm2120
    %v2122 = vsel %vm2121, %v2114, %v2118
    %v2123 = vand.u32 2147483647, %v2113
    %vm2124 = vcmp.eq.f32.partialorder %v2123, 8.507059e+37
    %v2125 = vand.u32 %v2113, 2147483648
    %v2126 = vor.u32 1.1754944e-38, %v2125
    %v2127 = vsel %vm2124, %v2126, %v2122
    %v2128 = vmul.f32 %v2110, %v2127
    %v2129 = vpack.c.bf16 %v2128, %v2128
    %2130 = vrot.lane.b32.xlu0 %v1942, 80
    %v2131 = vpop.permute.xlu0 %2130
    %v2134 = vsel %vm413, %v2129, 0
    %2136 = vmatpush.bf16.msra.mxu0 0
    %2137 = vmatpush.bf16.msra.mxu0 0
    %2138 = vmatpush.bf16.msra.mxu0 0
    %2139 = vmatpush.bf16.msra.mxu0 0
    %2140 = vmatpush.bf16.msra.mxu0 0
    %2141 = vmatpush.bf16.msra.mxu0 0
    %2142 = vmatpush.bf16.msra.mxu0 0
    %2143 = vmatpush.bf16.msra.mxu0 %v2131
    %2144 = vmatmul.bf16.gmra.mxu0 %v2134
    %v2145 = vpop.f32.mrf.mxu0
    %v2146 = vadd.f32 0.0, %v2145
    %v2147 = vpop.f32.mrf.mxu0
    %2148 = vdwg.mxu0
    %2149 = vrot.lane.b32.xlu0 %v1941, 104
    %v2150 = vpop.permute.xlu0 %2149
    %2151 = vrot.lane.b32.xlu0 %v1942, 104
    %v2152 = vpop.permute.xlu0 %2151
    %v2154 = vsel %vm116, %v2150, 0
    %v2157 = vsel %vm116, %v2152, 0
    %2159 = vmatpush.bf16.xpose.msra.mxu0 0
    %2160 = vmatpush.bf16.xpose.msra.mxu0 0
    %2161 = vmatpush.bf16.xpose.msra.mxu0 0
    %2162 = vmatpush.bf16.xpose.msra.mxu0 0
    %2163 = vmatpush.bf16.xpose.msra.mxu0 0
    %2164 = vmatpush.bf16.xpose.msra.mxu0 0
    %2165 = vmatpush.bf16.xpose.msra.mxu0 0
    %2166 = vmatpush.bf16.xpose.msra.mxu0 %v2157
    %2167 = vmatmul.bf16.gmra.mxu0 %v2154
    %v2168 = vpop.f32.mrf.mxu0
    %v2169 = vadd.f32 0.0, %v2168
    %v2170 = vpop.f32.mrf.mxu0
    %2171 = vdwg.mxu0
    %v2172 = vmul.f32 %v2169, 0.35355338
    %v2173 = vadd.f32 %v2172, %v1963
    %v2174 = vsel %vm413, %v2173, -inf
    %2175 = vmax.xlane.f32.xlu0 %v2174
    %v2176 = vpop.xlane.xlu0 %2175
    %v2177 = vsub.f32 %v2173, %v2176
    %v2178 = vmul.f32 %v2177, 1.442695
    %v2179 = vpow.pop %v2178
    %v2180 = vsel %vm413, %v2179, 0.0
    %2181 = vadd.xlane.f32.xlu0 %v2180
    %v2182 = vpop.xlane.xlu0 %2181
    %v2183 = vrcp.pop %v2182
    %v2184 = vmul.f32 %v2182, %v2183
    %v2185 = vsub.f32 1.0, %v2184
    %v2186 = vmul.f32 %v2183, %v2185
    %v2187 = vadd.f32 %v2183, %v2186
    %vm2188 = vweird.f32 %v2182
    %vm2189 = vweird.f32 %v2183
    %vm2190 = vmor %vm2188, %vm2189
    %v2191 = vsel %vm2190, %v2183, %v2187
    %v2192 = vand.u32 2147483647, %v2182
    %vm2193 = vcmp.eq.f32.partialorder %v2192, 8.507059e+37
    %v2194 = vand.u32 %v2182, 2147483648
    %v2195 = vor.u32 1.1754944e-38, %v2194
    %v2196 = vsel %vm2193, %v2195, %v2191
    %v2197 = vmul.f32 %v2179, %v2196
    %v2198 = vpack.c.bf16 %v2197, %v2197
    %2199 = vrot.lane.b32.xlu0 %v1942, 72
    %v2200 = vpop.permute.xlu0 %2199
    %v2203 = vsel %vm413, %v2198, 0
    %2205 = vmatpush.bf16.msra.mxu0 0
    %2206 = vmatpush.bf16.msra.mxu0 0
    %2207 = vmatpush.bf16.msra.mxu0 0
    %2208 = vmatpush.bf16.msra.mxu0 0
    %2209 = vmatpush.bf16.msra.mxu0 0
    %2210 = vmatpush.bf16.msra.mxu0 0
    %2211 = vmatpush.bf16.msra.mxu0 0
    %2212 = vmatpush.bf16.msra.mxu0 %v2200
    %2213 = vmatmul.bf16.gmra.mxu0 %v2203
    %v2214 = vpop.f32.mrf.mxu0
    %v2215 = vadd.f32 0.0, %v2214
    %v2216 = vpop.f32.mrf.mxu0
    %2217 = vdwg.mxu0
    %2219 = vrot.lane.b32.xlu0 %v2077, 8
    %v2220 = vpop.permute.xlu0 %2219
    %2223 = vrot.lane.b32.xlu0 %v2146, 16
    %v2224 = vpop.permute.xlu0 %2223
    %2227 = vrot.lane.b32.xlu0 %v2215, 24
    %v2228 = vpop.permute.xlu0 %2227
    %v2230 = vsel %vm116, %v2007, %v2220
    %v2231 = vsel %vm413, %v2230, %v2224
    %v2232 = vsel %vm415, %v2231, %v2228
    %v2233 = vpack.c.bf16 %v2232, %v1940
    %2234 = vrot.lane.b32.xlu0 %v1588, 96
    %v2235 = vpop.permute.xlu0 %2234
    %2236 = vrot.lane.b32.xlu0 %v1589, 96
    %v2237 = vpop.permute.xlu0 %2236
    %2241 = vrot.lane.b32.xlu0 %v1579, 96
    %v2242 = vpop.permute.xlu0 %2241
    %v2245 = vsel %vm69, %v2233, 0
    %2247 = vmatpush.bf16.msra.mxu0 0
    %2248 = vmatpush.bf16.msra.mxu0 0
    %2249 = vmatpush.bf16.msra.mxu0 0
    %2250 = vmatpush.bf16.msra.mxu0 0
    %2251 = vmatpush.bf16.msra.mxu0 0
    %2252 = vmatpush.bf16.msra.mxu0 0
    %2253 = vmatpush.bf16.msra.mxu0 %v2237
    %2254 = vmatpush.bf16.msra.mxu0 %v2235
    %2255 = vmatmul.bf16.gmra.mxu0 %v2245
    %v2256 = vpop.f32.mrf.mxu0
    %v2257 = vadd.f32 %v2242, %v2256
    %v2258 = vpop.f32.mrf.mxu0
    %v2259 = vadd.f32 %v2242, %v2258
    %2260 = vdwg.mxu0
    %v2261 = vadd.f32 %v1566, %v2257
    %v2262 = vadd.f32 %v1567, %v2259
    %v2263 = vsel %vm69, %v2261, 0.0
    %2264 = vadd.xlane.f32.xlu0 %v2263
    %v2265 = vpop.xlane.xlu0 %2264
    %v2266 = vsel %vm69, %v2262, 0.0
    %2267 = vadd.xlane.f32.xlu0 %v2266
    %v2268 = vpop.xlane.xlu0 %2267
    %v2269 = vmul.f32 %v2265, %v758
    %v2270 = vmul.f32 %v2268, %v758
    %v2271 = vsub.f32 %v2261, %v2269
    %v2272 = vsub.f32 %v2262, %v2270
    %v2273 = vmul.f32 %v2271, %v2271
    %v2274 = vmul.f32 %v2272, %v2272
    %v2275 = vsel %vm69, %v2273, 0.0
    %2276 = vadd.xlane.f32.xlu0 %v2275
    %v2277 = vpop.xlane.xlu0 %2276
    %v2278 = vsel %vm69, %v2274, 0.0
    %2279 = vadd.xlane.f32.xlu0 %v2278
    %v2280 = vpop.xlane.xlu0 %2279
    %v2281 = vmul.f32 %v2277, %v758
    %v2282 = vmul.f32 %v2280, %v758
    %v2283 = vadd.f32 %v2281, 1e-05
    %v2284 = vadd.f32 %v2282, 1e-05
    %v2285 = vrsqrt.pop %v2283
    %v2286 = vmul.f32 %v2285, %v2283
    %v2287 = vmul.f32 %v2286, %v2285
    %v2288 = vmul.f32 0.5, %v2287
    %v2289 = vsub.f32 1.5, %v2288
    %v2290 = vmul.f32 %v2285, %v2289
    %vm2291 = vweird.f32 %v2283
    %vm2292 = vweird.f32 %v2285
    %vm2293 = vmor %vm2291, %vm2292
    %v2294 = vsel %vm2293, %v2285, %v2290
    %v2295 = vrsqrt.pop %v2284
    %v2296 = vmul.f32 %v2295, %v2284
    %v2297 = vmul.f32 %v2296, %v2295
    %v2298 = vmul.f32 0.5, %v2297
    %v2299 = vsub.f32 1.5, %v2298
    %v2300 = vmul.f32 %v2295, %v2299
    %vm2301 = vweird.f32 %v2284
    %vm2302 = vweird.f32 %v2295
    %vm2303 = vmor %vm2301, %vm2302
    %v2304 = vsel %vm2303, %v2295, %v2300
    %v2305 = vmul.f32 %v2271, %v2294
    %v2306 = vmul.f32 %v2272, %v2304
    %v2307 = vperm.slane %v1577, 2
    %v2308 = vmul.f32 %v2305, %v2307
    %v2309 = vmul.f32 %v2306, %v2307
    %2311 = vrot.lane.b32.xlu0 %v2307, 96
    %v2312 = vpop.permute.xlu0 %2311
    %v2314 = vadd.f32 %v2308, %v2312
    %v2315 = vadd.f32 %v2309, %v2312
    %v2316 = vmul.f32 %v2314, %v809
    %v2317 = vmul.f32 %v2315, %v814
    %v2318 = vld [vmem:[%s5 + $0x78] sm:$0xf]
    %v2319 = vld [vmem:[%s5 + $0x7c] sm:$0xf]
    %v2320 = vld [vmem:[%s5 + $0x80] sm:$0xf]
    %v2321 = vld [vmem:[%s5 + $0x84] sm:$0xf]
    %v2322 = vld [vmem:[%s5 + $0x88] sm:$0xf]
    %v2323 = vld [vmem:[%s5 + $0x8c] sm:$0xf]
    %v2324 = vld [vmem:[%s5 + $0x90] sm:$0xf]
    %v2325 = vld [vmem:[%s5 + $0x94] sm:$0xf]
    %v2326 = vld [vmem:[%s5 + $0x98] sm:$0xf]
    %v2327 = vld [vmem:[%s5 + $0x9c] sm:$0xf]
    %v2328 = vld [vmem:[%s5 + $0xa0] sm:$0xf]
    %v2329 = vld [vmem:[%s5 + $0xa4] sm:$0xf]
    %v2330 = vld [vmem:[%s5 + $0xa8] sm:$0x3]
    %v2331 = vunpack.c.l.bf16 %v2330
    %v2332 = vpack.c.bf16 %v2317, %v2316
    %v2333 = vperm.slane %v2331, 0
    %v2338 = vunpack.c.l.b16 %v2318
    %v2339 = vunpack.c.l.b16 %v2319
    %v2340 = vunpack.c.l.b16 %v2320
    %v2341 = vunpack.c.l.b16 %v2321
    %v2342 = vpack.c.b16 %v2339, %v2338
    %v2343 = vpack.c.b16 %v2341, %v2340
    %v2347 = vsel %vm69, %v2332, 0
    %2349 = vmatpush.bf16.msra.mxu0 0
    %2350 = vmatpush.bf16.msra.mxu0 0
    %2351 = vmatpush.bf16.msra.mxu0 0
    %2352 = vmatpush.bf16.msra.mxu0 0
    %2353 = vmatpush.bf16.msra.mxu0 0
    %2354 = vmatpush.bf16.msra.mxu0 0
    %2355 = vmatpush.bf16.msra.mxu0 %v2343
    %2356 = vmatpush.bf16.msra.mxu0 %v2342
    %2357 = vmatmul.bf16.gmra.mxu0 %v2347
    %v2358 = vpop.f32.mrf.mxu0
    %v2359 = vadd.f32 %v2333, %v2358
    %v2360 = vpop.f32.mrf.mxu0
    %v2361 = vadd.f32 %v2333, %v2360
    %2362 = vdwg.mxu0
    %v2363 = vmax.f32 %v2359, 0.0
    %v2364 = vmax.f32 %v2361, 0.0
    %v2365 = vpack.c.bf16 %v2364, %v2363
    %v2366 = vperm.slane %v2331, 1
    %v2375 = vunpack.c.l.b16 %v2322
    %v2376 = vunpack.c.l.b16 %v2323
    %v2377 = vunpack.c.l.b16 %v2324
    %v2378 = vunpack.c.l.b16 %v2325
    %v2379 = vunpack.c.l.b16 %v2326
    %v2380 = vunpack.c.l.b16 %v2327
    %v2381 = vunpack.c.l.b16 %v2328
    %v2382 = vunpack.c.l.b16 %v2329
    %v2383 = vpack.c.b16 %v2376, %v2375
    %v2384 = vpack.c.b16 %v2378, %v2377
    %v2385 = vpack.c.b16 %v2380, %v2379
    %v2386 = vpack.c.b16 %v2382, %v2381
    %vm2391 = vcmask 523264
    %v2393 = vsel %vm2391, %v2365, 0
    %2395 = vmatpush.bf16.msra.mxu0 0
    %2396 = vmatpush.bf16.msra.mxu0 0
    %2397 = vmatpush.bf16.msra.mxu0 0
    %2398 = vmatpush.bf16.msra.mxu0 0
    %2399 = vmatpush.bf16.msra.mxu0 %v2386
    %2400 = vmatpush.bf16.msra.mxu0 %v2385
    %2401 = vmatpush.bf16.msra.mxu0 %v2384
    %2402 = vmatpush.bf16.msra.mxu0 %v2383
    %2403 = vmatmul.bf16.gmra.mxu0 %v2393
    %v2404 = vpop.f32.mrf.mxu0
    %v2405 = vadd.f32 %v2366, %v2404
    %v2406 = vpop.f32.mrf.mxu0
    %v2407 = vadd.f32 %v2366, %v2406
    %2408 = vdwg.mxu0
    %v2409 = vadd.f32 %v2316, %v2405
    %v2410 = vadd.f32 %v2317, %v2407
    %v2411 = vsel %vm69, %v2409, 0.0
    %2412 = vadd.xlane.f32.xlu0 %v2411
    %v2413 = vpop.xlane.xlu0 %2412
    %v2414 = vsel %vm69, %v2410, 0.0
    %2415 = vadd.xlane.f32.xlu0 %v2414
    %v2416 = vpop.xlane.xlu0 %2415
    %v2417 = vmul.f32 %v2413, %v758
    %v2418 = vmul.f32 %v2416, %v758
    %v2419 = vsub.f32 %v2409, %v2417
    %v2420 = vsub.f32 %v2410, %v2418
    %v2421 = vmul.f32 %v2419, %v2419
    %v2422 = vmul.f32 %v2420, %v2420
    %v2423 = vsel %vm69, %v2421, 0.0
    %2424 = vadd.xlane.f32.xlu0 %v2423
    %v2425 = vpop.xlane.xlu0 %2424
    %v2426 = vsel %vm69, %v2422, 0.0
    %2427 = vadd.xlane.f32.xlu0 %v2426
    %v2428 = vpop.xlane.xlu0 %2427
    %v2429 = vmul.f32 %v2425, %v758
    %v2430 = vmul.f32 %v2428, %v758
    %v2431 = vadd.f32 %v2429, 1e-05
    %v2432 = vadd.f32 %v2430, 1e-05
    %v2433 = vrsqrt.pop %v2431
    %v2434 = vmul.f32 %v2433, %v2431
    %v2435 = vmul.f32 %v2434, %v2433
    %v2436 = vmul.f32 0.5, %v2435
    %v2437 = vsub.f32 1.5, %v2436
    %v2438 = vmul.f32 %v2433, %v2437
    %vm2439 = vweird.f32 %v2431
    %vm2440 = vweird.f32 %v2433
    %vm2441 = vmor %vm2439, %vm2440
    %v2442 = vsel %vm2441, %v2433, %v2438
    %v2443 = vrsqrt.pop %v2432
    %v2444 = vmul.f32 %v2443, %v2432
    %v2445 = vmul.f32 %v2444, %v2443
    %v2446 = vmul.f32 0.5, %v2445
    %v2447 = vsub.f32 1.5, %v2446
    %v2448 = vmul.f32 %v2443, %v2447
    %vm2449 = vweird.f32 %v2432
    %vm2450 = vweird.f32 %v2443
    %vm2451 = vmor %vm2449, %vm2450
    %v2452 = vsel %vm2451, %v2443, %v2448
    %v2453 = vmul.f32 %v2419, %v2442
    %v2454 = vmul.f32 %v2420, %v2452
    %2456 = vrot.lane.b32.xlu0 %v2366, 96
    %v2457 = vpop.permute.xlu0 %2456
    %v2459 = vmul.f32 %v2453, %v2457
    %v2460 = vmul.f32 %v2454, %v2457
    %v2461 = vperm.slane %v2331, 2
    %v2462 = vadd.f32 %v2459, %v2461
    %v2463 = vadd.f32 %v2460, %v2461
    %v2464 = vmul.f32 %v2462, %v809
    %v2465 = vmul.f32 %v2463, %v814
    %2466 = vst.msk [vmem:[#allocation2] sm:$0xff] %vm69, %v2464
    %2467 = vst.msk [vmem:[#allocation2 + $0x8] sm:$0xff] %vm69, %v2465
    // Predicated region
    $region26: #{tpu_custom_call.1} parent=1 // pred_check
      _
    $region27: #{tpu_custom_call.1} parent=1 // pred_check_branch
      %2469 = sbr.rel (0) target = $region29
    $region28: #{tpu_custom_call.1} parent=1 // pred_region
      %2471 = vsyncadd [#allocation3], 0
      %s2472 = sshll.u32 [#allocation2], 4
      %s2473 = int_to_ptr.vmem [resolvable:$true] %s2472
      %s2474 = sshll.u32 %s6, 4
      %s2475 = int_to_ptr.hbm [resolvable:$true] %s2474
      %2480 = dma.vmem_to_hbm [thread:$0]  %s2473, 256, %s2475, [#allocation3], 128, 128, 8
    $region29: #{tpu_custom_call.1} parent=1 // pred_fallthru
      _
    // Predicated region
    $region30: #{tpu_custom_call.1} parent=1 // pred_check
      _
    $region31: #{tpu_custom_call.1} parent=1 // pred_check_branch
      %2482 = sbr.rel (0) target = $region33
    $region32: #{tpu_custom_call.1} parent=1 // pred_region
      %2484 = dma.done [#allocation3], 256
    $region33: #{tpu_custom_call.1} parent=1 // pred_fallthru
      _
    %2485 = vsyncpa [#allocation3], 1

</llo_original>
